<compile_context>
chip_gen: v6e
topology: v6e:2x2x1
jax: 0.10.0
libtpu: 0.0.40
codegen_flags: <defaults>
</compile_context>

<pallas_src>
import functools

import jax
import jax.numpy as jnp
from jax.experimental import pallas as pl
from jax.experimental.pallas import tpu as pltpu


def _conv_mlp_kernel(x_ref, w1_ref, b1_ref, w2_ref, b2_ref, wl_ref, bl_ref,
                     o_ref):
    TB, L, C0 = x_ref.shape           # (batch tile, seq len, 32)
    KC1, C1 = w1_ref.shape            # (5*32, 64)
    KC2, C2 = w2_ref.shape            # (5*64, 128)
    K1 = KC1 // C0                    # 5
    K2 = KC2 // C1                    # 5
    P1, P2 = 5, 20
    L1 = L // P1
    L2 = L1 // P2                     # == out_size

    # ---- Conv1d(32 -> 64, k=5, pad=2): im2col -> ONE wide matmul (K = 160)
    x = x_ref[...]                                            # (TB, L, 32) f32
    zp1 = jnp.zeros((TB, 2, C0), x.dtype)
    xp = jnp.concatenate([zp1, x, zp1], axis=1)               # (TB, L+4, 32)
    cols1 = jnp.concatenate([xp[:, k:k + L, :] for k in range(K1)],
                            axis=-1)                          # (TB, L, 160)
    acc1 = jnp.dot(cols1.reshape(TB * L, KC1).astype(jnp.bfloat16),
                   w1_ref[...],
                   preferred_element_type=jnp.float32)        # (TB*L, 64) f32
    acc1 = acc1 + b1_ref[...]

    # ---- MaxPool1d(5) + ReLU
    y1 = jnp.max(acc1.reshape(TB, L1, P1, C1), axis=2)
    y1 = jnp.maximum(y1, 0.0)                                 # (TB, L1, 64)

    # ---- Conv1d(64 -> 128, k=5, pad=2): im2col -> ONE matmul (K = 320)
    zp2 = jnp.zeros((TB, 2, C1), y1.dtype)
    y1p = jnp.concatenate([zp2, y1, zp2], axis=1)             # (TB, L1+4, 64)
    cols2 = jnp.concatenate([y1p[:, k:k + L1, :] for k in range(K2)],
                            axis=-1)                          # (TB, L1, 320)
    acc2 = jnp.dot(cols2.reshape(TB * L1, KC2).astype(jnp.bfloat16),
                   w2_ref[...],
                   preferred_element_type=jnp.float32)        # (TB*L1, 128) f32
    acc2 = acc2 + b2_ref[...]

    # ---- MaxPool1d(20) + ReLU
    y2 = jnp.max(acc2.reshape(TB, L2, P2, C2), axis=2)
    y2 = jnp.maximum(y2, 0.0)                                 # (TB, L2, 128)

    # ---- Linear + Softmax(dim=1)   (tiny head; kept in f32)
    flat = y2.reshape(TB, L2 * C2)
    logits = jnp.dot(flat, wl_ref[...],
                     preferred_element_type=jnp.float32) + bl_ref[...]
    m = jnp.max(logits, axis=1, keepdims=True)
    e = jnp.exp(logits - m)
    probs = e / jnp.sum(e, axis=1, keepdims=True)             # (TB, nb_class)
    o_ref[...] = probs.reshape(o_ref.shape)


def init_params(key, vocab_size, sent_max_len, nb_class, pad_idx):
    """Deterministic synthetic params in torch layouts (Conv1d: (Cout,Cin,K), Linear: (out,in))."""
    ks = jax.random.split(key, 7)
    out_size = int(sent_max_len / 5 / 20)

    def u(k, shape, fan_in):
        bound = 1.0 / jnp.sqrt(jnp.float32(fan_in))
        return jax.random.uniform(k, shape, jnp.float32, -bound, bound)

    emb = jax.random.normal(ks[0], (vocab_size, 32), jnp.float32)
    emb = emb.at[pad_idx].set(0.0)  # nn.Embedding padding_idx row is zero
    w1 = u(ks[1], (64, 32, 5), 32 * 5)
    b1 = u(ks[2], (64,), 32 * 5)
    w2 = u(ks[3], (128, 64, 5), 64 * 5)
    b2 = u(ks[4], (128,), 64 * 5)
    wl = u(ks[5], (nb_class, 128 * out_size), 128 * out_size)
    bl = u(ks[6], (nb_class,), 128 * out_size)
    return dict(emb=emb, w1=w1, b1=b1, w2=w2, b2=b2, wl=wl, bl=bl,
                out_size=out_size)


@functools.partial(jax.jit, static_argnames=())
def model_conv_forward(x_tokens, emb, w1, b1, w2, b2, wl, bl):
    B, L = x_tokens.shape
    nb_class = wl.shape[0]
    out_size = wl.shape[1] // 128
    assert L % 100 == 0, "sent_max_len must be divisible by 100 (MaxPool 5 then 20)"
    assert out_size * 128 == wl.shape[1]
    assert out_size == L // 100

    # batch tile: largest of {8,4,2,1} dividing B (keeps VMEM bounded on v7x,
    # gives a parallel grid axis for megacore, and a decent matmul M per step)
    TB = 1
    for cand in (8, 4, 2, 1):
        if B % cand == 0:
            TB = cand
            break

    # --- glue: embedding gather + weight layout conversion ---
    # TODO(synk): fuse the embedding row-gather into the kernel to save one
    # HBM round trip of x_emb; dynamic row gather has no robust Mosaic path
    # for general vocab sizes, so it stays as XLA glue for now.
    x_emb = emb[x_tokens]                                         # (B, L, 32) f32
    # im2col weights: (Cout, Cin, K) -> (K, Cin, Cout) -> (K*Cin, Cout), bf16
    w1k = jnp.transpose(w1, (2, 1, 0)).reshape(5 * 32, 64).astype(jnp.bfloat16)
    w2k = jnp.transpose(w2, (2, 1, 0)).reshape(5 * 64, 128).astype(jnp.bfloat16)
    # torch flattens (B, 128, out_size) channel-major; kernel flattens
    # (B, out_size, 128) channels-last -> permute Linear weight columns.
    wlk = jnp.transpose(wl.reshape(nb_class, 128, out_size),
                        (2, 1, 0)).reshape(out_size * 128, nb_class)
    b1k = b1.reshape(1, 64)
    b2k = b2.reshape(1, 128)
    blk = bl.reshape(1, nb_class)

    out3 = pl.pallas_call(
        _conv_mlp_kernel,
        out_shape=jax.ShapeDtypeStruct((B, 1, nb_class), jnp.float32),
        grid=(B // TB,),
        in_specs=[
            pl.BlockSpec((TB, L, 32), lambda b: (b, 0, 0)),      # x_emb tile (pipelined)
            pl.BlockSpec(w1k.shape, lambda b: (0, 0)),           # weights stay resident
            pl.BlockSpec(b1k.shape, lambda b: (0, 0)),
            pl.BlockSpec(w2k.shape, lambda b: (0, 0)),
            pl.BlockSpec(b2k.shape, lambda b: (0, 0)),
            pl.BlockSpec(wlk.shape, lambda b: (0, 0)),
            pl.BlockSpec(blk.shape, lambda b: (0, 0)),
        ],
        out_specs=pl.BlockSpec((TB, 1, nb_class), lambda b: (b, 0, 0)),
        compiler_params=pltpu.CompilerParams(
            dimension_semantics=("parallel",),
            vmem_limit_bytes=32 * 1024 * 1024,
        ),
    )(x_emb, w1k, b1k, w2k, b2k, wlk, blk)
    return out3.reshape(B, nb_class)


if __name__ == "__main__":
    vocab_size = 50
    sent_max_len = 100   # must be divisible by 100 (MaxPool 5 then 20)
    nb_class = 4
    pad_idx = 0
    batch = 2

    key = jax.random.PRNGKey(0)
    kp, kx = jax.random.split(key)
    params = init_params(kp, vocab_size, sent_max_len, nb_class, pad_idx)
    x = jax.random.randint(kx, (batch, sent_max_len), 0, vocab_size, dtype=jnp.int32)

    out = model_conv_forward(x, params["emb"], params["w1"], params["b1"],
                             params["w2"], params["b2"], params["wl"], params["bl"])
    out = jax.block_until_ready(out)
    assert out.shape == (batch, nb_class)
    assert bool(jnp.all(jnp.isfinite(out)))
    assert bool(jnp.allclose(jnp.sum(out, axis=1), 1.0, atol=1e-5))  # softmax rows sum to 1
    print("KERNEL_OK")
</pallas_src>

<mosaic_0001>
module attributes {stable_mosaic.version = 11 : i64} {
  func.func @_conv_mlp_kernel(%arg0: i32, %arg1: memref<2x100x32xf32, #tpu.memory_space<vmem>>, %arg2: memref<160x64xbf16, #tpu.memory_space<vmem>>, %arg3: memref<1x64xf32, #tpu.memory_space<vmem>>, %arg4: memref<320x128xbf16, #tpu.memory_space<vmem>>, %arg5: memref<1x128xf32, #tpu.memory_space<vmem>>, %arg6: memref<128x4xf32, #tpu.memory_space<vmem>>, %arg7: memref<1x4xf32, #tpu.memory_space<vmem>>, %arg8: memref<2x1x4xf32, #tpu.memory_space<vmem>>) attributes {dimension_semantics = [#tpu.dimension_semantics<parallel>], iteration_bounds = array<i64: 1>, scalar_prefetch = 0 : i64, scratch_operands = 0 : i64, tpu.core_type = #tpu.core_type<tc>, window_params = [{transform_indices = @transform_0, window_bounds = array<i64: 2, 100, 32>}, {pipeline_mode = #tpu.pipeline_mode<synchronous>, transform_indices = @transform_1, window_bounds = array<i64: 160, 64>}, {pipeline_mode = #tpu.pipeline_mode<synchronous>, transform_indices = @transform_2, window_bounds = array<i64: 1, 64>}, {pipeline_mode = #tpu.pipeline_mode<synchronous>, transform_indices = @transform_3, window_bounds = array<i64: 320, 128>}, {pipeline_mode = #tpu.pipeline_mode<synchronous>, transform_indices = @transform_4, window_bounds = array<i64: 1, 128>}, {pipeline_mode = #tpu.pipeline_mode<synchronous>, transform_indices = @transform_5, window_bounds = array<i64: 128, 4>}, {pipeline_mode = #tpu.pipeline_mode<synchronous>, transform_indices = @transform_6, window_bounds = array<i64: 1, 4>}, {transform_indices = @transform_7, window_bounds = array<i64: 2, 1, 4>}]} {
    %c0 = arith.constant 0 : index
    %c0_0 = arith.constant 0 : index
    %c0_1 = arith.constant 0 : index
    %0 = vector.load %arg1[%c0, %c0_0, %c0_1] : memref<2x100x32xf32, #tpu.memory_space<vmem>>, vector<2x100x32xf32>
    %cst = arith.constant 0.000000e+00 : f32
    %1 = vector.broadcast %cst : f32 to vector<2x2x32xf32>
    %2 = tpu.concatenate %1, %0, %1 in 1 : vector<2x2x32xf32>, vector<2x100x32xf32>, vector<2x2x32xf32> -> vector<2x104x32xf32>
    %3 = vector.extract_strided_slice %2 {offsets = [0, 0, 0], sizes = [2, 100, 32], strides = [1, 1, 1]} : vector<2x104x32xf32> to vector<2x100x32xf32>
    %4 = vector.extract_strided_slice %2 {offsets = [0, 1, 0], sizes = [2, 100, 32], strides = [1, 1, 1]} : vector<2x104x32xf32> to vector<2x100x32xf32>
    %5 = vector.extract_strided_slice %2 {offsets = [0, 2, 0], sizes = [2, 100, 32], strides = [1, 1, 1]} : vector<2x104x32xf32> to vector<2x100x32xf32>
    %6 = vector.extract_strided_slice %2 {offsets = [0, 3, 0], sizes = [2, 100, 32], strides = [1, 1, 1]} : vector<2x104x32xf32> to vector<2x100x32xf32>
    %7 = vector.extract_strided_slice %2 {offsets = [0, 4, 0], sizes = [2, 100, 32], strides = [1, 1, 1]} : vector<2x104x32xf32> to vector<2x100x32xf32>
    %8 = tpu.concatenate %3, %4, %5, %6, %7 in 2 : vector<2x100x32xf32>, vector<2x100x32xf32>, vector<2x100x32xf32>, vector<2x100x32xf32>, vector<2x100x32xf32> -> vector<2x100x160xf32>
    %9 = vector.shape_cast %8 : vector<2x100x160xf32> to vector<200x160xf32>
    %10 = arith.truncf %9 : vector<200x160xf32> to vector<200x160xbf16>
    %c0_2 = arith.constant 0 : index
    %c0_3 = arith.constant 0 : index
    %11 = vector.load %arg2[%c0_2, %c0_3] : memref<160x64xbf16, #tpu.memory_space<vmem>>, vector<160x64xbf16>
    %cst_4 = arith.constant dense<0.000000e+00> : vector<200x64xf32>
    %12 = tpu.matmul %10, %11, %cst_4 {dimension_numbers = #tpu.dot_dimension_numbers<[1], [0], [0], [1], [0, 0, 1, 1], [], []>} : vector<200x160xbf16>, vector<160x64xbf16>, vector<200x64xf32> -> vector<200x64xf32>
    %c0_5 = arith.constant 0 : index
    %c0_6 = arith.constant 0 : index
    %13 = vector.load %arg3[%c0_5, %c0_6] : memref<1x64xf32, #tpu.memory_space<vmem>>, vector<1x64xf32>
    %14 = vector.broadcast %13 : vector<1x64xf32> to vector<200x64xf32>
    %15 = arith.addf %12, %14 : vector<200x64xf32>
    %16 = vector.shape_cast %15 : vector<200x64xf32> to vector<2x20x5x64xf32>
    %cst_7 = arith.constant dense<0xFF800000> : vector<2x20x64xf32>
    %17 = vector.multi_reduction <maximumf>, %16, %cst_7 [2] : vector<2x20x5x64xf32> to vector<2x20x64xf32>
    %cst_8 = arith.constant 0.000000e+00 : f32
    %18 = vector.broadcast %cst_8 : f32 to vector<2x20x64xf32>
    %19 = arith.maximumf %17, %18 : vector<2x20x64xf32>
    %cst_9 = arith.constant 0.000000e+00 : f32
    %20 = vector.broadcast %cst_9 : f32 to vector<2x2x64xf32>
    %21 = tpu.concatenate %20, %19, %20 in 1 : vector<2x2x64xf32>, vector<2x20x64xf32>, vector<2x2x64xf32> -> vector<2x24x64xf32>
    %22 = vector.extract_strided_slice %21 {offsets = [0, 0, 0], sizes = [2, 20, 64], strides = [1, 1, 1]} : vector<2x24x64xf32> to vector<2x20x64xf32>
    %23 = vector.extract_strided_slice %21 {offsets = [0, 1, 0], sizes = [2, 20, 64], strides = [1, 1, 1]} : vector<2x24x64xf32> to vector<2x20x64xf32>
    %24 = vector.extract_strided_slice %21 {offsets = [0, 2, 0], sizes = [2, 20, 64], strides = [1, 1, 1]} : vector<2x24x64xf32> to vector<2x20x64xf32>
    %25 = vector.extract_strided_slice %21 {offsets = [0, 3, 0], sizes = [2, 20, 64], strides = [1, 1, 1]} : vector<2x24x64xf32> to vector<2x20x64xf32>
    %26 = vector.extract_strided_slice %21 {offsets = [0, 4, 0], sizes = [2, 20, 64], strides = [1, 1, 1]} : vector<2x24x64xf32> to vector<2x20x64xf32>
    %27 = tpu.concatenate %22, %23, %24, %25, %26 in 2 : vector<2x20x64xf32>, vector<2x20x64xf32>, vector<2x20x64xf32>, vector<2x20x64xf32>, vector<2x20x64xf32> -> vector<2x20x320xf32>
    %28 = vector.shape_cast %27 : vector<2x20x320xf32> to vector<40x320xf32>
    %29 = arith.truncf %28 : vector<40x320xf32> to vector<40x320xbf16>
    %c0_10 = arith.constant 0 : index
    %c0_11 = arith.constant 0 : index
    %30 = vector.load %arg4[%c0_10, %c0_11] : memref<320x128xbf16, #tpu.memory_space<vmem>>, vector<320x128xbf16>
    %cst_12 = arith.constant dense<0.000000e+00> : vector<40x128xf32>
    %31 = tpu.matmul %29, %30, %cst_12 {dimension_numbers = #tpu.dot_dimension_numbers<[1], [0], [0], [1], [0, 0, 1, 1], [], []>} : vector<40x320xbf16>, vector<320x128xbf16>, vector<40x128xf32> -> vector<40x128xf32>
    %c0_13 = arith.constant 0 : index
    %c0_14 = arith.constant 0 : index
    %32 = vector.load %arg5[%c0_13, %c0_14] : memref<1x128xf32, #tpu.memory_space<vmem>>, vector<1x128xf32>
    %33 = vector.broadcast %32 : vector<1x128xf32> to vector<40x128xf32>
    %34 = arith.addf %31, %33 : vector<40x128xf32>
    %35 = vector.shape_cast %34 : vector<40x128xf32> to vector<2x1x20x128xf32>
    %cst_15 = arith.constant dense<0xFF800000> : vector<2x1x128xf32>
    %36 = vector.multi_reduction <maximumf>, %35, %cst_15 [2] : vector<2x1x20x128xf32> to vector<2x1x128xf32>
    %cst_16 = arith.constant 0.000000e+00 : f32
    %37 = vector.broadcast %cst_16 : f32 to vector<2x1x128xf32>
    %38 = arith.maximumf %36, %37 : vector<2x1x128xf32>
    %39 = vector.shape_cast %38 : vector<2x1x128xf32> to vector<2x128xf32>
    %c0_17 = arith.constant 0 : index
    %c0_18 = arith.constant 0 : index
    %40 = vector.load %arg6[%c0_17, %c0_18] : memref<128x4xf32, #tpu.memory_space<vmem>>, vector<128x4xf32>
    %cst_19 = arith.constant dense<0.000000e+00> : vector<2x4xf32>
    %41 = tpu.matmul %39, %40, %cst_19 {dimension_numbers = #tpu.dot_dimension_numbers<[1], [0], [0], [1], [0, 0, 1, 1], [], []>} : vector<2x128xf32>, vector<128x4xf32>, vector<2x4xf32> -> vector<2x4xf32>
    %c0_20 = arith.constant 0 : index
    %c0_21 = arith.constant 0 : index
    %42 = vector.load %arg7[%c0_20, %c0_21] : memref<1x4xf32, #tpu.memory_space<vmem>>, vector<1x4xf32>
    %43 = vector.broadcast %42 : vector<1x4xf32> to vector<2x4xf32>
    %44 = arith.addf %41, %43 : vector<2x4xf32>
    %cst_22 = arith.constant dense<0xFF800000> : vector<2xf32>
    %45 = vector.multi_reduction <maximumf>, %44, %cst_22 [1] : vector<2x4xf32> to vector<2xf32>
    %46 = vector.shape_cast %45 : vector<2xf32> to vector<2x1xf32>
    %47 = vector.broadcast %46 : vector<2x1xf32> to vector<2x4xf32>
    %48 = arith.subf %44, %47 : vector<2x4xf32>
    %49 = math.exp %48 : vector<2x4xf32>
    %cst_23 = arith.constant dense<0.000000e+00> : vector<2xf32>
    %50 = vector.multi_reduction <add>, %49, %cst_23 [1] : vector<2x4xf32> to vector<2xf32>
    %51 = vector.shape_cast %50 : vector<2xf32> to vector<2x1xf32>
    %52 = vector.broadcast %51 : vector<2x1xf32> to vector<2x4xf32>
    %53 = arith.divf %49, %52 : vector<2x4xf32>
    %54 = vector.shape_cast %53 : vector<2x4xf32> to vector<2x1x4xf32>
    %c0_24 = arith.constant 0 : index
    %c0_25 = arith.constant 0 : index
    %c0_26 = arith.constant 0 : index
    %55 = vector.load %arg8[%c0_24, %c0_25, %c0_26] : memref<2x1x4xf32, #tpu.memory_space<vmem>>, vector<2x1x4xf32>
    tpu.vector_store %arg8[%c0_24, %c0_25, %c0_26], %54 {strides = array<i32>} : memref<2x1x4xf32, #tpu.memory_space<vmem>>, vector<2x1x4xf32>,
    return
  }
  func.func @transform_0(%arg0: i32) -> (i32, i32, i32) {
    %c0_i32 = arith.constant 0 : i32
    %c0_i32_0 = arith.constant 0 : i32
    %c0_i32_1 = arith.constant 0 : i32
    return %arg0, %c0_i32, %c0_i32_0 : i32, i32, i32
  }
  func.func @transform_1(%arg0: i32) -> (i32, i32) {
    %c0_i32 = arith.constant 0 : i32
    %c0_i32_0 = arith.constant 0 : i32
    %c0_i32_1 = arith.constant 0 : i32
    return %c0_i32, %c0_i32_0 : i32, i32
  }
  func.func @transform_2(%arg0: i32) -> (i32, i32) {
    %c0_i32 = arith.constant 0 : i32
    %c0_i32_0 = arith.constant 0 : i32
    %c0_i32_1 = arith.constant 0 : i32
    return %c0_i32, %c0_i32_0 : i32, i32
  }
  func.func @transform_3(%arg0: i32) -> (i32, i32) {
    %c0_i32 = arith.constant 0 : i32
    %c0_i32_0 = arith.constant 0 : i32
    %c0_i32_1 = arith.constant 0 : i32
    return %c0_i32, %c0_i32_0 : i32, i32
  }
  func.func @transform_4(%arg0: i32) -> (i32, i32) {
    %c0_i32 = arith.constant 0 : i32
    %c0_i32_0 = arith.constant 0 : i32
    %c0_i32_1 = arith.constant 0 : i32
    return %c0_i32, %c0_i32_0 : i32, i32
  }
  func.func @transform_5(%arg0: i32) -> (i32, i32) {
    %c0_i32 = arith.constant 0 : i32
    %c0_i32_0 = arith.constant 0 : i32
    %c0_i32_1 = arith.constant 0 : i32
    return %c0_i32, %c0_i32_0 : i32, i32
  }
  func.func @transform_6(%arg0: i32) -> (i32, i32) {
    %c0_i32 = arith.constant 0 : i32
    %c0_i32_0 = arith.constant 0 : i32
    %c0_i32_1 = arith.constant 0 : i32
    return %c0_i32, %c0_i32_0 : i32, i32
  }
  func.func @transform_7(%arg0: i32) -> (i32, i32, i32) {
    %c0_i32 = arith.constant 0 : i32
    %c0_i32_0 = arith.constant 0 : i32
    %c0_i32_1 = arith.constant 0 : i32
    return %arg0, %c0_i32, %c0_i32_0 : i32, i32, i32
  }
}

</mosaic_0001>

<llo_original>
// kernel: model_conv_forward.1
$region0: #{model_conv_forward.1}
  #allocation0 [shape = 'u32[]', space=smem, size = 0x4, offset = 0x4, fixed_abs, tag = 'smem constant byte address 0x4 - core index']
  #allocation1 [shape = 'u32[144,128]{1,0:T(1,128)}', space=vmem, size = 0x12000, scoped, tag = 'internal scratch']
  %s0 = inlined_call_operand.vmem [shape: f32[2,100,32], index: 0, kind: input, shape index: {}]
  %s1 = inlined_call_operand.vmem [shape: bf16[160,64], index: 1, kind: input, shape index: {}]
  %s2 = inlined_call_operand.vmem [shape: f32[1,64], index: 2, kind: input, shape index: {}]
  %s3 = inlined_call_operand.vmem [shape: bf16[320,128], index: 3, kind: input, shape index: {}]
  %s4 = inlined_call_operand.vmem [shape: f32[1,128], index: 4, kind: input, shape index: {}]
  %s5 = inlined_call_operand.vmem [shape: f32[128,4], index: 5, kind: input, shape index: {}]
  %s6 = inlined_call_operand.vmem [shape: f32[1,4], index: 6, kind: input, shape index: {}]
  %s7 = inlined_call_operand.hbm [shape: f32[2,1,4], index: 7, kind: output, shape index: {}]
  %s8 = sld [smem:[#allocation0]]
  $region38: #{model_conv_forward.1} parent=0
    _
  %s10 = ssub.s32 1, %s8
  %s11 = scalar_select 0, %s10, %s8
  $region1: #{model_conv_forward.1} parent=0
    #allocation2 [shape = 'u8[1024]{0}', space=vmem, size = 0x400, scoped, tag = 'output window, operand 0, single buffered']
    #allocation3 [shape = 's32[1]{0}', space=sflag, size = 0x4, scoped, tag = 'scoped memory for model_conv_forward.1']
    %12 = vsyncpa [#allocation3], 0
    // Predicated region
    $region2: #{model_conv_forward.1} parent=1 // pred_check
      _
    $region3: #{model_conv_forward.1} parent=1 // pred_check_branch
      %14 = sbr.rel (0) target = $region5
    $region4: #{model_conv_forward.1} parent=1 // pred_region
      _
    $region5: #{model_conv_forward.1} parent=1 // pred_fallthru
      _
    // Predicated region
    $region6: #{model_conv_forward.1} parent=1 // pred_check
      _
    $region7: #{model_conv_forward.1} parent=1 // pred_check_branch
      %16 = sbr.rel (0) target = $region9
    $region8: #{model_conv_forward.1} parent=1 // pred_region
      _
    $region9: #{model_conv_forward.1} parent=1 // pred_fallthru
      _
    // Predicated region
    $region10: #{model_conv_forward.1} parent=1 // pred_check
      _
    $region11: #{model_conv_forward.1} parent=1 // pred_check_branch
      %18 = sbr.rel (0) target = $region13
    $region12: #{model_conv_forward.1} parent=1 // pred_region
      _
    $region13: #{model_conv_forward.1} parent=1 // pred_fallthru
      _
    // Predicated region
    $region14: #{model_conv_forward.1} parent=1 // pred_check
      _
    $region15: #{model_conv_forward.1} parent=1 // pred_check_branch
      %20 = sbr.rel (0) target = $region17
    $region16: #{model_conv_forward.1} parent=1 // pred_region
      _
    $region17: #{model_conv_forward.1} parent=1 // pred_fallthru
      _
    // Predicated region
    $region18: #{model_conv_forward.1} parent=1 // pred_check
      _
    $region19: #{model_conv_forward.1} parent=1 // pred_check_branch
      %22 = sbr.rel (0) target = $region21
    $region20: #{model_conv_forward.1} parent=1 // pred_region
      _
    $region21: #{model_conv_forward.1} parent=1 // pred_fallthru
      _
    // Predicated region
    $region22: #{model_conv_forward.1} parent=1 // pred_check
      _
    $region23: #{model_conv_forward.1} parent=1 // pred_check_branch
      %24 = sbr.rel (0) target = $region25
    $region24: #{model_conv_forward.1} parent=1 // pred_region
      _
    $region25: #{model_conv_forward.1} parent=1 // pred_fallthru
      _
    // Predicated region
    $region26: #{model_conv_forward.1} parent=1 // pred_check
      _
    $region27: #{model_conv_forward.1} parent=1 // pred_check_branch
      %26 = sbr.rel (0) target = $region29
    $region28: #{model_conv_forward.1} parent=1 // pred_region
      _
    $region29: #{model_conv_forward.1} parent=1 // pred_fallthru
      _
    %v28 = vld [vmem:[%s0] sm:$0xff]
    %v29 = vld [vmem:[%s0 + $0x8] sm:$0xff]
    %v30 = vld [vmem:[%s0 + $0x10] sm:$0xff]
    %v31 = vld [vmem:[%s0 + $0x18] sm:$0xff]
    %v32 = vld [vmem:[%s0 + $0x20] sm:$0xff]
    %v33 = vld [vmem:[%s0 + $0x28] sm:$0xff]
    %v34 = vld [vmem:[%s0 + $0x30] sm:$0xff]
    %v35 = vld [vmem:[%s0 + $0x38] sm:$0xff]
    %v36 = vld [vmem:[%s0 + $0x40] sm:$0xff]
    %v37 = vld [vmem:[%s0 + $0x48] sm:$0xff]
    %v38 = vld [vmem:[%s0 + $0x50] sm:$0xff]
    %v39 = vld [vmem:[%s0 + $0x58] sm:$0xff]
    %v40 = vld [vmem:[%s0 + $0x60] sm:$0xf]
    %v41 = vld [vmem:[%s0 + $0x68] sm:$0xff]
    %v42 = vld [vmem:[%s0 + $0x70] sm:$0xff]
    %v43 = vld [vmem:[%s0 + $0x78] sm:$0xff]
    %v44 = vld [vmem:[%s0 + $0x80] sm:$0xff]
    %v45 = vld [vmem:[%s0 + $0x88] sm:$0xff]
    %v46 = vld [vmem:[%s0 + $0x90] sm:$0xff]
    %v47 = vld [vmem:[%s0 + $0x98] sm:$0xff]
    %v48 = vld [vmem:[%s0 + $0xa0] sm:$0xff]
    %v49 = vld [vmem:[%s0 + $0xa8] sm:$0xff]
    %v50 = vld [vmem:[%s0 + $0xb0] sm:$0xff]
    %v51 = vld [vmem:[%s0 + $0xb8] sm:$0xff]
    %v52 = vld [vmem:[%s0 + $0xc0] sm:$0xff]
    %v53 = vld [vmem:[%s0 + $0xc8] sm:$0xf]
    %vm80 = vcmask 1041408
    %v81 = vrot.slane %v28, 6
    %v82 = vrot.slane %v29, 6
    %v83 = vsel %vm80, %v81, %v82
    %v84 = vrot.slane %v30, 6
    %v85 = vsel %vm80, %v82, %v84
    %v86 = vrot.slane %v31, 6
    %v87 = vsel %vm80, %v84, %v86
    %v88 = vrot.slane %v32, 6
    %v89 = vsel %vm80, %v86, %v88
    %v90 = vrot.slane %v33, 6
    %v91 = vsel %vm80, %v88, %v90
    %v92 = vrot.slane %v34, 6
    %v93 = vsel %vm80, %v90, %v92
    %v94 = vrot.slane %v35, 6
    %v95 = vsel %vm80, %v92, %v94
    %v96 = vrot.slane %v36, 6
    %v97 = vsel %vm80, %v94, %v96
    %v98 = vrot.slane %v37, 6
    %v99 = vsel %vm80, %v96, %v98
    %v100 = vrot.slane %v38, 6
    %v101 = vsel %vm80, %v98, %v100
    %v102 = vrot.slane %v39, 6
    %v103 = vsel %vm80, %v100, %v102
    %v104 = vrot.slane %v40, 6
    %v105 = vsel %vm80, %v102, %v104
    %v106 = vrot.slane %v41, 6
    %v107 = vrot.slane %v42, 6
    %v108 = vsel %vm80, %v106, %v107
    %v109 = vrot.slane %v43, 6
    %v110 = vsel %vm80, %v107, %v109
    %v111 = vrot.slane %v44, 6
    %v112 = vsel %vm80, %v109, %v111
    %v113 = vrot.slane %v45, 6
    %v114 = vsel %vm80, %v111, %v113
    %v115 = vrot.slane %v46, 6
    %v116 = vsel %vm80, %v113, %v115
    %v117 = vrot.slane %v47, 6
    %v118 = vsel %vm80, %v115, %v117
    %v119 = vrot.slane %v48, 6
    %v120 = vsel %vm80, %v117, %v119
    %v121 = vrot.slane %v49, 6
    %v122 = vsel %vm80, %v119, %v121
    %v123 = vrot.slane %v50, 6
    %v124 = vsel %vm80, %v121, %v123
    %v125 = vrot.slane %v51, 6
    %v126 = vsel %vm80, %v123, %v125
    %v127 = vrot.slane %v52, 6
    %v128 = vsel %vm80, %v125, %v127
    %v129 = vrot.slane %v53, 6
    %v130 = vsel %vm80, %v127, %v129
    %v157 = vsel %vm80, 0.0, %v81
    %v158 = vsel %vm80, 0.0, %v106
    %vm159 = vcmask 1045504
    %v160 = vsel %vm159, %v105, 0.0
    %v161 = vsel %vm159, %v130, 0.0
    %vm166 = vcmask 1046528
    %v167 = vrot.slane %v157, 1
    %v168 = vrot.slane %v83, 1
    %v169 = vsel %vm166, %v167, %v168
    %v170 = vrot.slane %v85, 1
    %v171 = vsel %vm166, %v168, %v170
    %v172 = vrot.slane %v87, 1
    %v173 = vsel %vm166, %v170, %v172
    %v174 = vrot.slane %v89, 1
    %v175 = vsel %vm166, %v172, %v174
    %v176 = vrot.slane %v91, 1
    %v177 = vsel %vm166, %v174, %v176
    %v178 = vrot.slane %v93, 1
    %v179 = vsel %vm166, %v176, %v178
    %v180 = vrot.slane %v95, 1
    %v181 = vsel %vm166, %v178, %v180
    %v182 = vrot.slane %v97, 1
    %v183 = vsel %vm166, %v180, %v182
    %v184 = vrot.slane %v99, 1
    %v185 = vsel %vm166, %v182, %v184
    %v186 = vrot.slane %v101, 1
    %v187 = vsel %vm166, %v184, %v186
    %v188 = vrot.slane %v103, 1
    %v189 = vsel %vm166, %v186, %v188
    %v190 = vrot.slane %v160, 1
    %v191 = vsel %vm166, %v188, %v190
    %v192 = vrot.slane %v158, 1
    %v193 = vrot.slane %v108, 1
    %v194 = vsel %vm166, %v192, %v193
    %v195 = vrot.slane %v110, 1
    %v196 = vsel %vm166, %v193, %v195
    %v197 = vrot.slane %v112, 1
    %v198 = vsel %vm166, %v195, %v197
    %v199 = vrot.slane %v114, 1
    %v200 = vsel %vm166, %v197, %v199
    %v201 = vrot.slane %v116, 1
    %v202 = vsel %vm166, %v199, %v201
    %v203 = vrot.slane %v118, 1
    %v204 = vsel %vm166, %v201, %v203
    %v205 = vrot.slane %v120, 1
    %v206 = vsel %vm166, %v203, %v205
    %v207 = vrot.slane %v122, 1
    %v208 = vsel %vm166, %v205, %v207
    %v209 = vrot.slane %v124, 1
    %v210 = vsel %vm166, %v207, %v209
    %v211 = vrot.slane %v126, 1
    %v212 = vsel %vm166, %v209, %v211
    %v213 = vrot.slane %v128, 1
    %v214 = vsel %vm166, %v211, %v213
    %v215 = vrot.slane %v161, 1
    %v216 = vsel %vm166, %v213, %v215
    %217 = vrot.lane.b32.xlu0 %v169, 32
    %v218 = vpop.permute.xlu0 %217
    %219 = vrot.lane.b32.xlu0 %v171, 32
    %v220 = vpop.permute.xlu0 %219
    %221 = vrot.lane.b32.xlu0 %v173, 32
    %v222 = vpop.permute.xlu0 %221
    %223 = vrot.lane.b32.xlu0 %v175, 32
    %v224 = vpop.permute.xlu0 %223
    %225 = vrot.lane.b32.xlu0 %v177, 32
    %v226 = vpop.permute.xlu0 %225
    %227 = vrot.lane.b32.xlu0 %v179, 32
    %v228 = vpop.permute.xlu0 %227
    %229 = vrot.lane.b32.xlu0 %v181, 32
    %v230 = vpop.permute.xlu0 %229
    %231 = vrot.lane.b32.xlu0 %v183, 32
    %v232 = vpop.permute.xlu0 %231
    %233 = vrot.lane.b32.xlu0 %v185, 32
    %v234 = vpop.permute.xlu0 %233
    %235 = vrot.lane.b32.xlu0 %v187, 32
    %v236 = vpop.permute.xlu0 %235
    %237 = vrot.lane.b32.xlu0 %v189, 32
    %v238 = vpop.permute.xlu0 %237
    %239 = vrot.lane.b32.xlu0 %v191, 32
    %v240 = vpop.permute.xlu0 %239
    %241 = vrot.lane.b32.xlu0 %v190, 32
    %v242 = vpop.permute.xlu0 %241
    %243 = vrot.lane.b32.xlu0 %v194, 32
    %v244 = vpop.permute.xlu0 %243
    %245 = vrot.lane.b32.xlu0 %v196, 32
    %v246 = vpop.permute.xlu0 %245
    %247 = vrot.lane.b32.xlu0 %v198, 32
    %v248 = vpop.permute.xlu0 %247
    %249 = vrot.lane.b32.xlu0 %v200, 32
    %v250 = vpop.permute.xlu0 %249
    %251 = vrot.lane.b32.xlu0 %v202, 32
    %v252 = vpop.permute.xlu0 %251
    %253 = vrot.lane.b32.xlu0 %v204, 32
    %v254 = vpop.permute.xlu0 %253
    %255 = vrot.lane.b32.xlu0 %v206, 32
    %v256 = vpop.permute.xlu0 %255
    %257 = vrot.lane.b32.xlu0 %v208, 32
    %v258 = vpop.permute.xlu0 %257
    %259 = vrot.lane.b32.xlu0 %v210, 32
    %v260 = vpop.permute.xlu0 %259
    %261 = vrot.lane.b32.xlu0 %v212, 32
    %v262 = vpop.permute.xlu0 %261
    %263 = vrot.lane.b32.xlu0 %v214, 32
    %v264 = vpop.permute.xlu0 %263
    %265 = vrot.lane.b32.xlu0 %v216, 32
    %v266 = vpop.permute.xlu0 %265
    %267 = vrot.lane.b32.xlu0 %v215, 32
    %v268 = vpop.permute.xlu0 %267
    %v295 = vrot.slane %v157, 2
    %v296 = vrot.slane %v83, 2
    %v297 = vsel %vm159, %v295, %v296
    %v298 = vrot.slane %v85, 2
    %v299 = vsel %vm159, %v296, %v298
    %v300 = vrot.slane %v87, 2
    %v301 = vsel %vm159, %v298, %v300
    %v302 = vrot.slane %v89, 2
    %v303 = vsel %vm159, %v300, %v302
    %v304 = vrot.slane %v91, 2
    %v305 = vsel %vm159, %v302, %v304
    %v306 = vrot.slane %v93, 2
    %v307 = vsel %vm159, %v304, %v306
    %v308 = vrot.slane %v95, 2
    %v309 = vsel %vm159, %v306, %v308
    %v310 = vrot.slane %v97, 2
    %v311 = vsel %vm159, %v308, %v310
    %v312 = vrot.slane %v99, 2
    %v313 = vsel %vm159, %v310, %v312
    %v314 = vrot.slane %v101, 2
    %v315 = vsel %vm159, %v312, %v314
    %v316 = vrot.slane %v103, 2
    %v317 = vsel %vm159, %v314, %v316
    %v318 = vrot.slane %v160, 2
    %v319 = vsel %vm159, %v316, %v318
    %v320 = vrot.slane %v158, 2
    %v321 = vrot.slane %v108, 2
    %v322 = vsel %vm159, %v320, %v321
    %v323 = vrot.slane %v110, 2
    %v324 = vsel %vm159, %v321, %v323
    %v325 = vrot.slane %v112, 2
    %v326 = vsel %vm159, %v323, %v325
    %v327 = vrot.slane %v114, 2
    %v328 = vsel %vm159, %v325, %v327
    %v329 = vrot.slane %v116, 2
    %v330 = vsel %vm159, %v327, %v329
    %v331 = vrot.slane %v118, 2
    %v332 = vsel %vm159, %v329, %v331
    %v333 = vrot.slane %v120, 2
    %v334 = vsel %vm159, %v331, %v333
    %v335 = vrot.slane %v122, 2
    %v336 = vsel %vm159, %v333, %v335
    %v337 = vrot.slane %v124, 2
    %v338 = vsel %vm159, %v335, %v337
    %v339 = vrot.slane %v126, 2
    %v340 = vsel %vm159, %v337, %v339
    %v341 = vrot.slane %v128, 2
    %v342 = vsel %vm159, %v339, %v341
    %v343 = vrot.slane %v161, 2
    %v344 = vsel %vm159, %v341, %v343
    %345 = vrot.lane.b32.xlu0 %v297, 64
    %v346 = vpop.permute.xlu0 %345
    %347 = vrot.lane.b32.xlu0 %v299, 64
    %v348 = vpop.permute.xlu0 %347
    %349 = vrot.lane.b32.xlu0 %v301, 64
    %v350 = vpop.permute.xlu0 %349
    %351 = vrot.lane.b32.xlu0 %v303, 64
    %v352 = vpop.permute.xlu0 %351
    %353 = vrot.lane.b32.xlu0 %v305, 64
    %v354 = vpop.permute.xlu0 %353
    %355 = vrot.lane.b32.xlu0 %v307, 64
    %v356 = vpop.permute.xlu0 %355
    %357 = vrot.lane.b32.xlu0 %v309, 64
    %v358 = vpop.permute.xlu0 %357
    %359 = vrot.lane.b32.xlu0 %v311, 64
    %v360 = vpop.permute.xlu0 %359
    %361 = vrot.lane.b32.xlu0 %v313, 64
    %v362 = vpop.permute.xlu0 %361
    %363 = vrot.lane.b32.xlu0 %v315, 64
    %v364 = vpop.permute.xlu0 %363
    %365 = vrot.lane.b32.xlu0 %v317, 64
    %v366 = vpop.permute.xlu0 %365
    %367 = vrot.lane.b32.xlu0 %v319, 64
    %v368 = vpop.permute.xlu0 %367
    %369 = vrot.lane.b32.xlu0 %v318, 64
    %v370 = vpop.permute.xlu0 %369
    %371 = vrot.lane.b32.xlu0 %v322, 64
    %v372 = vpop.permute.xlu0 %371
    %373 = vrot.lane.b32.xlu0 %v324, 64
    %v374 = vpop.permute.xlu0 %373
    %375 = vrot.lane.b32.xlu0 %v326, 64
    %v376 = vpop.permute.xlu0 %375
    %377 = vrot.lane.b32.xlu0 %v328, 64
    %v378 = vpop.permute.xlu0 %377
    %379 = vrot.lane.b32.xlu0 %v330, 64
    %v380 = vpop.permute.xlu0 %379
    %381 = vrot.lane.b32.xlu0 %v332, 64
    %v382 = vpop.permute.xlu0 %381
    %383 = vrot.lane.b32.xlu0 %v334, 64
    %v384 = vpop.permute.xlu0 %383
    %385 = vrot.lane.b32.xlu0 %v336, 64
    %v386 = vpop.permute.xlu0 %385
    %387 = vrot.lane.b32.xlu0 %v338, 64
    %v388 = vpop.permute.xlu0 %387
    %389 = vrot.lane.b32.xlu0 %v340, 64
    %v390 = vpop.permute.xlu0 %389
    %391 = vrot.lane.b32.xlu0 %v342, 64
    %v392 = vpop.permute.xlu0 %391
    %393 = vrot.lane.b32.xlu0 %v344, 64
    %v394 = vpop.permute.xlu0 %393
    %395 = vrot.lane.b32.xlu0 %v343, 64
    %v396 = vpop.permute.xlu0 %395
    %vm423 = vcmask 1044480
    %v424 = vrot.slane %v157, 3
    %v425 = vrot.slane %v83, 3
    %v426 = vsel %vm423, %v424, %v425
    %v427 = vrot.slane %v85, 3
    %v428 = vsel %vm423, %v425, %v427
    %v429 = vrot.slane %v87, 3
    %v430 = vsel %vm423, %v427, %v429
    %v431 = vrot.slane %v89, 3
    %v432 = vsel %vm423, %v429, %v431
    %v433 = vrot.slane %v91, 3
    %v434 = vsel %vm423, %v431, %v433
    %v435 = vrot.slane %v93, 3
    %v436 = vsel %vm423, %v433, %v435
    %v437 = vrot.slane %v95, 3
    %v438 = vsel %vm423, %v435, %v437
    %v439 = vrot.slane %v97, 3
    %v440 = vsel %vm423, %v437, %v439
    %v441 = vrot.slane %v99, 3
    %v442 = vsel %vm423, %v439, %v441
    %v443 = vrot.slane %v101, 3
    %v444 = vsel %vm423, %v441, %v443
    %v445 = vrot.slane %v103, 3
    %v446 = vsel %vm423, %v443, %v445
    %v447 = vrot.slane %v160, 3
    %v448 = vsel %vm423, %v445, %v447
    %v449 = vrot.slane %v158, 3
    %v450 = vrot.slane %v108, 3
    %v451 = vsel %vm423, %v449, %v450
    %v452 = vrot.slane %v110, 3
    %v453 = vsel %vm423, %v450, %v452
    %v454 = vrot.slane %v112, 3
    %v455 = vsel %vm423, %v452, %v454
    %v456 = vrot.slane %v114, 3
    %v457 = vsel %vm423, %v454, %v456
    %v458 = vrot.slane %v116, 3
    %v459 = vsel %vm423, %v456, %v458
    %v460 = vrot.slane %v118, 3
    %v461 = vsel %vm423, %v458, %v460
    %v462 = vrot.slane %v120, 3
    %v463 = vsel %vm423, %v460, %v462
    %v464 = vrot.slane %v122, 3
    %v465 = vsel %vm423, %v462, %v464
    %v466 = vrot.slane %v124, 3
    %v467 = vsel %vm423, %v464, %v466
    %v468 = vrot.slane %v126, 3
    %v469 = vsel %vm423, %v466, %v468
    %v470 = vrot.slane %v128, 3
    %v471 = vsel %vm423, %v468, %v470
    %v472 = vrot.slane %v161, 3
    %v473 = vsel %vm423, %v470, %v472
    %474 = vrot.lane.b32.xlu0 %v426, 96
    %v475 = vpop.permute.xlu0 %474
    %476 = vrot.lane.b32.xlu0 %v428, 96
    %v477 = vpop.permute.xlu0 %476
    %478 = vrot.lane.b32.xlu0 %v430, 96
    %v479 = vpop.permute.xlu0 %478
    %480 = vrot.lane.b32.xlu0 %v432, 96
    %v481 = vpop.permute.xlu0 %480
    %482 = vrot.lane.b32.xlu0 %v434, 96
    %v483 = vpop.permute.xlu0 %482
    %484 = vrot.lane.b32.xlu0 %v436, 96
    %v485 = vpop.permute.xlu0 %484
    %486 = vrot.lane.b32.xlu0 %v438, 96
    %v487 = vpop.permute.xlu0 %486
    %488 = vrot.lane.b32.xlu0 %v440, 96
    %v489 = vpop.permute.xlu0 %488
    %490 = vrot.lane.b32.xlu0 %v442, 96
    %v491 = vpop.permute.xlu0 %490
    %492 = vrot.lane.b32.xlu0 %v444, 96
    %v493 = vpop.permute.xlu0 %492
    %494 = vrot.lane.b32.xlu0 %v446, 96
    %v495 = vpop.permute.xlu0 %494
    %496 = vrot.lane.b32.xlu0 %v448, 96
    %v497 = vpop.permute.xlu0 %496
    %498 = vrot.lane.b32.xlu0 %v447, 96
    %v499 = vpop.permute.xlu0 %498
    %500 = vrot.lane.b32.xlu0 %v451, 96
    %v501 = vpop.permute.xlu0 %500
    %502 = vrot.lane.b32.xlu0 %v453, 96
    %v503 = vpop.permute.xlu0 %502
    %504 = vrot.lane.b32.xlu0 %v455, 96
    %v505 = vpop.permute.xlu0 %504
    %506 = vrot.lane.b32.xlu0 %v457, 96
    %v507 = vpop.permute.xlu0 %506
    %508 = vrot.lane.b32.xlu0 %v459, 96
    %v509 = vpop.permute.xlu0 %508
    %510 = vrot.lane.b32.xlu0 %v461, 96
    %v511 = vpop.permute.xlu0 %510
    %512 = vrot.lane.b32.xlu0 %v463, 96
    %v513 = vpop.permute.xlu0 %512
    %514 = vrot.lane.b32.xlu0 %v465, 96
    %v515 = vpop.permute.xlu0 %514
    %516 = vrot.lane.b32.xlu0 %v467, 96
    %v517 = vpop.permute.xlu0 %516
    %518 = vrot.lane.b32.xlu0 %v469, 96
    %v519 = vpop.permute.xlu0 %518
    %520 = vrot.lane.b32.xlu0 %v471, 96
    %v521 = vpop.permute.xlu0 %520
    %522 = vrot.lane.b32.xlu0 %v473, 96
    %v523 = vpop.permute.xlu0 %522
    %524 = vrot.lane.b32.xlu0 %v472, 96
    %v525 = vpop.permute.xlu0 %524
    %vm552 = vcmask 1043456
    %v553 = vrot.slane %v157, 4
    %v554 = vrot.slane %v83, 4
    %v555 = vsel %vm552, %v553, %v554
    %v556 = vrot.slane %v85, 4
    %v557 = vsel %vm552, %v554, %v556
    %v558 = vrot.slane %v87, 4
    %v559 = vsel %vm552, %v556, %v558
    %v560 = vrot.slane %v89, 4
    %v561 = vsel %vm552, %v558, %v560
    %v562 = vrot.slane %v91, 4
    %v563 = vsel %vm552, %v560, %v562
    %v564 = vrot.slane %v93, 4
    %v565 = vsel %vm552, %v562, %v564
    %v566 = vrot.slane %v95, 4
    %v567 = vsel %vm552, %v564, %v566
    %v568 = vrot.slane %v97, 4
    %v569 = vsel %vm552, %v566, %v568
    %v570 = vrot.slane %v99, 4
    %v571 = vsel %vm552, %v568, %v570
    %v572 = vrot.slane %v101, 4
    %v573 = vsel %vm552, %v570, %v572
    %v574 = vrot.slane %v103, 4
    %v575 = vsel %vm552, %v572, %v574
    %v576 = vrot.slane %v160, 4
    %v577 = vsel %vm552, %v574, %v576
    %v578 = vrot.slane %v158, 4
    %v579 = vrot.slane %v108, 4
    %v580 = vsel %vm552, %v578, %v579
    %v581 = vrot.slane %v110, 4
    %v582 = vsel %vm552, %v579, %v581
    %v583 = vrot.slane %v112, 4
    %v584 = vsel %vm552, %v581, %v583
    %v585 = vrot.slane %v114, 4
    %v586 = vsel %vm552, %v583, %v585
    %v587 = vrot.slane %v116, 4
    %v588 = vsel %vm552, %v585, %v587
    %v589 = vrot.slane %v118, 4
    %v590 = vsel %vm552, %v587, %v589
    %v591 = vrot.slane %v120, 4
    %v592 = vsel %vm552, %v589, %v591
    %v593 = vrot.slane %v122, 4
    %v594 = vsel %vm552, %v591, %v593
    %v595 = vrot.slane %v124, 4
    %v596 = vsel %vm552, %v593, %v595
    %v597 = vrot.slane %v126, 4
    %v598 = vsel %vm552, %v595, %v597
    %v599 = vrot.slane %v128, 4
    %v600 = vsel %vm552, %v597, %v599
    %v601 = vrot.slane %v161, 4
    %v602 = vsel %vm552, %v599, %v601
    %vm603 = vcmask 261120
    %v604 = vsel %vm603, %v157, %v218
    %v605 = vsel %vm603, %v83, %v220
    %v606 = vsel %vm603, %v85, %v222
    %v607 = vsel %vm603, %v87, %v224
    %v608 = vsel %vm603, %v89, %v226
    %v609 = vsel %vm603, %v91, %v228
    %v610 = vsel %vm603, %v93, %v230
    %v611 = vsel %vm603, %v95, %v232
    %v612 = vsel %vm603, %v97, %v234
    %v613 = vsel %vm603, %v99, %v236
    %v614 = vsel %vm603, %v101, %v238
    %v615 = vsel %vm603, %v103, %v240
    %v616 = vsel %vm603, %v160, %v242
    %v617 = vsel %vm603, %v158, %v244
    %v618 = vsel %vm603, %v108, %v246
    %v619 = vsel %vm603, %v110, %v248
    %v620 = vsel %vm603, %v112, %v250
    %v621 = vsel %vm603, %v114, %v252
    %v622 = vsel %vm603, %v116, %v254
    %v623 = vsel %vm603, %v118, %v256
    %v624 = vsel %vm603, %v120, %v258
    %v625 = vsel %vm603, %v122, %v260
    %v626 = vsel %vm603, %v124, %v262
    %v627 = vsel %vm603, %v126, %v264
    %v628 = vsel %vm603, %v128, %v266
    %v629 = vsel %vm603, %v161, %v268
    %vm630 = vcmask 523264
    %v631 = vsel %vm630, %v604, %v346
    %v632 = vsel %vm630, %v605, %v348
    %v633 = vsel %vm630, %v606, %v350
    %v634 = vsel %vm630, %v607, %v352
    %v635 = vsel %vm630, %v608, %v354
    %v636 = vsel %vm630, %v609, %v356
    %v637 = vsel %vm630, %v610, %v358
    %v638 = vsel %vm630, %v611, %v360
    %v639 = vsel %vm630, %v612, %v362
    %v640 = vsel %vm630, %v613, %v364
    %v641 = vsel %vm630, %v614, %v366
    %v642 = vsel %vm630, %v615, %v368
    %v643 = vsel %vm630, %v616, %v370
    %v644 = vsel %vm630, %v617, %v372
    %v645 = vsel %vm630, %v618, %v374
    %v646 = vsel %vm630, %v619, %v376
    %v647 = vsel %vm630, %v620, %v378
    %v648 = vsel %vm630, %v621, %v380
    %v649 = vsel %vm630, %v622, %v382
    %v650 = vsel %vm630, %v623, %v384
    %v651 = vsel %vm630, %v624, %v386
    %v652 = vsel %vm630, %v625, %v388
    %v653 = vsel %vm630, %v626, %v390
    %v654 = vsel %vm630, %v627, %v392
    %v655 = vsel %vm630, %v628, %v394
    %v656 = vsel %vm630, %v629, %v396
    %vm657 = vcmask 785408
    %v658 = vsel %vm657, %v631, %v475
    %v659 = vsel %vm657, %v632, %v477
    %v660 = vsel %vm657, %v633, %v479
    %v661 = vsel %vm657, %v634, %v481
    %v662 = vsel %vm657, %v635, %v483
    %v663 = vsel %vm657, %v636, %v485
    %v664 = vsel %vm657, %v637, %v487
    %v665 = vsel %vm657, %v638, %v489
    %v666 = vsel %vm657, %v639, %v491
    %v667 = vsel %vm657, %v640, %v493
    %v668 = vsel %vm657, %v641, %v495
    %v669 = vsel %vm657, %v642, %v497
    %v670 = vsel %vm657, %v643, %v499
    %v671 = vsel %vm657, %v644, %v501
    %v672 = vsel %vm657, %v645, %v503
    %v673 = vsel %vm657, %v646, %v505
    %v674 = vsel %vm657, %v647, %v507
    %v675 = vsel %vm657, %v648, %v509
    %v676 = vsel %vm657, %v649, %v511
    %v677 = vsel %vm657, %v650, %v513
    %v678 = vsel %vm657, %v651, %v515
    %v679 = vsel %vm657, %v652, %v517
    %v680 = vsel %vm657, %v653, %v519
    %v681 = vsel %vm657, %v654, %v521
    %v682 = vsel %vm657, %v655, %v523
    %v683 = vsel %vm657, %v656, %v525
    %v710 = vcombine.low %v658, %v555
    %v711 = vcombine.high %v658, %v555
    %v712 = vcombine.low %v659, %v557
    %v713 = vcombine.high %v659, %v557
    %v714 = vcombine.low %v660, %v559
    %v715 = vcombine.high %v660, %v559
    %v716 = vcombine.low %v661, %v561
    %v717 = vcombine.high %v661, %v561
    %v718 = vcombine.low %v662, %v563
    %v719 = vcombine.high %v662, %v563
    %v720 = vcombine.low %v663, %v565
    %v721 = vcombine.high %v663, %v565
    %v722 = vcombine.low %v664, %v567
    %v723 = vcombine.high %v664, %v567
    %v724 = vcombine.low %v665, %v569
    %v725 = vcombine.high %v665, %v569
    %v726 = vcombine.low %v666, %v571
    %v727 = vcombine.high %v666, %v571
    %v728 = vcombine.low %v667, %v573
    %v729 = vcombine.high %v667, %v573
    %v730 = vcombine.low %v668, %v575
    %v731 = vcombine.high %v668, %v575
    %v732 = vcombine.low %v669, %v577
    %v733 = vcombine.high %v669, %v577
    %v734 = vcombine.low %v670, %v576
    %v735 = vcombine.low %v671, %v580
    %v736 = vcombine.high %v671, %v580
    %v737 = vcombine.low %v672, %v582
    %v738 = vcombine.high %v672, %v582
    %v739 = vcombine.low %v673, %v584
    %v740 = vcombine.high %v673, %v584
    %v741 = vcombine.low %v674, %v586
    %v742 = vcombine.high %v674, %v586
    %v743 = vcombine.low %v675, %v588
    %v744 = vcombine.high %v675, %v588
    %v745 = vcombine.low %v676, %v590
    %v746 = vcombine.high %v676, %v590
    %v747 = vcombine.low %v677, %v592
    %v748 = vcombine.high %v677, %v592
    %v749 = vcombine.low %v678, %v594
    %v750 = vcombine.high %v678, %v594
    %v751 = vcombine.low %v679, %v596
    %v752 = vcombine.high %v679, %v596
    %v753 = vcombine.low %v680, %v598
    %v754 = vcombine.high %v680, %v598
    %v755 = vcombine.low %v681, %v600
    %v756 = vcombine.high %v681, %v600
    %v757 = vcombine.low %v682, %v602
    %v758 = vcombine.high %v682, %v602
    %v759 = vcombine.low %v683, %v601
    %v760 = vcombine.low %v710, %v711
    %v761 = vcombine.high %v710, %v711
    %v762 = vcombine.low %v712, %v713
    %v763 = vcombine.high %v712, %v713
    %v764 = vcombine.low %v714, %v715
    %v765 = vcombine.high %v714, %v715
    %v766 = vcombine.low %v716, %v717
    %v767 = vcombine.high %v716, %v717
    %v768 = vcombine.low %v718, %v719
    %v769 = vcombine.high %v718, %v719
    %v770 = vcombine.low %v720, %v721
    %v771 = vcombine.high %v720, %v721
    %v772 = vcombine.low %v722, %v723
    %v773 = vcombine.high %v722, %v723
    %v774 = vcombine.low %v724, %v725
    %v775 = vcombine.high %v724, %v725
    %v776 = vcombine.low %v726, %v727
    %v777 = vcombine.high %v726, %v727
    %v778 = vcombine.low %v728, %v729
    %v779 = vcombine.high %v728, %v729
    %v780 = vcombine.low %v730, %v731
    %v781 = vcombine.high %v730, %v731
    %v782 = vcombine.low %v732, %v733
    %v783 = vcombine.high %v732, %v733
    %v784 = vcombine.low %v734, %v735
    %v785 = vcombine.high %v734, %v735
    %v786 = vcombine.low %v736, %v737
    %v787 = vcombine.high %v736, %v737
    %v788 = vcombine.low %v738, %v739
    %v789 = vcombine.high %v738, %v739
    %v790 = vcombine.low %v740, %v741
    %v791 = vcombine.high %v740, %v741
    %v792 = vcombine.low %v742, %v743
    %v793 = vcombine.high %v742, %v743
    %v794 = vcombine.low %v744, %v745
    %v795 = vcombine.high %v744, %v745
    %v796 = vcombine.low %v746, %v747
    %v797 = vcombine.high %v746, %v747
    %v798 = vcombine.low %v748, %v749
    %v799 = vcombine.high %v748, %v749
    %v800 = vcombine.low %v750, %v751
    %v801 = vcombine.high %v750, %v751
    %v802 = vcombine.low %v752, %v753
    %v803 = vcombine.high %v752, %v753
    %v804 = vcombine.low %v754, %v755
    %v805 = vcombine.high %v754, %v755
    %v806 = vcombine.low %v756, %v757
    %v807 = vcombine.high %v756, %v757
    %v808 = vcombine.low %v758, %v759
    %v809 = vcombine.high %v758, %v759
    %v860 = vpack.c.bf16 %v762, %v760
    %v861 = vpack.c.bf16 %v763, %v761
    %v862 = vpack.c.bf16 %v766, %v764
    %v863 = vpack.c.bf16 %v767, %v765
    %v864 = vpack.c.bf16 %v770, %v768
    %v865 = vpack.c.bf16 %v771, %v769
    %v866 = vpack.c.bf16 %v774, %v772
    %v867 = vpack.c.bf16 %v775, %v773
    %v868 = vpack.c.bf16 %v778, %v776
    %v869 = vpack.c.bf16 %v779, %v777
    %v870 = vpack.c.bf16 %v782, %v780
    %v871 = vpack.c.bf16 %v783, %v781
    %v872 = vpack.c.bf16 %v786, %v784
    %v873 = vpack.c.bf16 %v787, %v785
    %v874 = vpack.c.bf16 %v790, %v788
    %v875 = vpack.c.bf16 %v791, %v789
    %v876 = vpack.c.bf16 %v794, %v792
    %v877 = vpack.c.bf16 %v795, %v793
    %v878 = vpack.c.bf16 %v798, %v796
    %v879 = vpack.c.bf16 %v799, %v797
    %v880 = vpack.c.bf16 %v802, %v800
    %v881 = vpack.c.bf16 %v803, %v801
    %v882 = vpack.c.bf16 %v806, %v804
    %v883 = vpack.c.bf16 %v807, %v805
    %v884 = vpack.c.bf16 %v808, %v808
    %v885 = vpack.c.bf16 %v809, %v809
    %v886 = vld [vmem:[%s1] sm:$0xf]
    %v887 = vld [vmem:[%s1 + $0x4] sm:$0xf]
    %v888 = vld [vmem:[%s1 + $0x8] sm:$0xf]
    %v889 = vld [vmem:[%s1 + $0xc] sm:$0xf]
    %v890 = vld [vmem:[%s1 + $0x10] sm:$0xf]
    %v891 = vld [vmem:[%s1 + $0x14] sm:$0xf]
    %v892 = vld [vmem:[%s1 + $0x18] sm:$0xf]
    %v893 = vld [vmem:[%s1 + $0x1c] sm:$0xf]
    %v894 = vld [vmem:[%s1 + $0x20] sm:$0xf]
    %v895 = vld [vmem:[%s1 + $0x24] sm:$0xf]
    %v896 = vld [vmem:[%s1 + $0x28] sm:$0xf]
    %v897 = vld [vmem:[%s1 + $0x2c] sm:$0xf]
    %v898 = vld [vmem:[%s1 + $0x30] sm:$0xf]
    %v899 = vld [vmem:[%s1 + $0x34] sm:$0xf]
    %v900 = vld [vmem:[%s1 + $0x38] sm:$0xf]
    %v901 = vld [vmem:[%s1 + $0x3c] sm:$0xf]
    %v902 = vld [vmem:[%s1 + $0x40] sm:$0xf]
    %v903 = vld [vmem:[%s1 + $0x44] sm:$0xf]
    %v904 = vld [vmem:[%s1 + $0x48] sm:$0xf]
    %v905 = vld [vmem:[%s1 + $0x4c] sm:$0xf]
    %v906 = vld [vmem:[%s2] sm:$0x1]
    %v908 = vlaneseq
    %v909 = vshrl.u32 %v908, 7
    %v910 = vsub.s32 0, %v909
    %v911 = vrot.slane %v906, %v910
    %v933 = vunpack.c.l.b16 %v886
    %v934 = vunpack.c.l.b16 %v887
    %v935 = vunpack.c.l.b16 %v888
    %v936 = vunpack.c.l.b16 %v889
    %v937 = vunpack.c.l.b16 %v890
    %v938 = vunpack.c.l.b16 %v891
    %v939 = vunpack.c.l.b16 %v892
    %v940 = vunpack.c.l.b16 %v893
    %v941 = vunpack.c.l.b16 %v894
    %v942 = vunpack.c.l.b16 %v895
    %v943 = vunpack.c.l.b16 %v896
    %v944 = vunpack.c.l.b16 %v897
    %v945 = vunpack.c.l.b16 %v898
    %v946 = vunpack.c.l.b16 %v899
    %v947 = vunpack.c.l.b16 %v900
    %v948 = vunpack.c.l.b16 %v901
    %v949 = vunpack.c.l.b16 %v902
    %v950 = vunpack.c.l.b16 %v903
    %v951 = vunpack.c.l.b16 %v904
    %v952 = vunpack.c.l.b16 %v905
    %v953 = vpack.c.b16 %v934, %v933
    %v954 = vpack.c.b16 %v936, %v935
    %v955 = vpack.c.b16 %v938, %v937
    %v956 = vpack.c.b16 %v940, %v939
    %v957 = vpack.c.b16 %v942, %v941
    %v958 = vpack.c.b16 %v944, %v943
    %v959 = vpack.c.b16 %v946, %v945
    %v960 = vpack.c.b16 %v948, %v947
    %v961 = vpack.c.b16 %v950, %v949
    %v962 = vpack.c.b16 %v952, %v951
    %v974 = vsel %vm603, %v861, 0
    %v977 = vsel %vm603, %v863, 0
    %v980 = vsel %vm603, %v865, 0
    %v983 = vsel %vm603, %v867, 0
    %v986 = vsel %vm603, %v869, 0
    %v989 = vsel %vm603, %v871, 0
    %v992 = vsel %vm603, %v873, 0
    %v995 = vsel %vm603, %v875, 0
    %v998 = vsel %vm603, %v877, 0
    %v1001 = vsel %vm603, %v879, 0
    %v1004 = vsel %vm603, %v881, 0
    %v1007 = vsel %vm603, %v883, 0
    %v1010 = vsel %vm603, %v885, 0
    %1012 = vmatprep.subr.bf16.mxu0 0
    %1013 = vmatpush1.bf16.msra.mxu0 %v960
    %1014 = vmatprep.subr.bf16.mxu0 0
    %1015 = vmatpush1.bf16.msra.mxu0 %v959
    %1016 = vmatprep.subr.bf16.mxu0 0
    %1017 = vmatpush1.bf16.msra.mxu0 %v958
    %1018 = vmatprep.subr.bf16.mxu0 0
    %1019 = vmatpush1.bf16.msra.mxu0 %v957
    %1020 = vmatprep.subr.bf16.mxu0 0
    %1021 = vmatpush1.bf16.msra.mxu0 %v956
    %1022 = vmatprep.subr.bf16.mxu0 0
    %1023 = vmatpush1.bf16.msra.mxu0 %v955
    %1024 = vmatprep.subr.bf16.mxu0 0
    %1025 = vmatpush1.bf16.msra.mxu0 %v954
    %1026 = vmatprep.subr.bf16.mxu0 0
    %1027 = vmatpush1.bf16.msra.mxu0 %v953
    %1028 = vmatprep.subr.bf16.mxu0 0
    %1029 = vmatpush2.bf16.msra.mxu0 0
    %1030 = vmatprep.subr.bf16.mxu0 0
    %1031 = vmatpush2.bf16.msra.mxu0 0
    %1032 = vmatprep.subr.bf16.mxu0 0
    %1033 = vmatpush2.bf16.msra.mxu0 0
    %1034 = vmatprep.subr.bf16.mxu0 0
    %1035 = vmatpush2.bf16.msra.mxu0 0
    %1036 = vmatprep.subr.bf16.mxu0 0
    %1037 = vmatpush2.bf16.msra.mxu0 0
    %1038 = vmatprep.subr.bf16.mxu0 0
    %1039 = vmatpush2.bf16.msra.mxu0 0
    %1040 = vmatprep.subr.bf16.mxu0 0
    %1041 = vmatpush2.bf16.msra.mxu0 %v962
    %1042 = vmatprep.subr.bf16.mxu0 0
    %1043 = vmatpush2.bf16.msra.mxu0 %v961
    %1044 = vmatprep.mubr.bf16.mxu0 %v974
    %1045 = vmatmul.mubr.bf16.gmra.mxu0 %v860
    %v1046 = vpop.f32.mrf.mxu0
    %v1047 = vadd.f32 %v911, %v1046
    %v1048 = vpop.f32.mrf.mxu0
    %v1049 = vpop.f32.mrf.mxu0
    %v1050 = vadd.f32 %v911, %v1049
    %v1051 = vpop.f32.mrf.mxu0
    %1052 = vmatprep.mubr.bf16.mxu0 %v977
    %1053 = vmatmul.mubr.bf16.gmra.mxu0 %v862
    %v1054 = vpop.f32.mrf.mxu0
    %v1055 = vadd.f32 %v911, %v1054
    %v1056 = vpop.f32.mrf.mxu0
    %v1057 = vpop.f32.mrf.mxu0
    %v1058 = vadd.f32 %v911, %v1057
    %v1059 = vpop.f32.mrf.mxu0
    %1060 = vmatprep.mubr.bf16.mxu0 %v980
    %1061 = vmatmul.mubr.bf16.gmra.mxu0 %v864
    %v1062 = vpop.f32.mrf.mxu0
    %v1063 = vadd.f32 %v911, %v1062
    %v1064 = vpop.f32.mrf.mxu0
    %v1065 = vpop.f32.mrf.mxu0
    %v1066 = vadd.f32 %v911, %v1065
    %v1067 = vpop.f32.mrf.mxu0
    %1068 = vmatprep.mubr.bf16.mxu0 %v983
    %1069 = vmatmul.mubr.bf16.gmra.mxu0 %v866
    %v1070 = vpop.f32.mrf.mxu0
    %v1071 = vadd.f32 %v911, %v1070
    %v1072 = vpop.f32.mrf.mxu0
    %v1073 = vpop.f32.mrf.mxu0
    %v1074 = vadd.f32 %v911, %v1073
    %v1075 = vpop.f32.mrf.mxu0
    %1076 = vmatprep.mubr.bf16.mxu0 %v986
    %1077 = vmatmul.mubr.bf16.gmra.mxu0 %v868
    %v1078 = vpop.f32.mrf.mxu0
    %v1079 = vadd.f32 %v911, %v1078
    %v1080 = vpop.f32.mrf.mxu0
    %v1081 = vpop.f32.mrf.mxu0
    %v1082 = vadd.f32 %v911, %v1081
    %v1083 = vpop.f32.mrf.mxu0
    %1084 = vmatprep.mubr.bf16.mxu0 %v989
    %1085 = vmatmul.mubr.bf16.gmra.mxu0 %v870
    %v1086 = vpop.f32.mrf.mxu0
    %v1087 = vadd.f32 %v911, %v1086
    %v1088 = vpop.f32.mrf.mxu0
    %v1089 = vpop.f32.mrf.mxu0
    %v1090 = vadd.f32 %v911, %v1089
    %v1091 = vpop.f32.mrf.mxu0
    %1092 = vmatprep.mubr.bf16.mxu0 %v992
    %1093 = vmatmul.mubr.bf16.gmra.mxu0 %v872
    %v1094 = vpop.f32.mrf.mxu0
    %v1095 = vadd.f32 %v911, %v1094
    %v1096 = vpop.f32.mrf.mxu0
    %v1097 = vpop.f32.mrf.mxu0
    %v1098 = vadd.f32 %v911, %v1097
    %v1099 = vpop.f32.mrf.mxu0
    %1100 = vmatprep.mubr.bf16.mxu0 %v995
    %1101 = vmatmul.mubr.bf16.gmra.mxu0 %v874
    %v1102 = vpop.f32.mrf.mxu0
    %v1103 = vadd.f32 %v911, %v1102
    %v1104 = vpop.f32.mrf.mxu0
    %v1105 = vpop.f32.mrf.mxu0
    %v1106 = vadd.f32 %v911, %v1105
    %v1107 = vpop.f32.mrf.mxu0
    %1108 = vmatprep.mubr.bf16.mxu0 %v998
    %1109 = vmatmul.mubr.bf16.gmra.mxu0 %v876
    %v1110 = vpop.f32.mrf.mxu0
    %v1111 = vadd.f32 %v911, %v1110
    %v1112 = vpop.f32.mrf.mxu0
    %v1113 = vpop.f32.mrf.mxu0
    %v1114 = vadd.f32 %v911, %v1113
    %v1115 = vpop.f32.mrf.mxu0
    %1116 = vmatprep.mubr.bf16.mxu0 %v1001
    %1117 = vmatmul.mubr.bf16.gmra.mxu0 %v878
    %v1118 = vpop.f32.mrf.mxu0
    %v1119 = vadd.f32 %v911, %v1118
    %v1120 = vpop.f32.mrf.mxu0
    %v1121 = vpop.f32.mrf.mxu0
    %v1122 = vadd.f32 %v911, %v1121
    %v1123 = vpop.f32.mrf.mxu0
    %1124 = vmatprep.mubr.bf16.mxu0 %v1004
    %1125 = vmatmul.mubr.bf16.gmra.mxu0 %v880
    %v1126 = vpop.f32.mrf.mxu0
    %v1127 = vadd.f32 %v911, %v1126
    %v1128 = vpop.f32.mrf.mxu0
    %v1129 = vpop.f32.mrf.mxu0
    %v1130 = vadd.f32 %v911, %v1129
    %v1131 = vpop.f32.mrf.mxu0
    %1132 = vmatprep.mubr.bf16.mxu0 %v1007
    %1133 = vmatmul.mubr.bf16.gmra.mxu0 %v882
    %v1134 = vpop.f32.mrf.mxu0
    %v1135 = vadd.f32 %v911, %v1134
    %v1136 = vpop.f32.mrf.mxu0
    %v1137 = vpop.f32.mrf.mxu0
    %v1138 = vadd.f32 %v911, %v1137
    %v1139 = vpop.f32.mrf.mxu0
    %1140 = vmatprep.mubr.bf16.mxu0 %v1010
    %1141 = vmatmul.mubr.bf16.gmra.mxu0 %v884
    %v1142 = vpop.f32.mrf.mxu0
    %v1143 = vadd.f32 %v911, %v1142
    %v1144 = vpop.f32.mrf.mxu0
    %v1145 = vpop.f32.mrf.mxu0
    %v1146 = vpop.f32.mrf.mxu0
    %1147 = vdwg.mxu0
    %v1173 = vcombine.high %v1047, %v1047
    %v1175 = vunpack.c.l.s4 1966171168
    %v1176 = vunpack.c.0.s8 %v1175
    %v1177 = vlaneseq
    %v1178 = vshrl.u32 %v1177, 7
    %v1179 = vsub.s32 %v1176, %v1178
    %v1180 = vrot.slane %v1047, %v1179
    %v1182 = vunpack.c.l.s4 1966171168
    %v1183 = vunpack.c.0.s8 %v1182
    %v1184 = vlaneseq
    %v1185 = vshrl.u32 %v1184, 7
    %v1186 = vsub.s32 %v1183, %v1185
    %v1187 = vrot.slane %v1173, %v1186
    %v1188 = vcombine.high %v1180, %v1180
    %v1189 = vcombine.high %v1187, %v1187
    %v1191 = vunpack.c.l.s4 1966171168
    %v1192 = vunpack.c.0.s8 %v1191
    %v1193 = vlaneseq
    %v1194 = vshrl.u32 %v1193, 7
    %v1195 = vsub.s32 %v1192, %v1194
    %v1196 = vrot.slane %v1180, %v1195
    %v1198 = vunpack.c.l.s4 1966171168
    %v1199 = vunpack.c.0.s8 %v1198
    %v1200 = vlaneseq
    %v1201 = vshrl.u32 %v1200, 7
    %v1202 = vsub.s32 %v1199, %v1201
    %v1203 = vrot.slane %v1187, %v1202
    %v1205 = vunpack.c.l.s4 1966171168
    %v1206 = vunpack.c.0.s8 %v1205
    %v1207 = vlaneseq
    %v1208 = vshrl.u32 %v1207, 7
    %v1209 = vsub.s32 %v1206, %v1208
    %v1210 = vrot.slane %v1188, %v1209
    %v1212 = vunpack.c.l.s4 1966171168
    %v1213 = vunpack.c.0.s8 %v1212
    %v1214 = vlaneseq
    %v1215 = vshrl.u32 %v1214, 7
    %v1216 = vsub.s32 %v1213, %v1215
    %v1217 = vrot.slane %v1189, %v1216
    %v1218 = vcombine.high %v1196, %v1196
    %v1219 = vcombine.high %v1203, %v1203
    %v1220 = vcombine.high %v1210, %v1210
    %v1221 = vcombine.high %v1217, %v1217
    %v1222 = vcombine.high %v1050, %v1050
    %v1224 = vunpack.c.l.s4 1966171168
    %v1225 = vunpack.c.0.s8 %v1224
    %v1226 = vlaneseq
    %v1227 = vshrl.u32 %v1226, 7
    %v1228 = vsub.s32 %v1225, %v1227
    %v1229 = vrot.slane %v1050, %v1228
    %v1231 = vunpack.c.l.s4 1966171168
    %v1232 = vunpack.c.0.s8 %v1231
    %v1233 = vlaneseq
    %v1234 = vshrl.u32 %v1233, 7
    %v1235 = vsub.s32 %v1232, %v1234
    %v1236 = vrot.slane %v1222, %v1235
    %v1237 = vcombine.high %v1229, %v1229
    %v1238 = vcombine.high %v1236, %v1236
    %v1240 = vunpack.c.l.s4 1966171168
    %v1241 = vunpack.c.0.s8 %v1240
    %v1242 = vlaneseq
    %v1243 = vshrl.u32 %v1242, 7
    %v1244 = vsub.s32 %v1241, %v1243
    %v1245 = vrot.slane %v1229, %v1244
    %v1247 = vunpack.c.l.s4 1966171168
    %v1248 = vunpack.c.0.s8 %v1247
    %v1249 = vlaneseq
    %v1250 = vshrl.u32 %v1249, 7
    %v1251 = vsub.s32 %v1248, %v1250
    %v1252 = vrot.slane %v1236, %v1251
    %v1254 = vunpack.c.l.s4 1966171168
    %v1255 = vunpack.c.0.s8 %v1254
    %v1256 = vlaneseq
    %v1257 = vshrl.u32 %v1256, 7
    %v1258 = vsub.s32 %v1255, %v1257
    %v1259 = vrot.slane %v1237, %v1258
    %v1261 = vunpack.c.l.s4 1966171168
    %v1262 = vunpack.c.0.s8 %v1261
    %v1263 = vlaneseq
    %v1264 = vshrl.u32 %v1263, 7
    %v1265 = vsub.s32 %v1262, %v1264
    %v1266 = vrot.slane %v1238, %v1265
    %v1267 = vcombine.high %v1245, %v1245
    %v1268 = vcombine.high %v1252, %v1252
    %v1269 = vcombine.high %v1259, %v1259
    %v1270 = vcombine.high %v1266, %v1266
    %v1271 = vcombine.high %v1055, %v1055
    %v1273 = vunpack.c.l.s4 1966171168
    %v1274 = vunpack.c.0.s8 %v1273
    %v1275 = vlaneseq
    %v1276 = vshrl.u32 %v1275, 7
    %v1277 = vsub.s32 %v1274, %v1276
    %v1278 = vrot.slane %v1055, %v1277
    %v1280 = vunpack.c.l.s4 1966171168
    %v1281 = vunpack.c.0.s8 %v1280
    %v1282 = vlaneseq
    %v1283 = vshrl.u32 %v1282, 7
    %v1284 = vsub.s32 %v1281, %v1283
    %v1285 = vrot.slane %v1271, %v1284
    %v1286 = vcombine.high %v1278, %v1278
    %v1287 = vcombine.high %v1285, %v1285
    %v1289 = vunpack.c.l.s4 1966171168
    %v1290 = vunpack.c.0.s8 %v1289
    %v1291 = vlaneseq
    %v1292 = vshrl.u32 %v1291, 7
    %v1293 = vsub.s32 %v1290, %v1292
    %v1294 = vrot.slane %v1278, %v1293
    %v1296 = vunpack.c.l.s4 1966171168
    %v1297 = vunpack.c.0.s8 %v1296
    %v1298 = vlaneseq
    %v1299 = vshrl.u32 %v1298, 7
    %v1300 = vsub.s32 %v1297, %v1299
    %v1301 = vrot.slane %v1285, %v1300
    %v1303 = vunpack.c.l.s4 1966171168
    %v1304 = vunpack.c.0.s8 %v1303
    %v1305 = vlaneseq
    %v1306 = vshrl.u32 %v1305, 7
    %v1307 = vsub.s32 %v1304, %v1306
    %v1308 = vrot.slane %v1286, %v1307
    %v1310 = vunpack.c.l.s4 1966171168
    %v1311 = vunpack.c.0.s8 %v1310
    %v1312 = vlaneseq
    %v1313 = vshrl.u32 %v1312, 7
    %v1314 = vsub.s32 %v1311, %v1313
    %v1315 = vrot.slane %v1287, %v1314
    %v1316 = vcombine.high %v1294, %v1294
    %v1317 = vcombine.high %v1301, %v1301
    %v1318 = vcombine.high %v1308, %v1308
    %v1319 = vcombine.high %v1315, %v1315
    %v1320 = vcombine.high %v1058, %v1058
    %v1322 = vunpack.c.l.s4 1966171168
    %v1323 = vunpack.c.0.s8 %v1322
    %v1324 = vlaneseq
    %v1325 = vshrl.u32 %v1324, 7
    %v1326 = vsub.s32 %v1323, %v1325
    %v1327 = vrot.slane %v1058, %v1326
    %v1329 = vunpack.c.l.s4 1966171168
    %v1330 = vunpack.c.0.s8 %v1329
    %v1331 = vlaneseq
    %v1332 = vshrl.u32 %v1331, 7
    %v1333 = vsub.s32 %v1330, %v1332
    %v1334 = vrot.slane %v1320, %v1333
    %v1335 = vcombine.high %v1327, %v1327
    %v1336 = vcombine.high %v1334, %v1334
    %v1338 = vunpack.c.l.s4 1966171168
    %v1339 = vunpack.c.0.s8 %v1338
    %v1340 = vlaneseq
    %v1341 = vshrl.u32 %v1340, 7
    %v1342 = vsub.s32 %v1339, %v1341
    %v1343 = vrot.slane %v1327, %v1342
    %v1345 = vunpack.c.l.s4 1966171168
    %v1346 = vunpack.c.0.s8 %v1345
    %v1347 = vlaneseq
    %v1348 = vshrl.u32 %v1347, 7
    %v1349 = vsub.s32 %v1346, %v1348
    %v1350 = vrot.slane %v1334, %v1349
    %v1352 = vunpack.c.l.s4 1966171168
    %v1353 = vunpack.c.0.s8 %v1352
    %v1354 = vlaneseq
    %v1355 = vshrl.u32 %v1354, 7
    %v1356 = vsub.s32 %v1353, %v1355
    %v1357 = vrot.slane %v1335, %v1356
    %v1359 = vunpack.c.l.s4 1966171168
    %v1360 = vunpack.c.0.s8 %v1359
    %v1361 = vlaneseq
    %v1362 = vshrl.u32 %v1361, 7
    %v1363 = vsub.s32 %v1360, %v1362
    %v1364 = vrot.slane %v1336, %v1363
    %v1365 = vcombine.high %v1343, %v1343
    %v1366 = vcombine.high %v1350, %v1350
    %v1367 = vcombine.high %v1357, %v1357
    %v1368 = vcombine.high %v1364, %v1364
    %v1369 = vcombine.high %v1063, %v1063
    %v1371 = vunpack.c.l.s4 1966171168
    %v1372 = vunpack.c.0.s8 %v1371
    %v1373 = vlaneseq
    %v1374 = vshrl.u32 %v1373, 7
    %v1375 = vsub.s32 %v1372, %v1374
    %v1376 = vrot.slane %v1063, %v1375
    %v1378 = vunpack.c.l.s4 1966171168
    %v1379 = vunpack.c.0.s8 %v1378
    %v1380 = vlaneseq
    %v1381 = vshrl.u32 %v1380, 7
    %v1382 = vsub.s32 %v1379, %v1381
    %v1383 = vrot.slane %v1369, %v1382
    %v1384 = vcombine.high %v1376, %v1376
    %v1385 = vcombine.high %v1383, %v1383
    %v1387 = vunpack.c.l.s4 1966171168
    %v1388 = vunpack.c.0.s8 %v1387
    %v1389 = vlaneseq
    %v1390 = vshrl.u32 %v1389, 7
    %v1391 = vsub.s32 %v1388, %v1390
    %v1392 = vrot.slane %v1376, %v1391
    %v1394 = vunpack.c.l.s4 1966171168
    %v1395 = vunpack.c.0.s8 %v1394
    %v1396 = vlaneseq
    %v1397 = vshrl.u32 %v1396, 7
    %v1398 = vsub.s32 %v1395, %v1397
    %v1399 = vrot.slane %v1383, %v1398
    %v1401 = vunpack.c.l.s4 1966171168
    %v1402 = vunpack.c.0.s8 %v1401
    %v1403 = vlaneseq
    %v1404 = vshrl.u32 %v1403, 7
    %v1405 = vsub.s32 %v1402, %v1404
    %v1406 = vrot.slane %v1384, %v1405
    %v1408 = vunpack.c.l.s4 1966171168
    %v1409 = vunpack.c.0.s8 %v1408
    %v1410 = vlaneseq
    %v1411 = vshrl.u32 %v1410, 7
    %v1412 = vsub.s32 %v1409, %v1411
    %v1413 = vrot.slane %v1385, %v1412
    %v1414 = vcombine.high %v1392, %v1392
    %v1415 = vcombine.high %v1399, %v1399
    %v1416 = vcombine.high %v1406, %v1406
    %v1417 = vcombine.high %v1413, %v1413
    %v1418 = vcombine.high %v1066, %v1066
    %v1420 = vunpack.c.l.s4 1966171168
    %v1421 = vunpack.c.0.s8 %v1420
    %v1422 = vlaneseq
    %v1423 = vshrl.u32 %v1422, 7
    %v1424 = vsub.s32 %v1421, %v1423
    %v1425 = vrot.slane %v1066, %v1424
    %v1427 = vunpack.c.l.s4 1966171168
    %v1428 = vunpack.c.0.s8 %v1427
    %v1429 = vlaneseq
    %v1430 = vshrl.u32 %v1429, 7
    %v1431 = vsub.s32 %v1428, %v1430
    %v1432 = vrot.slane %v1418, %v1431
    %v1433 = vcombine.high %v1425, %v1425
    %v1434 = vcombine.high %v1432, %v1432
    %v1436 = vunpack.c.l.s4 1966171168
    %v1437 = vunpack.c.0.s8 %v1436
    %v1438 = vlaneseq
    %v1439 = vshrl.u32 %v1438, 7
    %v1440 = vsub.s32 %v1437, %v1439
    %v1441 = vrot.slane %v1425, %v1440
    %v1443 = vunpack.c.l.s4 1966171168
    %v1444 = vunpack.c.0.s8 %v1443
    %v1445 = vlaneseq
    %v1446 = vshrl.u32 %v1445, 7
    %v1447 = vsub.s32 %v1444, %v1446
    %v1448 = vrot.slane %v1432, %v1447
    %v1450 = vunpack.c.l.s4 1966171168
    %v1451 = vunpack.c.0.s8 %v1450
    %v1452 = vlaneseq
    %v1453 = vshrl.u32 %v1452, 7
    %v1454 = vsub.s32 %v1451, %v1453
    %v1455 = vrot.slane %v1433, %v1454
    %v1457 = vunpack.c.l.s4 1966171168
    %v1458 = vunpack.c.0.s8 %v1457
    %v1459 = vlaneseq
    %v1460 = vshrl.u32 %v1459, 7
    %v1461 = vsub.s32 %v1458, %v1460
    %v1462 = vrot.slane %v1434, %v1461
    %v1463 = vcombine.high %v1441, %v1441
    %v1464 = vcombine.high %v1448, %v1448
    %v1465 = vcombine.high %v1455, %v1455
    %v1466 = vcombine.high %v1462, %v1462
    %v1467 = vcombine.high %v1071, %v1071
    %v1469 = vunpack.c.l.s4 1966171168
    %v1470 = vunpack.c.0.s8 %v1469
    %v1471 = vlaneseq
    %v1472 = vshrl.u32 %v1471, 7
    %v1473 = vsub.s32 %v1470, %v1472
    %v1474 = vrot.slane %v1071, %v1473
    %v1476 = vunpack.c.l.s4 1966171168
    %v1477 = vunpack.c.0.s8 %v1476
    %v1478 = vlaneseq
    %v1479 = vshrl.u32 %v1478, 7
    %v1480 = vsub.s32 %v1477, %v1479
    %v1481 = vrot.slane %v1467, %v1480
    %v1482 = vcombine.high %v1474, %v1474
    %v1483 = vcombine.high %v1481, %v1481
    %v1485 = vunpack.c.l.s4 1966171168
    %v1486 = vunpack.c.0.s8 %v1485
    %v1487 = vlaneseq
    %v1488 = vshrl.u32 %v1487, 7
    %v1489 = vsub.s32 %v1486, %v1488
    %v1490 = vrot.slane %v1474, %v1489
    %v1492 = vunpack.c.l.s4 1966171168
    %v1493 = vunpack.c.0.s8 %v1492
    %v1494 = vlaneseq
    %v1495 = vshrl.u32 %v1494, 7
    %v1496 = vsub.s32 %v1493, %v1495
    %v1497 = vrot.slane %v1481, %v1496
    %v1499 = vunpack.c.l.s4 1966171168
    %v1500 = vunpack.c.0.s8 %v1499
    %v1501 = vlaneseq
    %v1502 = vshrl.u32 %v1501, 7
    %v1503 = vsub.s32 %v1500, %v1502
    %v1504 = vrot.slane %v1482, %v1503
    %v1506 = vunpack.c.l.s4 1966171168
    %v1507 = vunpack.c.0.s8 %v1506
    %v1508 = vlaneseq
    %v1509 = vshrl.u32 %v1508, 7
    %v1510 = vsub.s32 %v1507, %v1509
    %v1511 = vrot.slane %v1483, %v1510
    %v1512 = vcombine.high %v1490, %v1490
    %v1513 = vcombine.high %v1497, %v1497
    %v1514 = vcombine.high %v1504, %v1504
    %v1515 = vcombine.high %v1511, %v1511
    %v1516 = vcombine.high %v1074, %v1074
    %v1518 = vunpack.c.l.s4 1966171168
    %v1519 = vunpack.c.0.s8 %v1518
    %v1520 = vlaneseq
    %v1521 = vshrl.u32 %v1520, 7
    %v1522 = vsub.s32 %v1519, %v1521
    %v1523 = vrot.slane %v1074, %v1522
    %v1525 = vunpack.c.l.s4 1966171168
    %v1526 = vunpack.c.0.s8 %v1525
    %v1527 = vlaneseq
    %v1528 = vshrl.u32 %v1527, 7
    %v1529 = vsub.s32 %v1526, %v1528
    %v1530 = vrot.slane %v1516, %v1529
    %v1531 = vcombine.high %v1523, %v1523
    %v1532 = vcombine.high %v1530, %v1530
    %v1534 = vunpack.c.l.s4 1966171168
    %v1535 = vunpack.c.0.s8 %v1534
    %v1536 = vlaneseq
    %v1537 = vshrl.u32 %v1536, 7
    %v1538 = vsub.s32 %v1535, %v1537
    %v1539 = vrot.slane %v1523, %v1538
    %v1541 = vunpack.c.l.s4 1966171168
    %v1542 = vunpack.c.0.s8 %v1541
    %v1543 = vlaneseq
    %v1544 = vshrl.u32 %v1543, 7
    %v1545 = vsub.s32 %v1542, %v1544
    %v1546 = vrot.slane %v1530, %v1545
    %v1548 = vunpack.c.l.s4 1966171168
    %v1549 = vunpack.c.0.s8 %v1548
    %v1550 = vlaneseq
    %v1551 = vshrl.u32 %v1550, 7
    %v1552 = vsub.s32 %v1549, %v1551
    %v1553 = vrot.slane %v1531, %v1552
    %v1555 = vunpack.c.l.s4 1966171168
    %v1556 = vunpack.c.0.s8 %v1555
    %v1557 = vlaneseq
    %v1558 = vshrl.u32 %v1557, 7
    %v1559 = vsub.s32 %v1556, %v1558
    %v1560 = vrot.slane %v1532, %v1559
    %v1561 = vcombine.high %v1539, %v1539
    %v1562 = vcombine.high %v1546, %v1546
    %v1563 = vcombine.high %v1553, %v1553
    %v1564 = vcombine.high %v1560, %v1560
    %v1565 = vcombine.high %v1079, %v1079
    %v1567 = vunpack.c.l.s4 1966171168
    %v1568 = vunpack.c.0.s8 %v1567
    %v1569 = vlaneseq
    %v1570 = vshrl.u32 %v1569, 7
    %v1571 = vsub.s32 %v1568, %v1570
    %v1572 = vrot.slane %v1079, %v1571
    %v1574 = vunpack.c.l.s4 1966171168
    %v1575 = vunpack.c.0.s8 %v1574
    %v1576 = vlaneseq
    %v1577 = vshrl.u32 %v1576, 7
    %v1578 = vsub.s32 %v1575, %v1577
    %v1579 = vrot.slane %v1565, %v1578
    %v1580 = vcombine.high %v1572, %v1572
    %v1581 = vcombine.high %v1579, %v1579
    %v1583 = vunpack.c.l.s4 1966171168
    %v1584 = vunpack.c.0.s8 %v1583
    %v1585 = vlaneseq
    %v1586 = vshrl.u32 %v1585, 7
    %v1587 = vsub.s32 %v1584, %v1586
    %v1588 = vrot.slane %v1572, %v1587
    %v1590 = vunpack.c.l.s4 1966171168
    %v1591 = vunpack.c.0.s8 %v1590
    %v1592 = vlaneseq
    %v1593 = vshrl.u32 %v1592, 7
    %v1594 = vsub.s32 %v1591, %v1593
    %v1595 = vrot.slane %v1579, %v1594
    %v1597 = vunpack.c.l.s4 1966171168
    %v1598 = vunpack.c.0.s8 %v1597
    %v1599 = vlaneseq
    %v1600 = vshrl.u32 %v1599, 7
    %v1601 = vsub.s32 %v1598, %v1600
    %v1602 = vrot.slane %v1580, %v1601
    %v1604 = vunpack.c.l.s4 1966171168
    %v1605 = vunpack.c.0.s8 %v1604
    %v1606 = vlaneseq
    %v1607 = vshrl.u32 %v1606, 7
    %v1608 = vsub.s32 %v1605, %v1607
    %v1609 = vrot.slane %v1581, %v1608
    %v1610 = vcombine.high %v1588, %v1588
    %v1611 = vcombine.high %v1595, %v1595
    %v1612 = vcombine.high %v1602, %v1602
    %v1613 = vcombine.high %v1609, %v1609
    %v1614 = vcombine.high %v1082, %v1082
    %v1616 = vunpack.c.l.s4 1966171168
    %v1617 = vunpack.c.0.s8 %v1616
    %v1618 = vlaneseq
    %v1619 = vshrl.u32 %v1618, 7
    %v1620 = vsub.s32 %v1617, %v1619
    %v1621 = vrot.slane %v1082, %v1620
    %v1623 = vunpack.c.l.s4 1966171168
    %v1624 = vunpack.c.0.s8 %v1623
    %v1625 = vlaneseq
    %v1626 = vshrl.u32 %v1625, 7
    %v1627 = vsub.s32 %v1624, %v1626
    %v1628 = vrot.slane %v1614, %v1627
    %v1629 = vcombine.high %v1621, %v1621
    %v1630 = vcombine.high %v1628, %v1628
    %v1632 = vunpack.c.l.s4 1966171168
    %v1633 = vunpack.c.0.s8 %v1632
    %v1634 = vlaneseq
    %v1635 = vshrl.u32 %v1634, 7
    %v1636 = vsub.s32 %v1633, %v1635
    %v1637 = vrot.slane %v1621, %v1636
    %v1639 = vunpack.c.l.s4 1966171168
    %v1640 = vunpack.c.0.s8 %v1639
    %v1641 = vlaneseq
    %v1642 = vshrl.u32 %v1641, 7
    %v1643 = vsub.s32 %v1640, %v1642
    %v1644 = vrot.slane %v1628, %v1643
    %v1646 = vunpack.c.l.s4 1966171168
    %v1647 = vunpack.c.0.s8 %v1646
    %v1648 = vlaneseq
    %v1649 = vshrl.u32 %v1648, 7
    %v1650 = vsub.s32 %v1647, %v1649
    %v1651 = vrot.slane %v1629, %v1650
    %v1653 = vunpack.c.l.s4 1966171168
    %v1654 = vunpack.c.0.s8 %v1653
    %v1655 = vlaneseq
    %v1656 = vshrl.u32 %v1655, 7
    %v1657 = vsub.s32 %v1654, %v1656
    %v1658 = vrot.slane %v1630, %v1657
    %v1659 = vcombine.high %v1637, %v1637
    %v1660 = vcombine.high %v1644, %v1644
    %v1661 = vcombine.high %v1651, %v1651
    %v1662 = vcombine.high %v1658, %v1658
    %v1663 = vcombine.high %v1087, %v1087
    %v1665 = vunpack.c.l.s4 1966171168
    %v1666 = vunpack.c.0.s8 %v1665
    %v1667 = vlaneseq
    %v1668 = vshrl.u32 %v1667, 7
    %v1669 = vsub.s32 %v1666, %v1668
    %v1670 = vrot.slane %v1087, %v1669
    %v1672 = vunpack.c.l.s4 1966171168
    %v1673 = vunpack.c.0.s8 %v1672
    %v1674 = vlaneseq
    %v1675 = vshrl.u32 %v1674, 7
    %v1676 = vsub.s32 %v1673, %v1675
    %v1677 = vrot.slane %v1663, %v1676
    %v1678 = vcombine.high %v1670, %v1670
    %v1679 = vcombine.high %v1677, %v1677
    %v1681 = vunpack.c.l.s4 1966171168
    %v1682 = vunpack.c.0.s8 %v1681
    %v1683 = vlaneseq
    %v1684 = vshrl.u32 %v1683, 7
    %v1685 = vsub.s32 %v1682, %v1684
    %v1686 = vrot.slane %v1670, %v1685
    %v1688 = vunpack.c.l.s4 1966171168
    %v1689 = vunpack.c.0.s8 %v1688
    %v1690 = vlaneseq
    %v1691 = vshrl.u32 %v1690, 7
    %v1692 = vsub.s32 %v1689, %v1691
    %v1693 = vrot.slane %v1677, %v1692
    %v1695 = vunpack.c.l.s4 1966171168
    %v1696 = vunpack.c.0.s8 %v1695
    %v1697 = vlaneseq
    %v1698 = vshrl.u32 %v1697, 7
    %v1699 = vsub.s32 %v1696, %v1698
    %v1700 = vrot.slane %v1678, %v1699
    %v1702 = vunpack.c.l.s4 1966171168
    %v1703 = vunpack.c.0.s8 %v1702
    %v1704 = vlaneseq
    %v1705 = vshrl.u32 %v1704, 7
    %v1706 = vsub.s32 %v1703, %v1705
    %v1707 = vrot.slane %v1679, %v1706
    %v1708 = vcombine.high %v1686, %v1686
    %v1709 = vcombine.high %v1693, %v1693
    %v1710 = vcombine.high %v1700, %v1700
    %v1711 = vcombine.high %v1707, %v1707
    %v1712 = vcombine.high %v1090, %v1090
    %v1714 = vunpack.c.l.s4 1966171168
    %v1715 = vunpack.c.0.s8 %v1714
    %v1716 = vlaneseq
    %v1717 = vshrl.u32 %v1716, 7
    %v1718 = vsub.s32 %v1715, %v1717
    %v1719 = vrot.slane %v1090, %v1718
    %v1721 = vunpack.c.l.s4 1966171168
    %v1722 = vunpack.c.0.s8 %v1721
    %v1723 = vlaneseq
    %v1724 = vshrl.u32 %v1723, 7
    %v1725 = vsub.s32 %v1722, %v1724
    %v1726 = vrot.slane %v1712, %v1725
    %v1727 = vcombine.high %v1719, %v1719
    %v1728 = vcombine.high %v1726, %v1726
    %v1730 = vunpack.c.l.s4 1966171168
    %v1731 = vunpack.c.0.s8 %v1730
    %v1732 = vlaneseq
    %v1733 = vshrl.u32 %v1732, 7
    %v1734 = vsub.s32 %v1731, %v1733
    %v1735 = vrot.slane %v1719, %v1734
    %v1737 = vunpack.c.l.s4 1966171168
    %v1738 = vunpack.c.0.s8 %v1737
    %v1739 = vlaneseq
    %v1740 = vshrl.u32 %v1739, 7
    %v1741 = vsub.s32 %v1738, %v1740
    %v1742 = vrot.slane %v1726, %v1741
    %v1744 = vunpack.c.l.s4 1966171168
    %v1745 = vunpack.c.0.s8 %v1744
    %v1746 = vlaneseq
    %v1747 = vshrl.u32 %v1746, 7
    %v1748 = vsub.s32 %v1745, %v1747
    %v1749 = vrot.slane %v1727, %v1748
    %v1751 = vunpack.c.l.s4 1966171168
    %v1752 = vunpack.c.0.s8 %v1751
    %v1753 = vlaneseq
    %v1754 = vshrl.u32 %v1753, 7
    %v1755 = vsub.s32 %v1752, %v1754
    %v1756 = vrot.slane %v1728, %v1755
    %v1757 = vcombine.high %v1735, %v1735
    %v1758 = vcombine.high %v1742, %v1742
    %v1759 = vcombine.high %v1749, %v1749
    %v1760 = vcombine.high %v1756, %v1756
    %v1761 = vcombine.high %v1095, %v1095
    %v1763 = vunpack.c.l.s4 1966171168
    %v1764 = vunpack.c.0.s8 %v1763
    %v1765 = vlaneseq
    %v1766 = vshrl.u32 %v1765, 7
    %v1767 = vsub.s32 %v1764, %v1766
    %v1768 = vrot.slane %v1095, %v1767
    %v1770 = vunpack.c.l.s4 1966171168
    %v1771 = vunpack.c.0.s8 %v1770
    %v1772 = vlaneseq
    %v1773 = vshrl.u32 %v1772, 7
    %v1774 = vsub.s32 %v1771, %v1773
    %v1775 = vrot.slane %v1761, %v1774
    %v1776 = vcombine.high %v1768, %v1768
    %v1777 = vcombine.high %v1775, %v1775
    %v1779 = vunpack.c.l.s4 1966171168
    %v1780 = vunpack.c.0.s8 %v1779
    %v1781 = vlaneseq
    %v1782 = vshrl.u32 %v1781, 7
    %v1783 = vsub.s32 %v1780, %v1782
    %v1784 = vrot.slane %v1768, %v1783
    %v1786 = vunpack.c.l.s4 1966171168
    %v1787 = vunpack.c.0.s8 %v1786
    %v1788 = vlaneseq
    %v1789 = vshrl.u32 %v1788, 7
    %v1790 = vsub.s32 %v1787, %v1789
    %v1791 = vrot.slane %v1775, %v1790
    %v1793 = vunpack.c.l.s4 1966171168
    %v1794 = vunpack.c.0.s8 %v1793
    %v1795 = vlaneseq
    %v1796 = vshrl.u32 %v1795, 7
    %v1797 = vsub.s32 %v1794, %v1796
    %v1798 = vrot.slane %v1776, %v1797
    %v1800 = vunpack.c.l.s4 1966171168
    %v1801 = vunpack.c.0.s8 %v1800
    %v1802 = vlaneseq
    %v1803 = vshrl.u32 %v1802, 7
    %v1804 = vsub.s32 %v1801, %v1803
    %v1805 = vrot.slane %v1777, %v1804
    %v1806 = vcombine.high %v1784, %v1784
    %v1807 = vcombine.high %v1791, %v1791
    %v1808 = vcombine.high %v1798, %v1798
    %v1809 = vcombine.high %v1805, %v1805
    %v1810 = vcombine.high %v1098, %v1098
    %v1812 = vunpack.c.l.s4 1966171168
    %v1813 = vunpack.c.0.s8 %v1812
    %v1814 = vlaneseq
    %v1815 = vshrl.u32 %v1814, 7
    %v1816 = vsub.s32 %v1813, %v1815
    %v1817 = vrot.slane %v1098, %v1816
    %v1819 = vunpack.c.l.s4 1966171168
    %v1820 = vunpack.c.0.s8 %v1819
    %v1821 = vlaneseq
    %v1822 = vshrl.u32 %v1821, 7
    %v1823 = vsub.s32 %v1820, %v1822
    %v1824 = vrot.slane %v1810, %v1823
    %v1825 = vcombine.high %v1817, %v1817
    %v1826 = vcombine.high %v1824, %v1824
    %v1828 = vunpack.c.l.s4 1966171168
    %v1829 = vunpack.c.0.s8 %v1828
    %v1830 = vlaneseq
    %v1831 = vshrl.u32 %v1830, 7
    %v1832 = vsub.s32 %v1829, %v1831
    %v1833 = vrot.slane %v1817, %v1832
    %v1835 = vunpack.c.l.s4 1966171168
    %v1836 = vunpack.c.0.s8 %v1835
    %v1837 = vlaneseq
    %v1838 = vshrl.u32 %v1837, 7
    %v1839 = vsub.s32 %v1836, %v1838
    %v1840 = vrot.slane %v1824, %v1839
    %v1842 = vunpack.c.l.s4 1966171168
    %v1843 = vunpack.c.0.s8 %v1842
    %v1844 = vlaneseq
    %v1845 = vshrl.u32 %v1844, 7
    %v1846 = vsub.s32 %v1843, %v1845
    %v1847 = vrot.slane %v1825, %v1846
    %v1849 = vunpack.c.l.s4 1966171168
    %v1850 = vunpack.c.0.s8 %v1849
    %v1851 = vlaneseq
    %v1852 = vshrl.u32 %v1851, 7
    %v1853 = vsub.s32 %v1850, %v1852
    %v1854 = vrot.slane %v1826, %v1853
    %v1855 = vcombine.high %v1833, %v1833
    %v1856 = vcombine.high %v1840, %v1840
    %v1857 = vcombine.high %v1847, %v1847
    %v1858 = vcombine.high %v1854, %v1854
    %v1859 = vcombine.high %v1103, %v1103
    %v1861 = vunpack.c.l.s4 1966171168
    %v1862 = vunpack.c.0.s8 %v1861
    %v1863 = vlaneseq
    %v1864 = vshrl.u32 %v1863, 7
    %v1865 = vsub.s32 %v1862, %v1864
    %v1866 = vrot.slane %v1103, %v1865
    %v1868 = vunpack.c.l.s4 1966171168
    %v1869 = vunpack.c.0.s8 %v1868
    %v1870 = vlaneseq
    %v1871 = vshrl.u32 %v1870, 7
    %v1872 = vsub.s32 %v1869, %v1871
    %v1873 = vrot.slane %v1859, %v1872
    %v1874 = vcombine.high %v1866, %v1866
    %v1875 = vcombine.high %v1873, %v1873
    %v1877 = vunpack.c.l.s4 1966171168
    %v1878 = vunpack.c.0.s8 %v1877
    %v1879 = vlaneseq
    %v1880 = vshrl.u32 %v1879, 7
    %v1881 = vsub.s32 %v1878, %v1880
    %v1882 = vrot.slane %v1866, %v1881
    %v1884 = vunpack.c.l.s4 1966171168
    %v1885 = vunpack.c.0.s8 %v1884
    %v1886 = vlaneseq
    %v1887 = vshrl.u32 %v1886, 7
    %v1888 = vsub.s32 %v1885, %v1887
    %v1889 = vrot.slane %v1873, %v1888
    %v1891 = vunpack.c.l.s4 1966171168
    %v1892 = vunpack.c.0.s8 %v1891
    %v1893 = vlaneseq
    %v1894 = vshrl.u32 %v1893, 7
    %v1895 = vsub.s32 %v1892, %v1894
    %v1896 = vrot.slane %v1874, %v1895
    %v1898 = vunpack.c.l.s4 1966171168
    %v1899 = vunpack.c.0.s8 %v1898
    %v1900 = vlaneseq
    %v1901 = vshrl.u32 %v1900, 7
    %v1902 = vsub.s32 %v1899, %v1901
    %v1903 = vrot.slane %v1875, %v1902
    %v1904 = vcombine.high %v1882, %v1882
    %v1905 = vcombine.high %v1889, %v1889
    %v1906 = vcombine.high %v1896, %v1896
    %v1907 = vcombine.high %v1903, %v1903
    %v1908 = vcombine.high %v1106, %v1106
    %v1910 = vunpack.c.l.s4 1966171168
    %v1911 = vunpack.c.0.s8 %v1910
    %v1912 = vlaneseq
    %v1913 = vshrl.u32 %v1912, 7
    %v1914 = vsub.s32 %v1911, %v1913
    %v1915 = vrot.slane %v1106, %v1914
    %v1917 = vunpack.c.l.s4 1966171168
    %v1918 = vunpack.c.0.s8 %v1917
    %v1919 = vlaneseq
    %v1920 = vshrl.u32 %v1919, 7
    %v1921 = vsub.s32 %v1918, %v1920
    %v1922 = vrot.slane %v1908, %v1921
    %v1923 = vcombine.high %v1915, %v1915
    %v1924 = vcombine.high %v1922, %v1922
    %v1926 = vunpack.c.l.s4 1966171168
    %v1927 = vunpack.c.0.s8 %v1926
    %v1928 = vlaneseq
    %v1929 = vshrl.u32 %v1928, 7
    %v1930 = vsub.s32 %v1927, %v1929
    %v1931 = vrot.slane %v1915, %v1930
    %v1933 = vunpack.c.l.s4 1966171168
    %v1934 = vunpack.c.0.s8 %v1933
    %v1935 = vlaneseq
    %v1936 = vshrl.u32 %v1935, 7
    %v1937 = vsub.s32 %v1934, %v1936
    %v1938 = vrot.slane %v1922, %v1937
    %v1940 = vunpack.c.l.s4 1966171168
    %v1941 = vunpack.c.0.s8 %v1940
    %v1942 = vlaneseq
    %v1943 = vshrl.u32 %v1942, 7
    %v1944 = vsub.s32 %v1941, %v1943
    %v1945 = vrot.slane %v1923, %v1944
    %v1947 = vunpack.c.l.s4 1966171168
    %v1948 = vunpack.c.0.s8 %v1947
    %v1949 = vlaneseq
    %v1950 = vshrl.u32 %v1949, 7
    %v1951 = vsub.s32 %v1948, %v1950
    %v1952 = vrot.slane %v1924, %v1951
    %v1953 = vcombine.high %v1931, %v1931
    %v1954 = vcombine.high %v1938, %v1938
    %v1955 = vcombine.high %v1945, %v1945
    %v1956 = vcombine.high %v1952, %v1952
    %v1957 = vcombine.high %v1111, %v1111
    %v1959 = vunpack.c.l.s4 1966171168
    %v1960 = vunpack.c.0.s8 %v1959
    %v1961 = vlaneseq
    %v1962 = vshrl.u32 %v1961, 7
    %v1963 = vsub.s32 %v1960, %v1962
    %v1964 = vrot.slane %v1111, %v1963
    %v1966 = vunpack.c.l.s4 1966171168
    %v1967 = vunpack.c.0.s8 %v1966
    %v1968 = vlaneseq
    %v1969 = vshrl.u32 %v1968, 7
    %v1970 = vsub.s32 %v1967, %v1969
    %v1971 = vrot.slane %v1957, %v1970
    %v1972 = vcombine.high %v1964, %v1964
    %v1973 = vcombine.high %v1971, %v1971
    %v1975 = vunpack.c.l.s4 1966171168
    %v1976 = vunpack.c.0.s8 %v1975
    %v1977 = vlaneseq
    %v1978 = vshrl.u32 %v1977, 7
    %v1979 = vsub.s32 %v1976, %v1978
    %v1980 = vrot.slane %v1964, %v1979
    %v1982 = vunpack.c.l.s4 1966171168
    %v1983 = vunpack.c.0.s8 %v1982
    %v1984 = vlaneseq
    %v1985 = vshrl.u32 %v1984, 7
    %v1986 = vsub.s32 %v1983, %v1985
    %v1987 = vrot.slane %v1971, %v1986
    %v1989 = vunpack.c.l.s4 1966171168
    %v1990 = vunpack.c.0.s8 %v1989
    %v1991 = vlaneseq
    %v1992 = vshrl.u32 %v1991, 7
    %v1993 = vsub.s32 %v1990, %v1992
    %v1994 = vrot.slane %v1972, %v1993
    %v1996 = vunpack.c.l.s4 1966171168
    %v1997 = vunpack.c.0.s8 %v1996
    %v1998 = vlaneseq
    %v1999 = vshrl.u32 %v1998, 7
    %v2000 = vsub.s32 %v1997, %v1999
    %v2001 = vrot.slane %v1973, %v2000
    %v2002 = vcombine.high %v1980, %v1980
    %v2003 = vcombine.high %v1987, %v1987
    %v2004 = vcombine.high %v1994, %v1994
    %v2005 = vcombine.high %v2001, %v2001
    %v2006 = vcombine.high %v1114, %v1114
    %v2008 = vunpack.c.l.s4 1966171168
    %v2009 = vunpack.c.0.s8 %v2008
    %v2010 = vlaneseq
    %v2011 = vshrl.u32 %v2010, 7
    %v2012 = vsub.s32 %v2009, %v2011
    %v2013 = vrot.slane %v1114, %v2012
    %v2015 = vunpack.c.l.s4 1966171168
    %v2016 = vunpack.c.0.s8 %v2015
    %v2017 = vlaneseq
    %v2018 = vshrl.u32 %v2017, 7
    %v2019 = vsub.s32 %v2016, %v2018
    %v2020 = vrot.slane %v2006, %v2019
    %v2021 = vcombine.high %v2013, %v2013
    %v2022 = vcombine.high %v2020, %v2020
    %v2024 = vunpack.c.l.s4 1966171168
    %v2025 = vunpack.c.0.s8 %v2024
    %v2026 = vlaneseq
    %v2027 = vshrl.u32 %v2026, 7
    %v2028 = vsub.s32 %v2025, %v2027
    %v2029 = vrot.slane %v2013, %v2028
    %v2031 = vunpack.c.l.s4 1966171168
    %v2032 = vunpack.c.0.s8 %v2031
    %v2033 = vlaneseq
    %v2034 = vshrl.u32 %v2033, 7
    %v2035 = vsub.s32 %v2032, %v2034
    %v2036 = vrot.slane %v2020, %v2035
    %v2038 = vunpack.c.l.s4 1966171168
    %v2039 = vunpack.c.0.s8 %v2038
    %v2040 = vlaneseq
    %v2041 = vshrl.u32 %v2040, 7
    %v2042 = vsub.s32 %v2039, %v2041
    %v2043 = vrot.slane %v2021, %v2042
    %v2045 = vunpack.c.l.s4 1966171168
    %v2046 = vunpack.c.0.s8 %v2045
    %v2047 = vlaneseq
    %v2048 = vshrl.u32 %v2047, 7
    %v2049 = vsub.s32 %v2046, %v2048
    %v2050 = vrot.slane %v2022, %v2049
    %v2051 = vcombine.high %v2029, %v2029
    %v2052 = vcombine.high %v2036, %v2036
    %v2053 = vcombine.high %v2043, %v2043
    %v2054 = vcombine.high %v2050, %v2050
    %v2055 = vcombine.high %v1119, %v1119
    %v2057 = vunpack.c.l.s4 1966171168
    %v2058 = vunpack.c.0.s8 %v2057
    %v2059 = vlaneseq
    %v2060 = vshrl.u32 %v2059, 7
    %v2061 = vsub.s32 %v2058, %v2060
    %v2062 = vrot.slane %v1119, %v2061
    %v2064 = vunpack.c.l.s4 1966171168
    %v2065 = vunpack.c.0.s8 %v2064
    %v2066 = vlaneseq
    %v2067 = vshrl.u32 %v2066, 7
    %v2068 = vsub.s32 %v2065, %v2067
    %v2069 = vrot.slane %v2055, %v2068
    %v2070 = vcombine.high %v2062, %v2062
    %v2071 = vcombine.high %v2069, %v2069
    %v2073 = vunpack.c.l.s4 1966171168
    %v2074 = vunpack.c.0.s8 %v2073
    %v2075 = vlaneseq
    %v2076 = vshrl.u32 %v2075, 7
    %v2077 = vsub.s32 %v2074, %v2076
    %v2078 = vrot.slane %v2062, %v2077
    %v2080 = vunpack.c.l.s4 1966171168
    %v2081 = vunpack.c.0.s8 %v2080
    %v2082 = vlaneseq
    %v2083 = vshrl.u32 %v2082, 7
    %v2084 = vsub.s32 %v2081, %v2083
    %v2085 = vrot.slane %v2069, %v2084
    %v2087 = vunpack.c.l.s4 1966171168
    %v2088 = vunpack.c.0.s8 %v2087
    %v2089 = vlaneseq
    %v2090 = vshrl.u32 %v2089, 7
    %v2091 = vsub.s32 %v2088, %v2090
    %v2092 = vrot.slane %v2070, %v2091
    %v2094 = vunpack.c.l.s4 1966171168
    %v2095 = vunpack.c.0.s8 %v2094
    %v2096 = vlaneseq
    %v2097 = vshrl.u32 %v2096, 7
    %v2098 = vsub.s32 %v2095, %v2097
    %v2099 = vrot.slane %v2071, %v2098
    %v2100 = vcombine.high %v2078, %v2078
    %v2101 = vcombine.high %v2085, %v2085
    %v2102 = vcombine.high %v2092, %v2092
    %v2103 = vcombine.high %v2099, %v2099
    %v2104 = vcombine.high %v1122, %v1122
    %v2106 = vunpack.c.l.s4 1966171168
    %v2107 = vunpack.c.0.s8 %v2106
    %v2108 = vlaneseq
    %v2109 = vshrl.u32 %v2108, 7
    %v2110 = vsub.s32 %v2107, %v2109
    %v2111 = vrot.slane %v1122, %v2110
    %v2113 = vunpack.c.l.s4 1966171168
    %v2114 = vunpack.c.0.s8 %v2113
    %v2115 = vlaneseq
    %v2116 = vshrl.u32 %v2115, 7
    %v2117 = vsub.s32 %v2114, %v2116
    %v2118 = vrot.slane %v2104, %v2117
    %v2119 = vcombine.high %v2111, %v2111
    %v2120 = vcombine.high %v2118, %v2118
    %v2122 = vunpack.c.l.s4 1966171168
    %v2123 = vunpack.c.0.s8 %v2122
    %v2124 = vlaneseq
    %v2125 = vshrl.u32 %v2124, 7
    %v2126 = vsub.s32 %v2123, %v2125
    %v2127 = vrot.slane %v2111, %v2126
    %v2129 = vunpack.c.l.s4 1966171168
    %v2130 = vunpack.c.0.s8 %v2129
    %v2131 = vlaneseq
    %v2132 = vshrl.u32 %v2131, 7
    %v2133 = vsub.s32 %v2130, %v2132
    %v2134 = vrot.slane %v2118, %v2133
    %v2136 = vunpack.c.l.s4 1966171168
    %v2137 = vunpack.c.0.s8 %v2136
    %v2138 = vlaneseq
    %v2139 = vshrl.u32 %v2138, 7
    %v2140 = vsub.s32 %v2137, %v2139
    %v2141 = vrot.slane %v2119, %v2140
    %v2143 = vunpack.c.l.s4 1966171168
    %v2144 = vunpack.c.0.s8 %v2143
    %v2145 = vlaneseq
    %v2146 = vshrl.u32 %v2145, 7
    %v2147 = vsub.s32 %v2144, %v2146
    %v2148 = vrot.slane %v2120, %v2147
    %v2149 = vcombine.high %v2127, %v2127
    %v2150 = vcombine.high %v2134, %v2134
    %v2151 = vcombine.high %v2141, %v2141
    %v2152 = vcombine.high %v2148, %v2148
    %v2153 = vcombine.high %v1127, %v1127
    %v2155 = vunpack.c.l.s4 1966171168
    %v2156 = vunpack.c.0.s8 %v2155
    %v2157 = vlaneseq
    %v2158 = vshrl.u32 %v2157, 7
    %v2159 = vsub.s32 %v2156, %v2158
    %v2160 = vrot.slane %v1127, %v2159
    %v2162 = vunpack.c.l.s4 1966171168
    %v2163 = vunpack.c.0.s8 %v2162
    %v2164 = vlaneseq
    %v2165 = vshrl.u32 %v2164, 7
    %v2166 = vsub.s32 %v2163, %v2165
    %v2167 = vrot.slane %v2153, %v2166
    %v2168 = vcombine.high %v2160, %v2160
    %v2169 = vcombine.high %v2167, %v2167
    %v2171 = vunpack.c.l.s4 1966171168
    %v2172 = vunpack.c.0.s8 %v2171
    %v2173 = vlaneseq
    %v2174 = vshrl.u32 %v2173, 7
    %v2175 = vsub.s32 %v2172, %v2174
    %v2176 = vrot.slane %v2160, %v2175
    %v2178 = vunpack.c.l.s4 1966171168
    %v2179 = vunpack.c.0.s8 %v2178
    %v2180 = vlaneseq
    %v2181 = vshrl.u32 %v2180, 7
    %v2182 = vsub.s32 %v2179, %v2181
    %v2183 = vrot.slane %v2167, %v2182
    %v2185 = vunpack.c.l.s4 1966171168
    %v2186 = vunpack.c.0.s8 %v2185
    %v2187 = vlaneseq
    %v2188 = vshrl.u32 %v2187, 7
    %v2189 = vsub.s32 %v2186, %v2188
    %v2190 = vrot.slane %v2168, %v2189
    %v2192 = vunpack.c.l.s4 1966171168
    %v2193 = vunpack.c.0.s8 %v2192
    %v2194 = vlaneseq
    %v2195 = vshrl.u32 %v2194, 7
    %v2196 = vsub.s32 %v2193, %v2195
    %v2197 = vrot.slane %v2169, %v2196
    %v2198 = vcombine.high %v2176, %v2176
    %v2199 = vcombine.high %v2183, %v2183
    %v2200 = vcombine.high %v2190, %v2190
    %v2201 = vcombine.high %v2197, %v2197
    %v2202 = vcombine.high %v1130, %v1130
    %v2204 = vunpack.c.l.s4 1966171168
    %v2205 = vunpack.c.0.s8 %v2204
    %v2206 = vlaneseq
    %v2207 = vshrl.u32 %v2206, 7
    %v2208 = vsub.s32 %v2205, %v2207
    %v2209 = vrot.slane %v1130, %v2208
    %v2211 = vunpack.c.l.s4 1966171168
    %v2212 = vunpack.c.0.s8 %v2211
    %v2213 = vlaneseq
    %v2214 = vshrl.u32 %v2213, 7
    %v2215 = vsub.s32 %v2212, %v2214
    %v2216 = vrot.slane %v2202, %v2215
    %v2217 = vcombine.high %v2209, %v2209
    %v2218 = vcombine.high %v2216, %v2216
    %v2220 = vunpack.c.l.s4 1966171168
    %v2221 = vunpack.c.0.s8 %v2220
    %v2222 = vlaneseq
    %v2223 = vshrl.u32 %v2222, 7
    %v2224 = vsub.s32 %v2221, %v2223
    %v2225 = vrot.slane %v2209, %v2224
    %v2227 = vunpack.c.l.s4 1966171168
    %v2228 = vunpack.c.0.s8 %v2227
    %v2229 = vlaneseq
    %v2230 = vshrl.u32 %v2229, 7
    %v2231 = vsub.s32 %v2228, %v2230
    %v2232 = vrot.slane %v2216, %v2231
    %v2234 = vunpack.c.l.s4 1966171168
    %v2235 = vunpack.c.0.s8 %v2234
    %v2236 = vlaneseq
    %v2237 = vshrl.u32 %v2236, 7
    %v2238 = vsub.s32 %v2235, %v2237
    %v2239 = vrot.slane %v2217, %v2238
    %v2241 = vunpack.c.l.s4 1966171168
    %v2242 = vunpack.c.0.s8 %v2241
    %v2243 = vlaneseq
    %v2244 = vshrl.u32 %v2243, 7
    %v2245 = vsub.s32 %v2242, %v2244
    %v2246 = vrot.slane %v2218, %v2245
    %v2247 = vcombine.high %v2225, %v2225
    %v2248 = vcombine.high %v2232, %v2232
    %v2249 = vcombine.high %v2239, %v2239
    %v2250 = vcombine.high %v2246, %v2246
    %v2251 = vcombine.high %v1135, %v1135
    %v2253 = vunpack.c.l.s4 1966171168
    %v2254 = vunpack.c.0.s8 %v2253
    %v2255 = vlaneseq
    %v2256 = vshrl.u32 %v2255, 7
    %v2257 = vsub.s32 %v2254, %v2256
    %v2258 = vrot.slane %v1135, %v2257
    %v2260 = vunpack.c.l.s4 1966171168
    %v2261 = vunpack.c.0.s8 %v2260
    %v2262 = vlaneseq
    %v2263 = vshrl.u32 %v2262, 7
    %v2264 = vsub.s32 %v2261, %v2263
    %v2265 = vrot.slane %v2251, %v2264
    %v2266 = vcombine.high %v2258, %v2258
    %v2267 = vcombine.high %v2265, %v2265
    %v2269 = vunpack.c.l.s4 1966171168
    %v2270 = vunpack.c.0.s8 %v2269
    %v2271 = vlaneseq
    %v2272 = vshrl.u32 %v2271, 7
    %v2273 = vsub.s32 %v2270, %v2272
    %v2274 = vrot.slane %v2258, %v2273
    %v2276 = vunpack.c.l.s4 1966171168
    %v2277 = vunpack.c.0.s8 %v2276
    %v2278 = vlaneseq
    %v2279 = vshrl.u32 %v2278, 7
    %v2280 = vsub.s32 %v2277, %v2279
    %v2281 = vrot.slane %v2265, %v2280
    %v2283 = vunpack.c.l.s4 1966171168
    %v2284 = vunpack.c.0.s8 %v2283
    %v2285 = vlaneseq
    %v2286 = vshrl.u32 %v2285, 7
    %v2287 = vsub.s32 %v2284, %v2286
    %v2288 = vrot.slane %v2266, %v2287
    %v2290 = vunpack.c.l.s4 1966171168
    %v2291 = vunpack.c.0.s8 %v2290
    %v2292 = vlaneseq
    %v2293 = vshrl.u32 %v2292, 7
    %v2294 = vsub.s32 %v2291, %v2293
    %v2295 = vrot.slane %v2267, %v2294
    %v2296 = vcombine.high %v2274, %v2274
    %v2297 = vcombine.high %v2281, %v2281
    %v2298 = vcombine.high %v2288, %v2288
    %v2299 = vcombine.high %v2295, %v2295
    %v2300 = vcombine.high %v1138, %v1138
    %v2302 = vunpack.c.l.s4 1966171168
    %v2303 = vunpack.c.0.s8 %v2302
    %v2304 = vlaneseq
    %v2305 = vshrl.u32 %v2304, 7
    %v2306 = vsub.s32 %v2303, %v2305
    %v2307 = vrot.slane %v1138, %v2306
    %v2309 = vunpack.c.l.s4 1966171168
    %v2310 = vunpack.c.0.s8 %v2309
    %v2311 = vlaneseq
    %v2312 = vshrl.u32 %v2311, 7
    %v2313 = vsub.s32 %v2310, %v2312
    %v2314 = vrot.slane %v2300, %v2313
    %v2315 = vcombine.high %v2307, %v2307
    %v2316 = vcombine.high %v2314, %v2314
    %v2318 = vunpack.c.l.s4 1966171168
    %v2319 = vunpack.c.0.s8 %v2318
    %v2320 = vlaneseq
    %v2321 = vshrl.u32 %v2320, 7
    %v2322 = vsub.s32 %v2319, %v2321
    %v2323 = vrot.slane %v2307, %v2322
    %v2325 = vunpack.c.l.s4 1966171168
    %v2326 = vunpack.c.0.s8 %v2325
    %v2327 = vlaneseq
    %v2328 = vshrl.u32 %v2327, 7
    %v2329 = vsub.s32 %v2326, %v2328
    %v2330 = vrot.slane %v2314, %v2329
    %v2332 = vunpack.c.l.s4 1966171168
    %v2333 = vunpack.c.0.s8 %v2332
    %v2334 = vlaneseq
    %v2335 = vshrl.u32 %v2334, 7
    %v2336 = vsub.s32 %v2333, %v2335
    %v2337 = vrot.slane %v2315, %v2336
    %v2339 = vunpack.c.l.s4 1966171168
    %v2340 = vunpack.c.0.s8 %v2339
    %v2341 = vlaneseq
    %v2342 = vshrl.u32 %v2341, 7
    %v2343 = vsub.s32 %v2340, %v2342
    %v2344 = vrot.slane %v2316, %v2343
    %v2345 = vcombine.high %v2323, %v2323
    %v2346 = vcombine.high %v2330, %v2330
    %v2347 = vcombine.high %v2337, %v2337
    %v2348 = vcombine.high %v2344, %v2344
    %v2349 = vcombine.high %v1143, %v1143
    %v2351 = vunpack.c.l.s4 1966171168
    %v2352 = vunpack.c.0.s8 %v2351
    %v2353 = vlaneseq
    %v2354 = vshrl.u32 %v2353, 7
    %v2355 = vsub.s32 %v2352, %v2354
    %v2356 = vrot.slane %v1143, %v2355
    %v2358 = vunpack.c.l.s4 1966171168
    %v2359 = vunpack.c.0.s8 %v2358
    %v2360 = vlaneseq
    %v2361 = vshrl.u32 %v2360, 7
    %v2362 = vsub.s32 %v2359, %v2361
    %v2363 = vrot.slane %v2349, %v2362
    %v2364 = vcombine.high %v2356, %v2356
    %v2365 = vcombine.high %v2363, %v2363
    %v2367 = vunpack.c.l.s4 1966171168
    %v2368 = vunpack.c.0.s8 %v2367
    %v2369 = vlaneseq
    %v2370 = vshrl.u32 %v2369, 7
    %v2371 = vsub.s32 %v2368, %v2370
    %v2372 = vrot.slane %v2356, %v2371
    %v2374 = vunpack.c.l.s4 1966171168
    %v2375 = vunpack.c.0.s8 %v2374
    %v2376 = vlaneseq
    %v2377 = vshrl.u32 %v2376, 7
    %v2378 = vsub.s32 %v2375, %v2377
    %v2379 = vrot.slane %v2363, %v2378
    %v2381 = vunpack.c.l.s4 1966171168
    %v2382 = vunpack.c.0.s8 %v2381
    %v2383 = vlaneseq
    %v2384 = vshrl.u32 %v2383, 7
    %v2385 = vsub.s32 %v2382, %v2384
    %v2386 = vrot.slane %v2364, %v2385
    %v2388 = vunpack.c.l.s4 1966171168
    %v2389 = vunpack.c.0.s8 %v2388
    %v2390 = vlaneseq
    %v2391 = vshrl.u32 %v2390, 7
    %v2392 = vsub.s32 %v2389, %v2391
    %v2393 = vrot.slane %v2365, %v2392
    %v2394 = vcombine.high %v2372, %v2372
    %v2395 = vcombine.high %v2379, %v2379
    %v2396 = vcombine.high %v2386, %v2386
    %v2397 = vcombine.high %v2393, %v2393
    %v2398 = vcombine.low %v1196, %v1210
    %v2399 = vcombine.low %v1218, %v1220
    %v2401 = vunpack.c.l.s4 1966171168
    %v2402 = vunpack.c.0.s8 %v2401
    %v2403 = vlaneseq
    %v2404 = vshrl.u32 %v2403, 7
    %v2405 = vsub.s32 %v2402, %v2404
    %v2406 = vrot.slane %v2398, %v2405
    %v2408 = vunpack.c.l.s4 1966171168
    %v2409 = vunpack.c.0.s8 %v2408
    %v2410 = vlaneseq
    %v2411 = vshrl.u32 %v2410, 7
    %v2412 = vsub.s32 %v2409, %v2411
    %v2413 = vrot.slane %v2399, %v2412
    %v2415 = vunpack.c.l.s4 1966171168
    %v2416 = vunpack.c.0.s8 %v2415
    %v2417 = vlaneseq
    %v2418 = vshrl.u32 %v2417, 7
    %v2419 = vsub.s32 %v2416, %v2418
    %v2420 = vrot.slane %v1203, %v2419
    %v2421 = vcombine.low %v2406, %v2413
    %v2423 = vunpack.c.l.s4 1966171168
    %v2424 = vunpack.c.0.s8 %v2423
    %v2425 = vlaneseq
    %v2426 = vshrl.u32 %v2425, 7
    %v2427 = vsub.s32 %v2424, %v2426
    %v2428 = vrot.slane %v2421, %v2427
    %v2430 = vunpack.c.l.s4 1966171168
    %v2431 = vunpack.c.0.s8 %v2430
    %v2432 = vlaneseq
    %v2433 = vshrl.u32 %v2432, 7
    %v2434 = vsub.s32 %v2431, %v2433
    %v2435 = vrot.slane %v2420, %v2434
    %v2436 = vcombine.low %v2428, %v2435
    %v2437 = vcombine.low %v1217, %v1219
    %v2438 = vcombine.low %v1221, %v1245
    %v2440 = vunpack.c.l.s4 1966171168
    %v2441 = vunpack.c.0.s8 %v2440
    %v2442 = vlaneseq
    %v2443 = vshrl.u32 %v2442, 7
    %v2444 = vsub.s32 %v2441, %v2443
    %v2445 = vrot.slane %v2437, %v2444
    %v2447 = vunpack.c.l.s4 1966171168
    %v2448 = vunpack.c.0.s8 %v2447
    %v2449 = vlaneseq
    %v2450 = vshrl.u32 %v2449, 7
    %v2451 = vsub.s32 %v2448, %v2450
    %v2452 = vrot.slane %v2438, %v2451
    %v2454 = vunpack.c.l.s4 1966171168
    %v2455 = vunpack.c.0.s8 %v2454
    %v2456 = vlaneseq
    %v2457 = vshrl.u32 %v2456, 7
    %v2458 = vsub.s32 %v2455, %v2457
    %v2459 = vrot.slane %v1259, %v2458
    %v2460 = vcombine.low %v2445, %v2452
    %v2462 = vunpack.c.l.s4 1966171168
    %v2463 = vunpack.c.0.s8 %v2462
    %v2464 = vlaneseq
    %v2465 = vshrl.u32 %v2464, 7
    %v2466 = vsub.s32 %v2463, %v2465
    %v2467 = vrot.slane %v2460, %v2466
    %v2469 = vunpack.c.l.s4 1966171168
    %v2470 = vunpack.c.0.s8 %v2469
    %v2471 = vlaneseq
    %v2472 = vshrl.u32 %v2471, 7
    %v2473 = vsub.s32 %v2470, %v2472
    %v2474 = vrot.slane %v2459, %v2473
    %v2475 = vcombine.low %v2467, %v2474
    %v2476 = vcombine.low %v1267, %v1269
    %v2477 = vcombine.low %v1252, %v1266
    %v2479 = vunpack.c.l.s4 1966171168
    %v2480 = vunpack.c.0.s8 %v2479
    %v2481 = vlaneseq
    %v2482 = vshrl.u32 %v2481, 7
    %v2483 = vsub.s32 %v2480, %v2482
    %v2484 = vrot.slane %v2476, %v2483
    %v2486 = vunpack.c.l.s4 1966171168
    %v2487 = vunpack.c.0.s8 %v2486
    %v2488 = vlaneseq
    %v2489 = vshrl.u32 %v2488, 7
    %v2490 = vsub.s32 %v2487, %v2489
    %v2491 = vrot.slane %v2477, %v2490
    %v2493 = vunpack.c.l.s4 1966171168
    %v2494 = vunpack.c.0.s8 %v2493
    %v2495 = vlaneseq
    %v2496 = vshrl.u32 %v2495, 7
    %v2497 = vsub.s32 %v2494, %v2496
    %v2498 = vrot.slane %v1268, %v2497
    %v2499 = vcombine.low %v2484, %v2491
    %v2501 = vunpack.c.l.s4 1966171168
    %v2502 = vunpack.c.0.s8 %v2501
    %v2503 = vlaneseq
    %v2504 = vshrl.u32 %v2503, 7
    %v2505 = vsub.s32 %v2502, %v2504
    %v2506 = vrot.slane %v2499, %v2505
    %v2508 = vunpack.c.l.s4 1966171168
    %v2509 = vunpack.c.0.s8 %v2508
    %v2510 = vlaneseq
    %v2511 = vshrl.u32 %v2510, 7
    %v2512 = vsub.s32 %v2509, %v2511
    %v2513 = vrot.slane %v2498, %v2512
    %v2514 = vcombine.low %v2506, %v2513
    %v2515 = vcombine.low %v1270, %v1294
    %v2516 = vcombine.low %v1308, %v1316
    %v2518 = vunpack.c.l.s4 1966171168
    %v2519 = vunpack.c.0.s8 %v2518
    %v2520 = vlaneseq
    %v2521 = vshrl.u32 %v2520, 7
    %v2522 = vsub.s32 %v2519, %v2521
    %v2523 = vrot.slane %v2515, %v2522
    %v2525 = vunpack.c.l.s4 1966171168
    %v2526 = vunpack.c.0.s8 %v2525
    %v2527 = vlaneseq
    %v2528 = vshrl.u32 %v2527, 7
    %v2529 = vsub.s32 %v2526, %v2528
    %v2530 = vrot.slane %v2516, %v2529
    %v2532 = vunpack.c.l.s4 1966171168
    %v2533 = vunpack.c.0.s8 %v2532
    %v2534 = vlaneseq
    %v2535 = vshrl.u32 %v2534, 7
    %v2536 = vsub.s32 %v2533, %v2535
    %v2537 = vrot.slane %v1318, %v2536
    %v2538 = vcombine.low %v2523, %v2530
    %v2540 = vunpack.c.l.s4 1966171168
    %v2541 = vunpack.c.0.s8 %v2540
    %v2542 = vlaneseq
    %v2543 = vshrl.u32 %v2542, 7
    %v2544 = vsub.s32 %v2541, %v2543
    %v2545 = vrot.slane %v2538, %v2544
    %v2547 = vunpack.c.l.s4 1966171168
    %v2548 = vunpack.c.0.s8 %v2547
    %v2549 = vlaneseq
    %v2550 = vshrl.u32 %v2549, 7
    %v2551 = vsub.s32 %v2548, %v2550
    %v2552 = vrot.slane %v2537, %v2551
    %v2553 = vcombine.low %v2545, %v2552
    %v2554 = vcombine.low %v1301, %v1315
    %v2555 = vcombine.low %v1317, %v1319
    %v2557 = vunpack.c.l.s4 1966171168
    %v2558 = vunpack.c.0.s8 %v2557
    %v2559 = vlaneseq
    %v2560 = vshrl.u32 %v2559, 7
    %v2561 = vsub.s32 %v2558, %v2560
    %v2562 = vrot.slane %v2554, %v2561
    %v2564 = vunpack.c.l.s4 1966171168
    %v2565 = vunpack.c.0.s8 %v2564
    %v2566 = vlaneseq
    %v2567 = vshrl.u32 %v2566, 7
    %v2568 = vsub.s32 %v2565, %v2567
    %v2569 = vrot.slane %v2555, %v2568
    %v2571 = vunpack.c.l.s4 1966171168
    %v2572 = vunpack.c.0.s8 %v2571
    %v2573 = vlaneseq
    %v2574 = vshrl.u32 %v2573, 7
    %v2575 = vsub.s32 %v2572, %v2574
    %v2576 = vrot.slane %v1343, %v2575
    %v2577 = vcombine.low %v2562, %v2569
    %v2579 = vunpack.c.l.s4 1966171168
    %v2580 = vunpack.c.0.s8 %v2579
    %v2581 = vlaneseq
    %v2582 = vshrl.u32 %v2581, 7
    %v2583 = vsub.s32 %v2580, %v2582
    %v2584 = vrot.slane %v2577, %v2583
    %v2586 = vunpack.c.l.s4 1966171168
    %v2587 = vunpack.c.0.s8 %v2586
    %v2588 = vlaneseq
    %v2589 = vshrl.u32 %v2588, 7
    %v2590 = vsub.s32 %v2587, %v2589
    %v2591 = vrot.slane %v2576, %v2590
    %v2592 = vcombine.low %v2584, %v2591
    %v2593 = vcombine.low %v1357, %v1365
    %v2594 = vcombine.low %v1367, %v1350
    %v2596 = vunpack.c.l.s4 1966171168
    %v2597 = vunpack.c.0.s8 %v2596
    %v2598 = vlaneseq
    %v2599 = vshrl.u32 %v2598, 7
    %v2600 = vsub.s32 %v2597, %v2599
    %v2601 = vrot.slane %v2593, %v2600
    %v2603 = vunpack.c.l.s4 1966171168
    %v2604 = vunpack.c.0.s8 %v2603
    %v2605 = vlaneseq
    %v2606 = vshrl.u32 %v2605, 7
    %v2607 = vsub.s32 %v2604, %v2606
    %v2608 = vrot.slane %v2594, %v2607
    %v2610 = vunpack.c.l.s4 1966171168
    %v2611 = vunpack.c.0.s8 %v2610
    %v2612 = vlaneseq
    %v2613 = vshrl.u32 %v2612, 7
    %v2614 = vsub.s32 %v2611, %v2613
    %v2615 = vrot.slane %v1364, %v2614
    %v2616 = vcombine.low %v2601, %v2608
    %v2618 = vunpack.c.l.s4 1966171168
    %v2619 = vunpack.c.0.s8 %v2618
    %v2620 = vlaneseq
    %v2621 = vshrl.u32 %v2620, 7
    %v2622 = vsub.s32 %v2619, %v2621
    %v2623 = vrot.slane %v2616, %v2622
    %v2625 = vunpack.c.l.s4 1966171168
    %v2626 = vunpack.c.0.s8 %v2625
    %v2627 = vlaneseq
    %v2628 = vshrl.u32 %v2627, 7
    %v2629 = vsub.s32 %v2626, %v2628
    %v2630 = vrot.slane %v2615, %v2629
    %v2631 = vcombine.low %v2623, %v2630
    %v2632 = vcombine.low %v1366, %v1368
    %v2633 = vcombine.low %v1392, %v1406
    %v2635 = vunpack.c.l.s4 1966171168
    %v2636 = vunpack.c.0.s8 %v2635
    %v2637 = vlaneseq
    %v2638 = vshrl.u32 %v2637, 7
    %v2639 = vsub.s32 %v2636, %v2638
    %v2640 = vrot.slane %v2632, %v2639
    %v2642 = vunpack.c.l.s4 1966171168
    %v2643 = vunpack.c.0.s8 %v2642
    %v2644 = vlaneseq
    %v2645 = vshrl.u32 %v2644, 7
    %v2646 = vsub.s32 %v2643, %v2645
    %v2647 = vrot.slane %v2633, %v2646
    %v2649 = vunpack.c.l.s4 1966171168
    %v2650 = vunpack.c.0.s8 %v2649
    %v2651 = vlaneseq
    %v2652 = vshrl.u32 %v2651, 7
    %v2653 = vsub.s32 %v2650, %v2652
    %v2654 = vrot.slane %v1414, %v2653
    %v2655 = vcombine.low %v2640, %v2647
    %v2657 = vunpack.c.l.s4 1966171168
    %v2658 = vunpack.c.0.s8 %v2657
    %v2659 = vlaneseq
    %v2660 = vshrl.u32 %v2659, 7
    %v2661 = vsub.s32 %v2658, %v2660
    %v2662 = vrot.slane %v2655, %v2661
    %v2664 = vunpack.c.l.s4 1966171168
    %v2665 = vunpack.c.0.s8 %v2664
    %v2666 = vlaneseq
    %v2667 = vshrl.u32 %v2666, 7
    %v2668 = vsub.s32 %v2665, %v2667
    %v2669 = vrot.slane %v2654, %v2668
    %v2670 = vcombine.low %v2662, %v2669
    %v2671 = vcombine.low %v1416, %v1399
    %v2672 = vcombine.low %v1413, %v1415
    %v2674 = vunpack.c.l.s4 1966171168
    %v2675 = vunpack.c.0.s8 %v2674
    %v2676 = vlaneseq
    %v2677 = vshrl.u32 %v2676, 7
    %v2678 = vsub.s32 %v2675, %v2677
    %v2679 = vrot.slane %v2671, %v2678
    %v2681 = vunpack.c.l.s4 1966171168
    %v2682 = vunpack.c.0.s8 %v2681
    %v2683 = vlaneseq
    %v2684 = vshrl.u32 %v2683, 7
    %v2685 = vsub.s32 %v2682, %v2684
    %v2686 = vrot.slane %v2672, %v2685
    %v2688 = vunpack.c.l.s4 1966171168
    %v2689 = vunpack.c.0.s8 %v2688
    %v2690 = vlaneseq
    %v2691 = vshrl.u32 %v2690, 7
    %v2692 = vsub.s32 %v2689, %v2691
    %v2693 = vrot.slane %v1417, %v2692
    %v2694 = vcombine.low %v2679, %v2686
    %v2696 = vunpack.c.l.s4 1966171168
    %v2697 = vunpack.c.0.s8 %v2696
    %v2698 = vlaneseq
    %v2699 = vshrl.u32 %v2698, 7
    %v2700 = vsub.s32 %v2697, %v2699
    %v2701 = vrot.slane %v2694, %v2700
    %v2703 = vunpack.c.l.s4 1966171168
    %v2704 = vunpack.c.0.s8 %v2703
    %v2705 = vlaneseq
    %v2706 = vshrl.u32 %v2705, 7
    %v2707 = vsub.s32 %v2704, %v2706
    %v2708 = vrot.slane %v2693, %v2707
    %v2709 = vcombine.low %v2701, %v2708
    %v2710 = vcombine.low %v1441, %v1455
    %v2711 = vcombine.low %v1463, %v1465
    %v2713 = vunpack.c.l.s4 1966171168
    %v2714 = vunpack.c.0.s8 %v2713
    %v2715 = vlaneseq
    %v2716 = vshrl.u32 %v2715, 7
    %v2717 = vsub.s32 %v2714, %v2716
    %v2718 = vrot.slane %v2710, %v2717
    %v2720 = vunpack.c.l.s4 1966171168
    %v2721 = vunpack.c.0.s8 %v2720
    %v2722 = vlaneseq
    %v2723 = vshrl.u32 %v2722, 7
    %v2724 = vsub.s32 %v2721, %v2723
    %v2725 = vrot.slane %v2711, %v2724
    %v2727 = vunpack.c.l.s4 1966171168
    %v2728 = vunpack.c.0.s8 %v2727
    %v2729 = vlaneseq
    %v2730 = vshrl.u32 %v2729, 7
    %v2731 = vsub.s32 %v2728, %v2730
    %v2732 = vrot.slane %v1448, %v2731
    %v2733 = vcombine.low %v2718, %v2725
    %v2735 = vunpack.c.l.s4 1966171168
    %v2736 = vunpack.c.0.s8 %v2735
    %v2737 = vlaneseq
    %v2738 = vshrl.u32 %v2737, 7
    %v2739 = vsub.s32 %v2736, %v2738
    %v2740 = vrot.slane %v2733, %v2739
    %v2742 = vunpack.c.l.s4 1966171168
    %v2743 = vunpack.c.0.s8 %v2742
    %v2744 = vlaneseq
    %v2745 = vshrl.u32 %v2744, 7
    %v2746 = vsub.s32 %v2743, %v2745
    %v2747 = vrot.slane %v2732, %v2746
    %v2748 = vcombine.low %v2740, %v2747
    %v2749 = vcombine.low %v1462, %v1464
    %v2750 = vcombine.low %v1466, %v1490
    %v2752 = vunpack.c.l.s4 1966171168
    %v2753 = vunpack.c.0.s8 %v2752
    %v2754 = vlaneseq
    %v2755 = vshrl.u32 %v2754, 7
    %v2756 = vsub.s32 %v2753, %v2755
    %v2757 = vrot.slane %v2749, %v2756
    %v2759 = vunpack.c.l.s4 1966171168
    %v2760 = vunpack.c.0.s8 %v2759
    %v2761 = vlaneseq
    %v2762 = vshrl.u32 %v2761, 7
    %v2763 = vsub.s32 %v2760, %v2762
    %v2764 = vrot.slane %v2750, %v2763
    %v2766 = vunpack.c.l.s4 1966171168
    %v2767 = vunpack.c.0.s8 %v2766
    %v2768 = vlaneseq
    %v2769 = vshrl.u32 %v2768, 7
    %v2770 = vsub.s32 %v2767, %v2769
    %v2771 = vrot.slane %v1504, %v2770
    %v2772 = vcombine.low %v2757, %v2764
    %v2774 = vunpack.c.l.s4 1966171168
    %v2775 = vunpack.c.0.s8 %v2774
    %v2776 = vlaneseq
    %v2777 = vshrl.u32 %v2776, 7
    %v2778 = vsub.s32 %v2775, %v2777
    %v2779 = vrot.slane %v2772, %v2778
    %v2781 = vunpack.c.l.s4 1966171168
    %v2782 = vunpack.c.0.s8 %v2781
    %v2783 = vlaneseq
    %v2784 = vshrl.u32 %v2783, 7
    %v2785 = vsub.s32 %v2782, %v2784
    %v2786 = vrot.slane %v2771, %v2785
    %v2787 = vcombine.low %v2779, %v2786
    %v2788 = vcombine.low %v1512, %v1514
    %v2789 = vcombine.low %v1497, %v1511
    %v2791 = vunpack.c.l.s4 1966171168
    %v2792 = vunpack.c.0.s8 %v2791
    %v2793 = vlaneseq
    %v2794 = vshrl.u32 %v2793, 7
    %v2795 = vsub.s32 %v2792, %v2794
    %v2796 = vrot.slane %v2788, %v2795
    %v2798 = vunpack.c.l.s4 1966171168
    %v2799 = vunpack.c.0.s8 %v2798
    %v2800 = vlaneseq
    %v2801 = vshrl.u32 %v2800, 7
    %v2802 = vsub.s32 %v2799, %v2801
    %v2803 = vrot.slane %v2789, %v2802
    %v2805 = vunpack.c.l.s4 1966171168
    %v2806 = vunpack.c.0.s8 %v2805
    %v2807 = vlaneseq
    %v2808 = vshrl.u32 %v2807, 7
    %v2809 = vsub.s32 %v2806, %v2808
    %v2810 = vrot.slane %v1513, %v2809
    %v2811 = vcombine.low %v2796, %v2803
    %v2813 = vunpack.c.l.s4 1966171168
    %v2814 = vunpack.c.0.s8 %v2813
    %v2815 = vlaneseq
    %v2816 = vshrl.u32 %v2815, 7
    %v2817 = vsub.s32 %v2814, %v2816
    %v2818 = vrot.slane %v2811, %v2817
    %v2820 = vunpack.c.l.s4 1966171168
    %v2821 = vunpack.c.0.s8 %v2820
    %v2822 = vlaneseq
    %v2823 = vshrl.u32 %v2822, 7
    %v2824 = vsub.s32 %v2821, %v2823
    %v2825 = vrot.slane %v2810, %v2824
    %v2826 = vcombine.low %v2818, %v2825
    %v2827 = vcombine.low %v1515, %v1539
    %v2828 = vcombine.low %v1553, %v1561
    %v2830 = vunpack.c.l.s4 1966171168
    %v2831 = vunpack.c.0.s8 %v2830
    %v2832 = vlaneseq
    %v2833 = vshrl.u32 %v2832, 7
    %v2834 = vsub.s32 %v2831, %v2833
    %v2835 = vrot.slane %v2827, %v2834
    %v2837 = vunpack.c.l.s4 1966171168
    %v2838 = vunpack.c.0.s8 %v2837
    %v2839 = vlaneseq
    %v2840 = vshrl.u32 %v2839, 7
    %v2841 = vsub.s32 %v2838, %v2840
    %v2842 = vrot.slane %v2828, %v2841
    %v2844 = vunpack.c.l.s4 1966171168
    %v2845 = vunpack.c.0.s8 %v2844
    %v2846 = vlaneseq
    %v2847 = vshrl.u32 %v2846, 7
    %v2848 = vsub.s32 %v2845, %v2847
    %v2849 = vrot.slane %v1563, %v2848
    %v2850 = vcombine.low %v2835, %v2842
    %v2852 = vunpack.c.l.s4 1966171168
    %v2853 = vunpack.c.0.s8 %v2852
    %v2854 = vlaneseq
    %v2855 = vshrl.u32 %v2854, 7
    %v2856 = vsub.s32 %v2853, %v2855
    %v2857 = vrot.slane %v2850, %v2856
    %v2859 = vunpack.c.l.s4 1966171168
    %v2860 = vunpack.c.0.s8 %v2859
    %v2861 = vlaneseq
    %v2862 = vshrl.u32 %v2861, 7
    %v2863 = vsub.s32 %v2860, %v2862
    %v2864 = vrot.slane %v2849, %v2863
    %v2865 = vcombine.low %v2857, %v2864
    %v2866 = vcombine.low %v1546, %v1560
    %v2867 = vcombine.low %v1562, %v1564
    %v2869 = vunpack.c.l.s4 1966171168
    %v2870 = vunpack.c.0.s8 %v2869
    %v2871 = vlaneseq
    %v2872 = vshrl.u32 %v2871, 7
    %v2873 = vsub.s32 %v2870, %v2872
    %v2874 = vrot.slane %v2866, %v2873
    %v2876 = vunpack.c.l.s4 1966171168
    %v2877 = vunpack.c.0.s8 %v2876
    %v2878 = vlaneseq
    %v2879 = vshrl.u32 %v2878, 7
    %v2880 = vsub.s32 %v2877, %v2879
    %v2881 = vrot.slane %v2867, %v2880
    %v2883 = vunpack.c.l.s4 1966171168
    %v2884 = vunpack.c.0.s8 %v2883
    %v2885 = vlaneseq
    %v2886 = vshrl.u32 %v2885, 7
    %v2887 = vsub.s32 %v2884, %v2886
    %v2888 = vrot.slane %v1588, %v2887
    %v2889 = vcombine.low %v2874, %v2881
    %v2891 = vunpack.c.l.s4 1966171168
    %v2892 = vunpack.c.0.s8 %v2891
    %v2893 = vlaneseq
    %v2894 = vshrl.u32 %v2893, 7
    %v2895 = vsub.s32 %v2892, %v2894
    %v2896 = vrot.slane %v2889, %v2895
    %v2898 = vunpack.c.l.s4 1966171168
    %v2899 = vunpack.c.0.s8 %v2898
    %v2900 = vlaneseq
    %v2901 = vshrl.u32 %v2900, 7
    %v2902 = vsub.s32 %v2899, %v2901
    %v2903 = vrot.slane %v2888, %v2902
    %v2904 = vcombine.low %v2896, %v2903
    %v2905 = vcombine.low %v1602, %v1610
    %v2906 = vcombine.low %v1612, %v1595
    %v2908 = vunpack.c.l.s4 1966171168
    %v2909 = vunpack.c.0.s8 %v2908
    %v2910 = vlaneseq
    %v2911 = vshrl.u32 %v2910, 7
    %v2912 = vsub.s32 %v2909, %v2911
    %v2913 = vrot.slane %v2905, %v2912
    %v2915 = vunpack.c.l.s4 1966171168
    %v2916 = vunpack.c.0.s8 %v2915
    %v2917 = vlaneseq
    %v2918 = vshrl.u32 %v2917, 7
    %v2919 = vsub.s32 %v2916, %v2918
    %v2920 = vrot.slane %v2906, %v2919
    %v2922 = vunpack.c.l.s4 1966171168
    %v2923 = vunpack.c.0.s8 %v2922
    %v2924 = vlaneseq
    %v2925 = vshrl.u32 %v2924, 7
    %v2926 = vsub.s32 %v2923, %v2925
    %v2927 = vrot.slane %v1609, %v2926
    %v2928 = vcombine.low %v2913, %v2920
    %v2930 = vunpack.c.l.s4 1966171168
    %v2931 = vunpack.c.0.s8 %v2930
    %v2932 = vlaneseq
    %v2933 = vshrl.u32 %v2932, 7
    %v2934 = vsub.s32 %v2931, %v2933
    %v2935 = vrot.slane %v2928, %v2934
    %v2937 = vunpack.c.l.s4 1966171168
    %v2938 = vunpack.c.0.s8 %v2937
    %v2939 = vlaneseq
    %v2940 = vshrl.u32 %v2939, 7
    %v2941 = vsub.s32 %v2938, %v2940
    %v2942 = vrot.slane %v2927, %v2941
    %v2943 = vcombine.low %v2935, %v2942
    %v2944 = vcombine.low %v1611, %v1613
    %v2945 = vcombine.low %v1637, %v1651
    %v2947 = vunpack.c.l.s4 1966171168
    %v2948 = vunpack.c.0.s8 %v2947
    %v2949 = vlaneseq
    %v2950 = vshrl.u32 %v2949, 7
    %v2951 = vsub.s32 %v2948, %v2950
    %v2952 = vrot.slane %v2944, %v2951
    %v2954 = vunpack.c.l.s4 1966171168
    %v2955 = vunpack.c.0.s8 %v2954
    %v2956 = vlaneseq
    %v2957 = vshrl.u32 %v2956, 7
    %v2958 = vsub.s32 %v2955, %v2957
    %v2959 = vrot.slane %v2945, %v2958
    %v2961 = vunpack.c.l.s4 1966171168
    %v2962 = vunpack.c.0.s8 %v2961
    %v2963 = vlaneseq
    %v2964 = vshrl.u32 %v2963, 7
    %v2965 = vsub.s32 %v2962, %v2964
    %v2966 = vrot.slane %v1659, %v2965
    %v2967 = vcombine.low %v2952, %v2959
    %v2969 = vunpack.c.l.s4 1966171168
    %v2970 = vunpack.c.0.s8 %v2969
    %v2971 = vlaneseq
    %v2972 = vshrl.u32 %v2971, 7
    %v2973 = vsub.s32 %v2970, %v2972
    %v2974 = vrot.slane %v2967, %v2973
    %v2976 = vunpack.c.l.s4 1966171168
    %v2977 = vunpack.c.0.s8 %v2976
    %v2978 = vlaneseq
    %v2979 = vshrl.u32 %v2978, 7
    %v2980 = vsub.s32 %v2977, %v2979
    %v2981 = vrot.slane %v2966, %v2980
    %v2982 = vcombine.low %v2974, %v2981
    %v2983 = vcombine.low %v1661, %v1644
    %v2984 = vcombine.low %v1658, %v1660
    %v2986 = vunpack.c.l.s4 1966171168
    %v2987 = vunpack.c.0.s8 %v2986
    %v2988 = vlaneseq
    %v2989 = vshrl.u32 %v2988, 7
    %v2990 = vsub.s32 %v2987, %v2989
    %v2991 = vrot.slane %v2983, %v2990
    %v2993 = vunpack.c.l.s4 1966171168
    %v2994 = vunpack.c.0.s8 %v2993
    %v2995 = vlaneseq
    %v2996 = vshrl.u32 %v2995, 7
    %v2997 = vsub.s32 %v2994, %v2996
    %v2998 = vrot.slane %v2984, %v2997
    %v3000 = vunpack.c.l.s4 1966171168
    %v3001 = vunpack.c.0.s8 %v3000
    %v3002 = vlaneseq
    %v3003 = vshrl.u32 %v3002, 7
    %v3004 = vsub.s32 %v3001, %v3003
    %v3005 = vrot.slane %v1662, %v3004
    %v3006 = vcombine.low %v2991, %v2998
    %v3008 = vunpack.c.l.s4 1966171168
    %v3009 = vunpack.c.0.s8 %v3008
    %v3010 = vlaneseq
    %v3011 = vshrl.u32 %v3010, 7
    %v3012 = vsub.s32 %v3009, %v3011
    %v3013 = vrot.slane %v3006, %v3012
    %v3015 = vunpack.c.l.s4 1966171168
    %v3016 = vunpack.c.0.s8 %v3015
    %v3017 = vlaneseq
    %v3018 = vshrl.u32 %v3017, 7
    %v3019 = vsub.s32 %v3016, %v3018
    %v3020 = vrot.slane %v3005, %v3019
    %v3021 = vcombine.low %v3013, %v3020
    %v3022 = vcombine.low %v1686, %v1700
    %v3023 = vcombine.low %v1708, %v1710
    %v3025 = vunpack.c.l.s4 1966171168
    %v3026 = vunpack.c.0.s8 %v3025
    %v3027 = vlaneseq
    %v3028 = vshrl.u32 %v3027, 7
    %v3029 = vsub.s32 %v3026, %v3028
    %v3030 = vrot.slane %v3022, %v3029
    %v3032 = vunpack.c.l.s4 1966171168
    %v3033 = vunpack.c.0.s8 %v3032
    %v3034 = vlaneseq
    %v3035 = vshrl.u32 %v3034, 7
    %v3036 = vsub.s32 %v3033, %v3035
    %v3037 = vrot.slane %v3023, %v3036
    %v3039 = vunpack.c.l.s4 1966171168
    %v3040 = vunpack.c.0.s8 %v3039
    %v3041 = vlaneseq
    %v3042 = vshrl.u32 %v3041, 7
    %v3043 = vsub.s32 %v3040, %v3042
    %v3044 = vrot.slane %v1693, %v3043
    %v3045 = vcombine.low %v3030, %v3037
    %v3047 = vunpack.c.l.s4 1966171168
    %v3048 = vunpack.c.0.s8 %v3047
    %v3049 = vlaneseq
    %v3050 = vshrl.u32 %v3049, 7
    %v3051 = vsub.s32 %v3048, %v3050
    %v3052 = vrot.slane %v3045, %v3051
    %v3054 = vunpack.c.l.s4 1966171168
    %v3055 = vunpack.c.0.s8 %v3054
    %v3056 = vlaneseq
    %v3057 = vshrl.u32 %v3056, 7
    %v3058 = vsub.s32 %v3055, %v3057
    %v3059 = vrot.slane %v3044, %v3058
    %v3060 = vcombine.low %v3052, %v3059
    %v3061 = vcombine.low %v1707, %v1709
    %v3062 = vcombine.low %v1711, %v1735
    %v3064 = vunpack.c.l.s4 1966171168
    %v3065 = vunpack.c.0.s8 %v3064
    %v3066 = vlaneseq
    %v3067 = vshrl.u32 %v3066, 7
    %v3068 = vsub.s32 %v3065, %v3067
    %v3069 = vrot.slane %v3061, %v3068
    %v3071 = vunpack.c.l.s4 1966171168
    %v3072 = vunpack.c.0.s8 %v3071
    %v3073 = vlaneseq
    %v3074 = vshrl.u32 %v3073, 7
    %v3075 = vsub.s32 %v3072, %v3074
    %v3076 = vrot.slane %v3062, %v3075
    %v3078 = vunpack.c.l.s4 1966171168
    %v3079 = vunpack.c.0.s8 %v3078
    %v3080 = vlaneseq
    %v3081 = vshrl.u32 %v3080, 7
    %v3082 = vsub.s32 %v3079, %v3081
    %v3083 = vrot.slane %v1749, %v3082
    %v3084 = vcombine.low %v3069, %v3076
    %v3086 = vunpack.c.l.s4 1966171168
    %v3087 = vunpack.c.0.s8 %v3086
    %v3088 = vlaneseq
    %v3089 = vshrl.u32 %v3088, 7
    %v3090 = vsub.s32 %v3087, %v3089
    %v3091 = vrot.slane %v3084, %v3090
    %v3093 = vunpack.c.l.s4 1966171168
    %v3094 = vunpack.c.0.s8 %v3093
    %v3095 = vlaneseq
    %v3096 = vshrl.u32 %v3095, 7
    %v3097 = vsub.s32 %v3094, %v3096
    %v3098 = vrot.slane %v3083, %v3097
    %v3099 = vcombine.low %v3091, %v3098
    %v3100 = vcombine.low %v1757, %v1759
    %v3101 = vcombine.low %v1742, %v1756
    %v3103 = vunpack.c.l.s4 1966171168
    %v3104 = vunpack.c.0.s8 %v3103
    %v3105 = vlaneseq
    %v3106 = vshrl.u32 %v3105, 7
    %v3107 = vsub.s32 %v3104, %v3106
    %v3108 = vrot.slane %v3100, %v3107
    %v3110 = vunpack.c.l.s4 1966171168
    %v3111 = vunpack.c.0.s8 %v3110
    %v3112 = vlaneseq
    %v3113 = vshrl.u32 %v3112, 7
    %v3114 = vsub.s32 %v3111, %v3113
    %v3115 = vrot.slane %v3101, %v3114
    %v3117 = vunpack.c.l.s4 1966171168
    %v3118 = vunpack.c.0.s8 %v3117
    %v3119 = vlaneseq
    %v3120 = vshrl.u32 %v3119, 7
    %v3121 = vsub.s32 %v3118, %v3120
    %v3122 = vrot.slane %v1758, %v3121
    %v3123 = vcombine.low %v3108, %v3115
    %v3125 = vunpack.c.l.s4 1966171168
    %v3126 = vunpack.c.0.s8 %v3125
    %v3127 = vlaneseq
    %v3128 = vshrl.u32 %v3127, 7
    %v3129 = vsub.s32 %v3126, %v3128
    %v3130 = vrot.slane %v3123, %v3129
    %v3132 = vunpack.c.l.s4 1966171168
    %v3133 = vunpack.c.0.s8 %v3132
    %v3134 = vlaneseq
    %v3135 = vshrl.u32 %v3134, 7
    %v3136 = vsub.s32 %v3133, %v3135
    %v3137 = vrot.slane %v3122, %v3136
    %v3138 = vcombine.low %v3130, %v3137
    %v3139 = vcombine.low %v1760, %v1784
    %v3140 = vcombine.low %v1798, %v1806
    %v3142 = vunpack.c.l.s4 1966171168
    %v3143 = vunpack.c.0.s8 %v3142
    %v3144 = vlaneseq
    %v3145 = vshrl.u32 %v3144, 7
    %v3146 = vsub.s32 %v3143, %v3145
    %v3147 = vrot.slane %v3139, %v3146
    %v3149 = vunpack.c.l.s4 1966171168
    %v3150 = vunpack.c.0.s8 %v3149
    %v3151 = vlaneseq
    %v3152 = vshrl.u32 %v3151, 7
    %v3153 = vsub.s32 %v3150, %v3152
    %v3154 = vrot.slane %v3140, %v3153
    %v3156 = vunpack.c.l.s4 1966171168
    %v3157 = vunpack.c.0.s8 %v3156
    %v3158 = vlaneseq
    %v3159 = vshrl.u32 %v3158, 7
    %v3160 = vsub.s32 %v3157, %v3159
    %v3161 = vrot.slane %v1808, %v3160
    %v3162 = vcombine.low %v3147, %v3154
    %v3164 = vunpack.c.l.s4 1966171168
    %v3165 = vunpack.c.0.s8 %v3164
    %v3166 = vlaneseq
    %v3167 = vshrl.u32 %v3166, 7
    %v3168 = vsub.s32 %v3165, %v3167
    %v3169 = vrot.slane %v3162, %v3168
    %v3171 = vunpack.c.l.s4 1966171168
    %v3172 = vunpack.c.0.s8 %v3171
    %v3173 = vlaneseq
    %v3174 = vshrl.u32 %v3173, 7
    %v3175 = vsub.s32 %v3172, %v3174
    %v3176 = vrot.slane %v3161, %v3175
    %v3177 = vcombine.low %v3169, %v3176
    %v3178 = vcombine.low %v1791, %v1805
    %v3179 = vcombine.low %v1807, %v1809
    %v3181 = vunpack.c.l.s4 1966171168
    %v3182 = vunpack.c.0.s8 %v3181
    %v3183 = vlaneseq
    %v3184 = vshrl.u32 %v3183, 7
    %v3185 = vsub.s32 %v3182, %v3184
    %v3186 = vrot.slane %v3178, %v3185
    %v3188 = vunpack.c.l.s4 1966171168
    %v3189 = vunpack.c.0.s8 %v3188
    %v3190 = vlaneseq
    %v3191 = vshrl.u32 %v3190, 7
    %v3192 = vsub.s32 %v3189, %v3191
    %v3193 = vrot.slane %v3179, %v3192
    %v3195 = vunpack.c.l.s4 1966171168
    %v3196 = vunpack.c.0.s8 %v3195
    %v3197 = vlaneseq
    %v3198 = vshrl.u32 %v3197, 7
    %v3199 = vsub.s32 %v3196, %v3198
    %v3200 = vrot.slane %v1833, %v3199
    %v3201 = vcombine.low %v3186, %v3193
    %v3203 = vunpack.c.l.s4 1966171168
    %v3204 = vunpack.c.0.s8 %v3203
    %v3205 = vlaneseq
    %v3206 = vshrl.u32 %v3205, 7
    %v3207 = vsub.s32 %v3204, %v3206
    %v3208 = vrot.slane %v3201, %v3207
    %v3210 = vunpack.c.l.s4 1966171168
    %v3211 = vunpack.c.0.s8 %v3210
    %v3212 = vlaneseq
    %v3213 = vshrl.u32 %v3212, 7
    %v3214 = vsub.s32 %v3211, %v3213
    %v3215 = vrot.slane %v3200, %v3214
    %v3216 = vcombine.low %v3208, %v3215
    %v3217 = vcombine.low %v1847, %v1855
    %v3218 = vcombine.low %v1857, %v1840
    %v3220 = vunpack.c.l.s4 1966171168
    %v3221 = vunpack.c.0.s8 %v3220
    %v3222 = vlaneseq
    %v3223 = vshrl.u32 %v3222, 7
    %v3224 = vsub.s32 %v3221, %v3223
    %v3225 = vrot.slane %v3217, %v3224
    %v3227 = vunpack.c.l.s4 1966171168
    %v3228 = vunpack.c.0.s8 %v3227
    %v3229 = vlaneseq
    %v3230 = vshrl.u32 %v3229, 7
    %v3231 = vsub.s32 %v3228, %v3230
    %v3232 = vrot.slane %v3218, %v3231
    %v3234 = vunpack.c.l.s4 1966171168
    %v3235 = vunpack.c.0.s8 %v3234
    %v3236 = vlaneseq
    %v3237 = vshrl.u32 %v3236, 7
    %v3238 = vsub.s32 %v3235, %v3237
    %v3239 = vrot.slane %v1854, %v3238
    %v3240 = vcombine.low %v3225, %v3232
    %v3242 = vunpack.c.l.s4 1966171168
    %v3243 = vunpack.c.0.s8 %v3242
    %v3244 = vlaneseq
    %v3245 = vshrl.u32 %v3244, 7
    %v3246 = vsub.s32 %v3243, %v3245
    %v3247 = vrot.slane %v3240, %v3246
    %v3249 = vunpack.c.l.s4 1966171168
    %v3250 = vunpack.c.0.s8 %v3249
    %v3251 = vlaneseq
    %v3252 = vshrl.u32 %v3251, 7
    %v3253 = vsub.s32 %v3250, %v3252
    %v3254 = vrot.slane %v3239, %v3253
    %v3255 = vcombine.low %v3247, %v3254
    %v3256 = vcombine.low %v1856, %v1858
    %v3257 = vcombine.low %v1882, %v1896
    %v3259 = vunpack.c.l.s4 1966171168
    %v3260 = vunpack.c.0.s8 %v3259
    %v3261 = vlaneseq
    %v3262 = vshrl.u32 %v3261, 7
    %v3263 = vsub.s32 %v3260, %v3262
    %v3264 = vrot.slane %v3256, %v3263
    %v3266 = vunpack.c.l.s4 1966171168
    %v3267 = vunpack.c.0.s8 %v3266
    %v3268 = vlaneseq
    %v3269 = vshrl.u32 %v3268, 7
    %v3270 = vsub.s32 %v3267, %v3269
    %v3271 = vrot.slane %v3257, %v3270
    %v3273 = vunpack.c.l.s4 1966171168
    %v3274 = vunpack.c.0.s8 %v3273
    %v3275 = vlaneseq
    %v3276 = vshrl.u32 %v3275, 7
    %v3277 = vsub.s32 %v3274, %v3276
    %v3278 = vrot.slane %v1904, %v3277
    %v3279 = vcombine.low %v3264, %v3271
    %v3281 = vunpack.c.l.s4 1966171168
    %v3282 = vunpack.c.0.s8 %v3281
    %v3283 = vlaneseq
    %v3284 = vshrl.u32 %v3283, 7
    %v3285 = vsub.s32 %v3282, %v3284
    %v3286 = vrot.slane %v3279, %v3285
    %v3288 = vunpack.c.l.s4 1966171168
    %v3289 = vunpack.c.0.s8 %v3288
    %v3290 = vlaneseq
    %v3291 = vshrl.u32 %v3290, 7
    %v3292 = vsub.s32 %v3289, %v3291
    %v3293 = vrot.slane %v3278, %v3292
    %v3294 = vcombine.low %v3286, %v3293
    %v3295 = vcombine.low %v1906, %v1889
    %v3296 = vcombine.low %v1903, %v1905
    %v3298 = vunpack.c.l.s4 1966171168
    %v3299 = vunpack.c.0.s8 %v3298
    %v3300 = vlaneseq
    %v3301 = vshrl.u32 %v3300, 7
    %v3302 = vsub.s32 %v3299, %v3301
    %v3303 = vrot.slane %v3295, %v3302
    %v3305 = vunpack.c.l.s4 1966171168
    %v3306 = vunpack.c.0.s8 %v3305
    %v3307 = vlaneseq
    %v3308 = vshrl.u32 %v3307, 7
    %v3309 = vsub.s32 %v3306, %v3308
    %v3310 = vrot.slane %v3296, %v3309
    %v3312 = vunpack.c.l.s4 1966171168
    %v3313 = vunpack.c.0.s8 %v3312
    %v3314 = vlaneseq
    %v3315 = vshrl.u32 %v3314, 7
    %v3316 = vsub.s32 %v3313, %v3315
    %v3317 = vrot.slane %v1907, %v3316
    %v3318 = vcombine.low %v3303, %v3310
    %v3320 = vunpack.c.l.s4 1966171168
    %v3321 = vunpack.c.0.s8 %v3320
    %v3322 = vlaneseq
    %v3323 = vshrl.u32 %v3322, 7
    %v3324 = vsub.s32 %v3321, %v3323
    %v3325 = vrot.slane %v3318, %v3324
    %v3327 = vunpack.c.l.s4 1966171168
    %v3328 = vunpack.c.0.s8 %v3327
    %v3329 = vlaneseq
    %v3330 = vshrl.u32 %v3329, 7
    %v3331 = vsub.s32 %v3328, %v3330
    %v3332 = vrot.slane %v3317, %v3331
    %v3333 = vcombine.low %v3325, %v3332
    %v3334 = vcombine.low %v1931, %v1945
    %v3335 = vcombine.low %v1953, %v1955
    %v3337 = vunpack.c.l.s4 1966171168
    %v3338 = vunpack.c.0.s8 %v3337
    %v3339 = vlaneseq
    %v3340 = vshrl.u32 %v3339, 7
    %v3341 = vsub.s32 %v3338, %v3340
    %v3342 = vrot.slane %v3334, %v3341
    %v3344 = vunpack.c.l.s4 1966171168
    %v3345 = vunpack.c.0.s8 %v3344
    %v3346 = vlaneseq
    %v3347 = vshrl.u32 %v3346, 7
    %v3348 = vsub.s32 %v3345, %v3347
    %v3349 = vrot.slane %v3335, %v3348
    %v3351 = vunpack.c.l.s4 1966171168
    %v3352 = vunpack.c.0.s8 %v3351
    %v3353 = vlaneseq
    %v3354 = vshrl.u32 %v3353, 7
    %v3355 = vsub.s32 %v3352, %v3354
    %v3356 = vrot.slane %v1938, %v3355
    %v3357 = vcombine.low %v3342, %v3349
    %v3359 = vunpack.c.l.s4 1966171168
    %v3360 = vunpack.c.0.s8 %v3359
    %v3361 = vlaneseq
    %v3362 = vshrl.u32 %v3361, 7
    %v3363 = vsub.s32 %v3360, %v3362
    %v3364 = vrot.slane %v3357, %v3363
    %v3366 = vunpack.c.l.s4 1966171168
    %v3367 = vunpack.c.0.s8 %v3366
    %v3368 = vlaneseq
    %v3369 = vshrl.u32 %v3368, 7
    %v3370 = vsub.s32 %v3367, %v3369
    %v3371 = vrot.slane %v3356, %v3370
    %v3372 = vcombine.low %v3364, %v3371
    %v3373 = vcombine.low %v1952, %v1954
    %v3374 = vcombine.low %v1956, %v1980
    %v3376 = vunpack.c.l.s4 1966171168
    %v3377 = vunpack.c.0.s8 %v3376
    %v3378 = vlaneseq
    %v3379 = vshrl.u32 %v3378, 7
    %v3380 = vsub.s32 %v3377, %v3379
    %v3381 = vrot.slane %v3373, %v3380
    %v3383 = vunpack.c.l.s4 1966171168
    %v3384 = vunpack.c.0.s8 %v3383
    %v3385 = vlaneseq
    %v3386 = vshrl.u32 %v3385, 7
    %v3387 = vsub.s32 %v3384, %v3386
    %v3388 = vrot.slane %v3374, %v3387
    %v3390 = vunpack.c.l.s4 1966171168
    %v3391 = vunpack.c.0.s8 %v3390
    %v3392 = vlaneseq
    %v3393 = vshrl.u32 %v3392, 7
    %v3394 = vsub.s32 %v3391, %v3393
    %v3395 = vrot.slane %v1994, %v3394
    %v3396 = vcombine.low %v3381, %v3388
    %v3398 = vunpack.c.l.s4 1966171168
    %v3399 = vunpack.c.0.s8 %v3398
    %v3400 = vlaneseq
    %v3401 = vshrl.u32 %v3400, 7
    %v3402 = vsub.s32 %v3399, %v3401
    %v3403 = vrot.slane %v3396, %v3402
    %v3405 = vunpack.c.l.s4 1966171168
    %v3406 = vunpack.c.0.s8 %v3405
    %v3407 = vlaneseq
    %v3408 = vshrl.u32 %v3407, 7
    %v3409 = vsub.s32 %v3406, %v3408
    %v3410 = vrot.slane %v3395, %v3409
    %v3411 = vcombine.low %v3403, %v3410
    %v3412 = vcombine.low %v2002, %v2004
    %v3413 = vcombine.low %v1987, %v2001
    %v3415 = vunpack.c.l.s4 1966171168
    %v3416 = vunpack.c.0.s8 %v3415
    %v3417 = vlaneseq
    %v3418 = vshrl.u32 %v3417, 7
    %v3419 = vsub.s32 %v3416, %v3418
    %v3420 = vrot.slane %v3412, %v3419
    %v3422 = vunpack.c.l.s4 1966171168
    %v3423 = vunpack.c.0.s8 %v3422
    %v3424 = vlaneseq
    %v3425 = vshrl.u32 %v3424, 7
    %v3426 = vsub.s32 %v3423, %v3425
    %v3427 = vrot.slane %v3413, %v3426
    %v3429 = vunpack.c.l.s4 1966171168
    %v3430 = vunpack.c.0.s8 %v3429
    %v3431 = vlaneseq
    %v3432 = vshrl.u32 %v3431, 7
    %v3433 = vsub.s32 %v3430, %v3432
    %v3434 = vrot.slane %v2003, %v3433
    %v3435 = vcombine.low %v3420, %v3427
    %v3437 = vunpack.c.l.s4 1966171168
    %v3438 = vunpack.c.0.s8 %v3437
    %v3439 = vlaneseq
    %v3440 = vshrl.u32 %v3439, 7
    %v3441 = vsub.s32 %v3438, %v3440
    %v3442 = vrot.slane %v3435, %v3441
    %v3444 = vunpack.c.l.s4 1966171168
    %v3445 = vunpack.c.0.s8 %v3444
    %v3446 = vlaneseq
    %v3447 = vshrl.u32 %v3446, 7
    %v3448 = vsub.s32 %v3445, %v3447
    %v3449 = vrot.slane %v3434, %v3448
    %v3450 = vcombine.low %v3442, %v3449
    %v3451 = vcombine.low %v2005, %v2029
    %v3452 = vcombine.low %v2043, %v2051
    %v3454 = vunpack.c.l.s4 1966171168
    %v3455 = vunpack.c.0.s8 %v3454
    %v3456 = vlaneseq
    %v3457 = vshrl.u32 %v3456, 7
    %v3458 = vsub.s32 %v3455, %v3457
    %v3459 = vrot.slane %v3451, %v3458
    %v3461 = vunpack.c.l.s4 1966171168
    %v3462 = vunpack.c.0.s8 %v3461
    %v3463 = vlaneseq
    %v3464 = vshrl.u32 %v3463, 7
    %v3465 = vsub.s32 %v3462, %v3464
    %v3466 = vrot.slane %v3452, %v3465
    %v3468 = vunpack.c.l.s4 1966171168
    %v3469 = vunpack.c.0.s8 %v3468
    %v3470 = vlaneseq
    %v3471 = vshrl.u32 %v3470, 7
    %v3472 = vsub.s32 %v3469, %v3471
    %v3473 = vrot.slane %v2053, %v3472
    %v3474 = vcombine.low %v3459, %v3466
    %v3476 = vunpack.c.l.s4 1966171168
    %v3477 = vunpack.c.0.s8 %v3476
    %v3478 = vlaneseq
    %v3479 = vshrl.u32 %v3478, 7
    %v3480 = vsub.s32 %v3477, %v3479
    %v3481 = vrot.slane %v3474, %v3480
    %v3483 = vunpack.c.l.s4 1966171168
    %v3484 = vunpack.c.0.s8 %v3483
    %v3485 = vlaneseq
    %v3486 = vshrl.u32 %v3485, 7
    %v3487 = vsub.s32 %v3484, %v3486
    %v3488 = vrot.slane %v3473, %v3487
    %v3489 = vcombine.low %v3481, %v3488
    %v3490 = vcombine.low %v2036, %v2050
    %v3491 = vcombine.low %v2052, %v2054
    %v3493 = vunpack.c.l.s4 1966171168
    %v3494 = vunpack.c.0.s8 %v3493
    %v3495 = vlaneseq
    %v3496 = vshrl.u32 %v3495, 7
    %v3497 = vsub.s32 %v3494, %v3496
    %v3498 = vrot.slane %v3490, %v3497
    %v3500 = vunpack.c.l.s4 1966171168
    %v3501 = vunpack.c.0.s8 %v3500
    %v3502 = vlaneseq
    %v3503 = vshrl.u32 %v3502, 7
    %v3504 = vsub.s32 %v3501, %v3503
    %v3505 = vrot.slane %v3491, %v3504
    %v3507 = vunpack.c.l.s4 1966171168
    %v3508 = vunpack.c.0.s8 %v3507
    %v3509 = vlaneseq
    %v3510 = vshrl.u32 %v3509, 7
    %v3511 = vsub.s32 %v3508, %v3510
    %v3512 = vrot.slane %v2078, %v3511
    %v3513 = vcombine.low %v3498, %v3505
    %v3515 = vunpack.c.l.s4 1966171168
    %v3516 = vunpack.c.0.s8 %v3515
    %v3517 = vlaneseq
    %v3518 = vshrl.u32 %v3517, 7
    %v3519 = vsub.s32 %v3516, %v3518
    %v3520 = vrot.slane %v3513, %v3519
    %v3522 = vunpack.c.l.s4 1966171168
    %v3523 = vunpack.c.0.s8 %v3522
    %v3524 = vlaneseq
    %v3525 = vshrl.u32 %v3524, 7
    %v3526 = vsub.s32 %v3523, %v3525
    %v3527 = vrot.slane %v3512, %v3526
    %v3528 = vcombine.low %v3520, %v3527
    %v3529 = vcombine.low %v2092, %v2100
    %v3530 = vcombine.low %v2102, %v2085
    %v3532 = vunpack.c.l.s4 1966171168
    %v3533 = vunpack.c.0.s8 %v3532
    %v3534 = vlaneseq
    %v3535 = vshrl.u32 %v3534, 7
    %v3536 = vsub.s32 %v3533, %v3535
    %v3537 = vrot.slane %v3529, %v3536
    %v3539 = vunpack.c.l.s4 1966171168
    %v3540 = vunpack.c.0.s8 %v3539
    %v3541 = vlaneseq
    %v3542 = vshrl.u32 %v3541, 7
    %v3543 = vsub.s32 %v3540, %v3542
    %v3544 = vrot.slane %v3530, %v3543
    %v3546 = vunpack.c.l.s4 1966171168
    %v3547 = vunpack.c.0.s8 %v3546
    %v3548 = vlaneseq
    %v3549 = vshrl.u32 %v3548, 7
    %v3550 = vsub.s32 %v3547, %v3549
    %v3551 = vrot.slane %v2099, %v3550
    %v3552 = vcombine.low %v3537, %v3544
    %v3554 = vunpack.c.l.s4 1966171168
    %v3555 = vunpack.c.0.s8 %v3554
    %v3556 = vlaneseq
    %v3557 = vshrl.u32 %v3556, 7
    %v3558 = vsub.s32 %v3555, %v3557
    %v3559 = vrot.slane %v3552, %v3558
    %v3561 = vunpack.c.l.s4 1966171168
    %v3562 = vunpack.c.0.s8 %v3561
    %v3563 = vlaneseq
    %v3564 = vshrl.u32 %v3563, 7
    %v3565 = vsub.s32 %v3562, %v3564
    %v3566 = vrot.slane %v3551, %v3565
    %v3567 = vcombine.low %v3559, %v3566
    %v3568 = vcombine.low %v2101, %v2103
    %v3569 = vcombine.low %v2127, %v2141
    %v3571 = vunpack.c.l.s4 1966171168
    %v3572 = vunpack.c.0.s8 %v3571
    %v3573 = vlaneseq
    %v3574 = vshrl.u32 %v3573, 7
    %v3575 = vsub.s32 %v3572, %v3574
    %v3576 = vrot.slane %v3568, %v3575
    %v3578 = vunpack.c.l.s4 1966171168
    %v3579 = vunpack.c.0.s8 %v3578
    %v3580 = vlaneseq
    %v3581 = vshrl.u32 %v3580, 7
    %v3582 = vsub.s32 %v3579, %v3581
    %v3583 = vrot.slane %v3569, %v3582
    %v3585 = vunpack.c.l.s4 1966171168
    %v3586 = vunpack.c.0.s8 %v3585
    %v3587 = vlaneseq
    %v3588 = vshrl.u32 %v3587, 7
    %v3589 = vsub.s32 %v3586, %v3588
    %v3590 = vrot.slane %v2149, %v3589
    %v3591 = vcombine.low %v3576, %v3583
    %v3593 = vunpack.c.l.s4 1966171168
    %v3594 = vunpack.c.0.s8 %v3593
    %v3595 = vlaneseq
    %v3596 = vshrl.u32 %v3595, 7
    %v3597 = vsub.s32 %v3594, %v3596
    %v3598 = vrot.slane %v3591, %v3597
    %v3600 = vunpack.c.l.s4 1966171168
    %v3601 = vunpack.c.0.s8 %v3600
    %v3602 = vlaneseq
    %v3603 = vshrl.u32 %v3602, 7
    %v3604 = vsub.s32 %v3601, %v3603
    %v3605 = vrot.slane %v3590, %v3604
    %v3606 = vcombine.low %v3598, %v3605
    %v3607 = vcombine.low %v2151, %v2134
    %v3608 = vcombine.low %v2148, %v2150
    %v3610 = vunpack.c.l.s4 1966171168
    %v3611 = vunpack.c.0.s8 %v3610
    %v3612 = vlaneseq
    %v3613 = vshrl.u32 %v3612, 7
    %v3614 = vsub.s32 %v3611, %v3613
    %v3615 = vrot.slane %v3607, %v3614
    %v3617 = vunpack.c.l.s4 1966171168
    %v3618 = vunpack.c.0.s8 %v3617
    %v3619 = vlaneseq
    %v3620 = vshrl.u32 %v3619, 7
    %v3621 = vsub.s32 %v3618, %v3620
    %v3622 = vrot.slane %v3608, %v3621
    %v3624 = vunpack.c.l.s4 1966171168
    %v3625 = vunpack.c.0.s8 %v3624
    %v3626 = vlaneseq
    %v3627 = vshrl.u32 %v3626, 7
    %v3628 = vsub.s32 %v3625, %v3627
    %v3629 = vrot.slane %v2152, %v3628
    %v3630 = vcombine.low %v3615, %v3622
    %v3632 = vunpack.c.l.s4 1966171168
    %v3633 = vunpack.c.0.s8 %v3632
    %v3634 = vlaneseq
    %v3635 = vshrl.u32 %v3634, 7
    %v3636 = vsub.s32 %v3633, %v3635
    %v3637 = vrot.slane %v3630, %v3636
    %v3639 = vunpack.c.l.s4 1966171168
    %v3640 = vunpack.c.0.s8 %v3639
    %v3641 = vlaneseq
    %v3642 = vshrl.u32 %v3641, 7
    %v3643 = vsub.s32 %v3640, %v3642
    %v3644 = vrot.slane %v3629, %v3643
    %v3645 = vcombine.low %v3637, %v3644
    %v3646 = vcombine.low %v2176, %v2190
    %v3647 = vcombine.low %v2198, %v2200
    %v3649 = vunpack.c.l.s4 1966171168
    %v3650 = vunpack.c.0.s8 %v3649
    %v3651 = vlaneseq
    %v3652 = vshrl.u32 %v3651, 7
    %v3653 = vsub.s32 %v3650, %v3652
    %v3654 = vrot.slane %v3646, %v3653
    %v3656 = vunpack.c.l.s4 1966171168
    %v3657 = vunpack.c.0.s8 %v3656
    %v3658 = vlaneseq
    %v3659 = vshrl.u32 %v3658, 7
    %v3660 = vsub.s32 %v3657, %v3659
    %v3661 = vrot.slane %v3647, %v3660
    %v3663 = vunpack.c.l.s4 1966171168
    %v3664 = vunpack.c.0.s8 %v3663
    %v3665 = vlaneseq
    %v3666 = vshrl.u32 %v3665, 7
    %v3667 = vsub.s32 %v3664, %v3666
    %v3668 = vrot.slane %v2183, %v3667
    %v3669 = vcombine.low %v3654, %v3661
    %v3671 = vunpack.c.l.s4 1966171168
    %v3672 = vunpack.c.0.s8 %v3671
    %v3673 = vlaneseq
    %v3674 = vshrl.u32 %v3673, 7
    %v3675 = vsub.s32 %v3672, %v3674
    %v3676 = vrot.slane %v3669, %v3675
    %v3678 = vunpack.c.l.s4 1966171168
    %v3679 = vunpack.c.0.s8 %v3678
    %v3680 = vlaneseq
    %v3681 = vshrl.u32 %v3680, 7
    %v3682 = vsub.s32 %v3679, %v3681
    %v3683 = vrot.slane %v3668, %v3682
    %v3684 = vcombine.low %v3676, %v3683
    %v3685 = vcombine.low %v2197, %v2199
    %v3686 = vcombine.low %v2201, %v2225
    %v3688 = vunpack.c.l.s4 1966171168
    %v3689 = vunpack.c.0.s8 %v3688
    %v3690 = vlaneseq
    %v3691 = vshrl.u32 %v3690, 7
    %v3692 = vsub.s32 %v3689, %v3691
    %v3693 = vrot.slane %v3685, %v3692
    %v3695 = vunpack.c.l.s4 1966171168
    %v3696 = vunpack.c.0.s8 %v3695
    %v3697 = vlaneseq
    %v3698 = vshrl.u32 %v3697, 7
    %v3699 = vsub.s32 %v3696, %v3698
    %v3700 = vrot.slane %v3686, %v3699
    %v3702 = vunpack.c.l.s4 1966171168
    %v3703 = vunpack.c.0.s8 %v3702
    %v3704 = vlaneseq
    %v3705 = vshrl.u32 %v3704, 7
    %v3706 = vsub.s32 %v3703, %v3705
    %v3707 = vrot.slane %v2239, %v3706
    %v3708 = vcombine.low %v3693, %v3700
    %v3710 = vunpack.c.l.s4 1966171168
    %v3711 = vunpack.c.0.s8 %v3710
    %v3712 = vlaneseq
    %v3713 = vshrl.u32 %v3712, 7
    %v3714 = vsub.s32 %v3711, %v3713
    %v3715 = vrot.slane %v3708, %v3714
    %v3717 = vunpack.c.l.s4 1966171168
    %v3718 = vunpack.c.0.s8 %v3717
    %v3719 = vlaneseq
    %v3720 = vshrl.u32 %v3719, 7
    %v3721 = vsub.s32 %v3718, %v3720
    %v3722 = vrot.slane %v3707, %v3721
    %v3723 = vcombine.low %v3715, %v3722
    %v3724 = vcombine.low %v2247, %v2249
    %v3725 = vcombine.low %v2232, %v2246
    %v3727 = vunpack.c.l.s4 1966171168
    %v3728 = vunpack.c.0.s8 %v3727
    %v3729 = vlaneseq
    %v3730 = vshrl.u32 %v3729, 7
    %v3731 = vsub.s32 %v3728, %v3730
    %v3732 = vrot.slane %v3724, %v3731
    %v3734 = vunpack.c.l.s4 1966171168
    %v3735 = vunpack.c.0.s8 %v3734
    %v3736 = vlaneseq
    %v3737 = vshrl.u32 %v3736, 7
    %v3738 = vsub.s32 %v3735, %v3737
    %v3739 = vrot.slane %v3725, %v3738
    %v3741 = vunpack.c.l.s4 1966171168
    %v3742 = vunpack.c.0.s8 %v3741
    %v3743 = vlaneseq
    %v3744 = vshrl.u32 %v3743, 7
    %v3745 = vsub.s32 %v3742, %v3744
    %v3746 = vrot.slane %v2248, %v3745
    %v3747 = vcombine.low %v3732, %v3739
    %v3749 = vunpack.c.l.s4 1966171168
    %v3750 = vunpack.c.0.s8 %v3749
    %v3751 = vlaneseq
    %v3752 = vshrl.u32 %v3751, 7
    %v3753 = vsub.s32 %v3750, %v3752
    %v3754 = vrot.slane %v3747, %v3753
    %v3756 = vunpack.c.l.s4 1966171168
    %v3757 = vunpack.c.0.s8 %v3756
    %v3758 = vlaneseq
    %v3759 = vshrl.u32 %v3758, 7
    %v3760 = vsub.s32 %v3757, %v3759
    %v3761 = vrot.slane %v3746, %v3760
    %v3762 = vcombine.low %v3754, %v3761
    %v3763 = vcombine.low %v2250, %v2274
    %v3764 = vcombine.low %v2288, %v2296
    %v3766 = vunpack.c.l.s4 1966171168
    %v3767 = vunpack.c.0.s8 %v3766
    %v3768 = vlaneseq
    %v3769 = vshrl.u32 %v3768, 7
    %v3770 = vsub.s32 %v3767, %v3769
    %v3771 = vrot.slane %v3763, %v3770
    %v3773 = vunpack.c.l.s4 1966171168
    %v3774 = vunpack.c.0.s8 %v3773
    %v3775 = vlaneseq
    %v3776 = vshrl.u32 %v3775, 7
    %v3777 = vsub.s32 %v3774, %v3776
    %v3778 = vrot.slane %v3764, %v3777
    %v3780 = vunpack.c.l.s4 1966171168
    %v3781 = vunpack.c.0.s8 %v3780
    %v3782 = vlaneseq
    %v3783 = vshrl.u32 %v3782, 7
    %v3784 = vsub.s32 %v3781, %v3783
    %v3785 = vrot.slane %v2298, %v3784
    %v3786 = vcombine.low %v3771, %v3778
    %v3788 = vunpack.c.l.s4 1966171168
    %v3789 = vunpack.c.0.s8 %v3788
    %v3790 = vlaneseq
    %v3791 = vshrl.u32 %v3790, 7
    %v3792 = vsub.s32 %v3789, %v3791
    %v3793 = vrot.slane %v3786, %v3792
    %v3795 = vunpack.c.l.s4 1966171168
    %v3796 = vunpack.c.0.s8 %v3795
    %v3797 = vlaneseq
    %v3798 = vshrl.u32 %v3797, 7
    %v3799 = vsub.s32 %v3796, %v3798
    %v3800 = vrot.slane %v3785, %v3799
    %v3801 = vcombine.low %v3793, %v3800
    %v3802 = vcombine.low %v2281, %v2295
    %v3803 = vcombine.low %v2297, %v2299
    %v3805 = vunpack.c.l.s4 1966171168
    %v3806 = vunpack.c.0.s8 %v3805
    %v3807 = vlaneseq
    %v3808 = vshrl.u32 %v3807, 7
    %v3809 = vsub.s32 %v3806, %v3808
    %v3810 = vrot.slane %v3802, %v3809
    %v3812 = vunpack.c.l.s4 1966171168
    %v3813 = vunpack.c.0.s8 %v3812
    %v3814 = vlaneseq
    %v3815 = vshrl.u32 %v3814, 7
    %v3816 = vsub.s32 %v3813, %v3815
    %v3817 = vrot.slane %v3803, %v3816
    %v3819 = vunpack.c.l.s4 1966171168
    %v3820 = vunpack.c.0.s8 %v3819
    %v3821 = vlaneseq
    %v3822 = vshrl.u32 %v3821, 7
    %v3823 = vsub.s32 %v3820, %v3822
    %v3824 = vrot.slane %v2323, %v3823
    %v3825 = vcombine.low %v3810, %v3817
    %v3827 = vunpack.c.l.s4 1966171168
    %v3828 = vunpack.c.0.s8 %v3827
    %v3829 = vlaneseq
    %v3830 = vshrl.u32 %v3829, 7
    %v3831 = vsub.s32 %v3828, %v3830
    %v3832 = vrot.slane %v3825, %v3831
    %v3834 = vunpack.c.l.s4 1966171168
    %v3835 = vunpack.c.0.s8 %v3834
    %v3836 = vlaneseq
    %v3837 = vshrl.u32 %v3836, 7
    %v3838 = vsub.s32 %v3835, %v3837
    %v3839 = vrot.slane %v3824, %v3838
    %v3840 = vcombine.low %v3832, %v3839
    %v3841 = vcombine.low %v2337, %v2345
    %v3842 = vcombine.low %v2347, %v2330
    %v3844 = vunpack.c.l.s4 1966171168
    %v3845 = vunpack.c.0.s8 %v3844
    %v3846 = vlaneseq
    %v3847 = vshrl.u32 %v3846, 7
    %v3848 = vsub.s32 %v3845, %v3847
    %v3849 = vrot.slane %v3841, %v3848
    %v3851 = vunpack.c.l.s4 1966171168
    %v3852 = vunpack.c.0.s8 %v3851
    %v3853 = vlaneseq
    %v3854 = vshrl.u32 %v3853, 7
    %v3855 = vsub.s32 %v3852, %v3854
    %v3856 = vrot.slane %v3842, %v3855
    %v3858 = vunpack.c.l.s4 1966171168
    %v3859 = vunpack.c.0.s8 %v3858
    %v3860 = vlaneseq
    %v3861 = vshrl.u32 %v3860, 7
    %v3862 = vsub.s32 %v3859, %v3861
    %v3863 = vrot.slane %v2344, %v3862
    %v3864 = vcombine.low %v3849, %v3856
    %v3866 = vunpack.c.l.s4 1966171168
    %v3867 = vunpack.c.0.s8 %v3866
    %v3868 = vlaneseq
    %v3869 = vshrl.u32 %v3868, 7
    %v3870 = vsub.s32 %v3867, %v3869
    %v3871 = vrot.slane %v3864, %v3870
    %v3873 = vunpack.c.l.s4 1966171168
    %v3874 = vunpack.c.0.s8 %v3873
    %v3875 = vlaneseq
    %v3876 = vshrl.u32 %v3875, 7
    %v3877 = vsub.s32 %v3874, %v3876
    %v3878 = vrot.slane %v3863, %v3877
    %v3879 = vcombine.low %v3871, %v3878
    %v3880 = vcombine.low %v2346, %v2348
    %v3881 = vcombine.low %v2372, %v2386
    %v3883 = vunpack.c.l.s4 1966171168
    %v3884 = vunpack.c.0.s8 %v3883
    %v3885 = vlaneseq
    %v3886 = vshrl.u32 %v3885, 7
    %v3887 = vsub.s32 %v3884, %v3886
    %v3888 = vrot.slane %v3880, %v3887
    %v3890 = vunpack.c.l.s4 1966171168
    %v3891 = vunpack.c.0.s8 %v3890
    %v3892 = vlaneseq
    %v3893 = vshrl.u32 %v3892, 7
    %v3894 = vsub.s32 %v3891, %v3893
    %v3895 = vrot.slane %v3881, %v3894
    %v3897 = vunpack.c.l.s4 1966171168
    %v3898 = vunpack.c.0.s8 %v3897
    %v3899 = vlaneseq
    %v3900 = vshrl.u32 %v3899, 7
    %v3901 = vsub.s32 %v3898, %v3900
    %v3902 = vrot.slane %v2394, %v3901
    %v3903 = vcombine.low %v3888, %v3895
    %v3905 = vunpack.c.l.s4 1966171168
    %v3906 = vunpack.c.0.s8 %v3905
    %v3907 = vlaneseq
    %v3908 = vshrl.u32 %v3907, 7
    %v3909 = vsub.s32 %v3906, %v3908
    %v3910 = vrot.slane %v3903, %v3909
    %v3912 = vunpack.c.l.s4 1966171168
    %v3913 = vunpack.c.0.s8 %v3912
    %v3914 = vlaneseq
    %v3915 = vshrl.u32 %v3914, 7
    %v3916 = vsub.s32 %v3913, %v3915
    %v3917 = vrot.slane %v3902, %v3916
    %v3918 = vcombine.low %v3910, %v3917
    %v3919 = vcombine.low %v2396, %v2379
    %v3920 = vcombine.low %v2393, %v2395
    %v3922 = vunpack.c.l.s4 1966171168
    %v3923 = vunpack.c.0.s8 %v3922
    %v3924 = vlaneseq
    %v3925 = vshrl.u32 %v3924, 7
    %v3926 = vsub.s32 %v3923, %v3925
    %v3927 = vrot.slane %v3919, %v3926
    %v3929 = vunpack.c.l.s4 1966171168
    %v3930 = vunpack.c.0.s8 %v3929
    %v3931 = vlaneseq
    %v3932 = vshrl.u32 %v3931, 7
    %v3933 = vsub.s32 %v3930, %v3932
    %v3934 = vrot.slane %v3920, %v3933
    %v3936 = vunpack.c.l.s4 1966171168
    %v3937 = vunpack.c.0.s8 %v3936
    %v3938 = vlaneseq
    %v3939 = vshrl.u32 %v3938, 7
    %v3940 = vsub.s32 %v3937, %v3939
    %v3941 = vrot.slane %v2397, %v3940
    %v3942 = vcombine.low %v3927, %v3934
    %v3944 = vunpack.c.l.s4 1966171168
    %v3945 = vunpack.c.0.s8 %v3944
    %v3946 = vlaneseq
    %v3947 = vshrl.u32 %v3946, 7
    %v3948 = vsub.s32 %v3945, %v3947
    %v3949 = vrot.slane %v3942, %v3948
    %v3951 = vunpack.c.l.s4 1966171168
    %v3952 = vunpack.c.0.s8 %v3951
    %v3953 = vlaneseq
    %v3954 = vshrl.u32 %v3953, 7
    %v3955 = vsub.s32 %v3952, %v3954
    %v3956 = vrot.slane %v3941, %v3955
    %v3957 = vcombine.low %v3949, %v3956
    %vm3998 = vcmask 520192
    %v3999 = vsel %vm3998, %v2436, -inf
    %v4000 = vrot.slane %v3999, 4
    %v4001 = vmax.f32 %v3999, %v4000
    %v4002 = vrot.slane %v4001, 2
    %v4003 = vmax.f32 %v4001, %v4002
    %v4004 = vrot.slane %v4003, 1
    %v4005 = vmax.f32 %v4003, %v4004
    %v4006 = vsel %vm3998, %v2475, -inf
    %v4007 = vrot.slane %v4006, 4
    %v4008 = vmax.f32 %v4006, %v4007
    %v4009 = vrot.slane %v4008, 2
    %v4010 = vmax.f32 %v4008, %v4009
    %v4011 = vrot.slane %v4010, 1
    %v4012 = vmax.f32 %v4010, %v4011
    %v4013 = vsel %vm3998, %v2514, -inf
    %v4014 = vrot.slane %v4013, 4
    %v4015 = vmax.f32 %v4013, %v4014
    %v4016 = vrot.slane %v4015, 2
    %v4017 = vmax.f32 %v4015, %v4016
    %v4018 = vrot.slane %v4017, 1
    %v4019 = vmax.f32 %v4017, %v4018
    %v4020 = vsel %vm3998, %v2553, -inf
    %v4021 = vrot.slane %v4020, 4
    %v4022 = vmax.f32 %v4020, %v4021
    %v4023 = vrot.slane %v4022, 2
    %v4024 = vmax.f32 %v4022, %v4023
    %v4025 = vrot.slane %v4024, 1
    %v4026 = vmax.f32 %v4024, %v4025
    %v4027 = vsel %vm3998, %v2592, -inf
    %v4028 = vrot.slane %v4027, 4
    %v4029 = vmax.f32 %v4027, %v4028
    %v4030 = vrot.slane %v4029, 2
    %v4031 = vmax.f32 %v4029, %v4030
    %v4032 = vrot.slane %v4031, 1
    %v4033 = vmax.f32 %v4031, %v4032
    %v4034 = vsel %vm3998, %v2631, -inf
    %v4035 = vrot.slane %v4034, 4
    %v4036 = vmax.f32 %v4034, %v4035
    %v4037 = vrot.slane %v4036, 2
    %v4038 = vmax.f32 %v4036, %v4037
    %v4039 = vrot.slane %v4038, 1
    %v4040 = vmax.f32 %v4038, %v4039
    %v4041 = vsel %vm3998, %v2670, -inf
    %v4042 = vrot.slane %v4041, 4
    %v4043 = vmax.f32 %v4041, %v4042
    %v4044 = vrot.slane %v4043, 2
    %v4045 = vmax.f32 %v4043, %v4044
    %v4046 = vrot.slane %v4045, 1
    %v4047 = vmax.f32 %v4045, %v4046
    %v4048 = vsel %vm3998, %v2709, -inf
    %v4049 = vrot.slane %v4048, 4
    %v4050 = vmax.f32 %v4048, %v4049
    %v4051 = vrot.slane %v4050, 2
    %v4052 = vmax.f32 %v4050, %v4051
    %v4053 = vrot.slane %v4052, 1
    %v4054 = vmax.f32 %v4052, %v4053
    %v4055 = vsel %vm3998, %v2748, -inf
    %v4056 = vrot.slane %v4055, 4
    %v4057 = vmax.f32 %v4055, %v4056
    %v4058 = vrot.slane %v4057, 2
    %v4059 = vmax.f32 %v4057, %v4058
    %v4060 = vrot.slane %v4059, 1
    %v4061 = vmax.f32 %v4059, %v4060
    %v4062 = vsel %vm3998, %v2787, -inf
    %v4063 = vrot.slane %v4062, 4
    %v4064 = vmax.f32 %v4062, %v4063
    %v4065 = vrot.slane %v4064, 2
    %v4066 = vmax.f32 %v4064, %v4065
    %v4067 = vrot.slane %v4066, 1
    %v4068 = vmax.f32 %v4066, %v4067
    %v4069 = vsel %vm3998, %v2826, -inf
    %v4070 = vrot.slane %v4069, 4
    %v4071 = vmax.f32 %v4069, %v4070
    %v4072 = vrot.slane %v4071, 2
    %v4073 = vmax.f32 %v4071, %v4072
    %v4074 = vrot.slane %v4073, 1
    %v4075 = vmax.f32 %v4073, %v4074
    %v4076 = vsel %vm3998, %v2865, -inf
    %v4077 = vrot.slane %v4076, 4
    %v4078 = vmax.f32 %v4076, %v4077
    %v4079 = vrot.slane %v4078, 2
    %v4080 = vmax.f32 %v4078, %v4079
    %v4081 = vrot.slane %v4080, 1
    %v4082 = vmax.f32 %v4080, %v4081
    %v4083 = vsel %vm3998, %v2904, -inf
    %v4084 = vrot.slane %v4083, 4
    %v4085 = vmax.f32 %v4083, %v4084
    %v4086 = vrot.slane %v4085, 2
    %v4087 = vmax.f32 %v4085, %v4086
    %v4088 = vrot.slane %v4087, 1
    %v4089 = vmax.f32 %v4087, %v4088
    %v4090 = vsel %vm3998, %v2943, -inf
    %v4091 = vrot.slane %v4090, 4
    %v4092 = vmax.f32 %v4090, %v4091
    %v4093 = vrot.slane %v4092, 2
    %v4094 = vmax.f32 %v4092, %v4093
    %v4095 = vrot.slane %v4094, 1
    %v4096 = vmax.f32 %v4094, %v4095
    %v4097 = vsel %vm3998, %v2982, -inf
    %v4098 = vrot.slane %v4097, 4
    %v4099 = vmax.f32 %v4097, %v4098
    %v4100 = vrot.slane %v4099, 2
    %v4101 = vmax.f32 %v4099, %v4100
    %v4102 = vrot.slane %v4101, 1
    %v4103 = vmax.f32 %v4101, %v4102
    %v4104 = vsel %vm3998, %v3021, -inf
    %v4105 = vrot.slane %v4104, 4
    %v4106 = vmax.f32 %v4104, %v4105
    %v4107 = vrot.slane %v4106, 2
    %v4108 = vmax.f32 %v4106, %v4107
    %v4109 = vrot.slane %v4108, 1
    %v4110 = vmax.f32 %v4108, %v4109
    %v4111 = vsel %vm3998, %v3060, -inf
    %v4112 = vrot.slane %v4111, 4
    %v4113 = vmax.f32 %v4111, %v4112
    %v4114 = vrot.slane %v4113, 2
    %v4115 = vmax.f32 %v4113, %v4114
    %v4116 = vrot.slane %v4115, 1
    %v4117 = vmax.f32 %v4115, %v4116
    %v4118 = vsel %vm3998, %v3099, -inf
    %v4119 = vrot.slane %v4118, 4
    %v4120 = vmax.f32 %v4118, %v4119
    %v4121 = vrot.slane %v4120, 2
    %v4122 = vmax.f32 %v4120, %v4121
    %v4123 = vrot.slane %v4122, 1
    %v4124 = vmax.f32 %v4122, %v4123
    %v4125 = vsel %vm3998, %v3138, -inf
    %v4126 = vrot.slane %v4125, 4
    %v4127 = vmax.f32 %v4125, %v4126
    %v4128 = vrot.slane %v4127, 2
    %v4129 = vmax.f32 %v4127, %v4128
    %v4130 = vrot.slane %v4129, 1
    %v4131 = vmax.f32 %v4129, %v4130
    %v4132 = vsel %vm3998, %v3177, -inf
    %v4133 = vrot.slane %v4132, 4
    %v4134 = vmax.f32 %v4132, %v4133
    %v4135 = vrot.slane %v4134, 2
    %v4136 = vmax.f32 %v4134, %v4135
    %v4137 = vrot.slane %v4136, 1
    %v4138 = vmax.f32 %v4136, %v4137
    %v4139 = vsel %vm3998, %v3216, -inf
    %v4140 = vrot.slane %v4139, 4
    %v4141 = vmax.f32 %v4139, %v4140
    %v4142 = vrot.slane %v4141, 2
    %v4143 = vmax.f32 %v4141, %v4142
    %v4144 = vrot.slane %v4143, 1
    %v4145 = vmax.f32 %v4143, %v4144
    %v4146 = vsel %vm3998, %v3255, -inf
    %v4147 = vrot.slane %v4146, 4
    %v4148 = vmax.f32 %v4146, %v4147
    %v4149 = vrot.slane %v4148, 2
    %v4150 = vmax.f32 %v4148, %v4149
    %v4151 = vrot.slane %v4150, 1
    %v4152 = vmax.f32 %v4150, %v4151
    %v4153 = vsel %vm3998, %v3294, -inf
    %v4154 = vrot.slane %v4153, 4
    %v4155 = vmax.f32 %v4153, %v4154
    %v4156 = vrot.slane %v4155, 2
    %v4157 = vmax.f32 %v4155, %v4156
    %v4158 = vrot.slane %v4157, 1
    %v4159 = vmax.f32 %v4157, %v4158
    %v4160 = vsel %vm3998, %v3333, -inf
    %v4161 = vrot.slane %v4160, 4
    %v4162 = vmax.f32 %v4160, %v4161
    %v4163 = vrot.slane %v4162, 2
    %v4164 = vmax.f32 %v4162, %v4163
    %v4165 = vrot.slane %v4164, 1
    %v4166 = vmax.f32 %v4164, %v4165
    %v4167 = vsel %vm3998, %v3372, -inf
    %v4168 = vrot.slane %v4167, 4
    %v4169 = vmax.f32 %v4167, %v4168
    %v4170 = vrot.slane %v4169, 2
    %v4171 = vmax.f32 %v4169, %v4170
    %v4172 = vrot.slane %v4171, 1
    %v4173 = vmax.f32 %v4171, %v4172
    %v4174 = vsel %vm3998, %v3411, -inf
    %v4175 = vrot.slane %v4174, 4
    %v4176 = vmax.f32 %v4174, %v4175
    %v4177 = vrot.slane %v4176, 2
    %v4178 = vmax.f32 %v4176, %v4177
    %v4179 = vrot.slane %v4178, 1
    %v4180 = vmax.f32 %v4178, %v4179
    %v4181 = vsel %vm3998, %v3450, -inf
    %v4182 = vrot.slane %v4181, 4
    %v4183 = vmax.f32 %v4181, %v4182
    %v4184 = vrot.slane %v4183, 2
    %v4185 = vmax.f32 %v4183, %v4184
    %v4186 = vrot.slane %v4185, 1
    %v4187 = vmax.f32 %v4185, %v4186
    %v4188 = vsel %vm3998, %v3489, -inf
    %v4189 = vrot.slane %v4188, 4
    %v4190 = vmax.f32 %v4188, %v4189
    %v4191 = vrot.slane %v4190, 2
    %v4192 = vmax.f32 %v4190, %v4191
    %v4193 = vrot.slane %v4192, 1
    %v4194 = vmax.f32 %v4192, %v4193
    %v4195 = vsel %vm3998, %v3528, -inf
    %v4196 = vrot.slane %v4195, 4
    %v4197 = vmax.f32 %v4195, %v4196
    %v4198 = vrot.slane %v4197, 2
    %v4199 = vmax.f32 %v4197, %v4198
    %v4200 = vrot.slane %v4199, 1
    %v4201 = vmax.f32 %v4199, %v4200
    %v4202 = vsel %vm3998, %v3567, -inf
    %v4203 = vrot.slane %v4202, 4
    %v4204 = vmax.f32 %v4202, %v4203
    %v4205 = vrot.slane %v4204, 2
    %v4206 = vmax.f32 %v4204, %v4205
    %v4207 = vrot.slane %v4206, 1
    %v4208 = vmax.f32 %v4206, %v4207
    %v4209 = vsel %vm3998, %v3606, -inf
    %v4210 = vrot.slane %v4209, 4
    %v4211 = vmax.f32 %v4209, %v4210
    %v4212 = vrot.slane %v4211, 2
    %v4213 = vmax.f32 %v4211, %v4212
    %v4214 = vrot.slane %v4213, 1
    %v4215 = vmax.f32 %v4213, %v4214
    %v4216 = vsel %vm3998, %v3645, -inf
    %v4217 = vrot.slane %v4216, 4
    %v4218 = vmax.f32 %v4216, %v4217
    %v4219 = vrot.slane %v4218, 2
    %v4220 = vmax.f32 %v4218, %v4219
    %v4221 = vrot.slane %v4220, 1
    %v4222 = vmax.f32 %v4220, %v4221
    %v4223 = vsel %vm3998, %v3684, -inf
    %v4224 = vrot.slane %v4223, 4
    %v4225 = vmax.f32 %v4223, %v4224
    %v4226 = vrot.slane %v4225, 2
    %v4227 = vmax.f32 %v4225, %v4226
    %v4228 = vrot.slane %v4227, 1
    %v4229 = vmax.f32 %v4227, %v4228
    %v4230 = vsel %vm3998, %v3723, -inf
    %v4231 = vrot.slane %v4230, 4
    %v4232 = vmax.f32 %v4230, %v4231
    %v4233 = vrot.slane %v4232, 2
    %v4234 = vmax.f32 %v4232, %v4233
    %v4235 = vrot.slane %v4234, 1
    %v4236 = vmax.f32 %v4234, %v4235
    %v4237 = vsel %vm3998, %v3762, -inf
    %v4238 = vrot.slane %v4237, 4
    %v4239 = vmax.f32 %v4237, %v4238
    %v4240 = vrot.slane %v4239, 2
    %v4241 = vmax.f32 %v4239, %v4240
    %v4242 = vrot.slane %v4241, 1
    %v4243 = vmax.f32 %v4241, %v4242
    %v4244 = vsel %vm3998, %v3801, -inf
    %v4245 = vrot.slane %v4244, 4
    %v4246 = vmax.f32 %v4244, %v4245
    %v4247 = vrot.slane %v4246, 2
    %v4248 = vmax.f32 %v4246, %v4247
    %v4249 = vrot.slane %v4248, 1
    %v4250 = vmax.f32 %v4248, %v4249
    %v4251 = vsel %vm3998, %v3840, -inf
    %v4252 = vrot.slane %v4251, 4
    %v4253 = vmax.f32 %v4251, %v4252
    %v4254 = vrot.slane %v4253, 2
    %v4255 = vmax.f32 %v4253, %v4254
    %v4256 = vrot.slane %v4255, 1
    %v4257 = vmax.f32 %v4255, %v4256
    %v4258 = vsel %vm3998, %v3879, -inf
    %v4259 = vrot.slane %v4258, 4
    %v4260 = vmax.f32 %v4258, %v4259
    %v4261 = vrot.slane %v4260, 2
    %v4262 = vmax.f32 %v4260, %v4261
    %v4263 = vrot.slane %v4262, 1
    %v4264 = vmax.f32 %v4262, %v4263
    %v4265 = vsel %vm3998, %v3918, -inf
    %v4266 = vrot.slane %v4265, 4
    %v4267 = vmax.f32 %v4265, %v4266
    %v4268 = vrot.slane %v4267, 2
    %v4269 = vmax.f32 %v4267, %v4268
    %v4270 = vrot.slane %v4269, 1
    %v4271 = vmax.f32 %v4269, %v4270
    %v4272 = vsel %vm3998, %v3957, -inf
    %v4273 = vrot.slane %v4272, 4
    %v4274 = vmax.f32 %v4272, %v4273
    %v4275 = vrot.slane %v4274, 2
    %v4276 = vmax.f32 %v4274, %v4275
    %v4277 = vrot.slane %v4276, 1
    %v4278 = vmax.f32 %v4276, %v4277
    %v4279 = vmax.f32 %v4005, 0.0
    %v4280 = vmax.f32 %v4012, 0.0
    %v4281 = vmax.f32 %v4019, 0.0
    %v4282 = vmax.f32 %v4026, 0.0
    %v4283 = vmax.f32 %v4033, 0.0
    %v4284 = vmax.f32 %v4040, 0.0
    %v4285 = vmax.f32 %v4047, 0.0
    %v4286 = vmax.f32 %v4054, 0.0
    %v4287 = vmax.f32 %v4061, 0.0
    %v4288 = vmax.f32 %v4068, 0.0
    %v4289 = vmax.f32 %v4075, 0.0
    %v4290 = vmax.f32 %v4082, 0.0
    %v4291 = vmax.f32 %v4089, 0.0
    %v4292 = vmax.f32 %v4096, 0.0
    %v4293 = vmax.f32 %v4103, 0.0
    %v4294 = vmax.f32 %v4110, 0.0
    %v4295 = vmax.f32 %v4117, 0.0
    %v4296 = vmax.f32 %v4124, 0.0
    %v4297 = vmax.f32 %v4131, 0.0
    %v4298 = vmax.f32 %v4138, 0.0
    %v4299 = vmax.f32 %v4145, 0.0
    %v4300 = vmax.f32 %v4152, 0.0
    %v4301 = vmax.f32 %v4159, 0.0
    %v4302 = vmax.f32 %v4166, 0.0
    %v4303 = vmax.f32 %v4173, 0.0
    %v4304 = vmax.f32 %v4180, 0.0
    %v4305 = vmax.f32 %v4187, 0.0
    %v4306 = vmax.f32 %v4194, 0.0
    %v4307 = vmax.f32 %v4201, 0.0
    %v4308 = vmax.f32 %v4208, 0.0
    %v4309 = vmax.f32 %v4215, 0.0
    %v4310 = vmax.f32 %v4222, 0.0
    %v4311 = vmax.f32 %v4229, 0.0
    %v4312 = vmax.f32 %v4236, 0.0
    %v4313 = vmax.f32 %v4243, 0.0
    %v4314 = vmax.f32 %v4250, 0.0
    %v4315 = vmax.f32 %v4257, 0.0
    %v4316 = vmax.f32 %v4264, 0.0
    %v4317 = vmax.f32 %v4271, 0.0
    %v4318 = vmax.f32 %v4278, 0.0
    %vm4359 = vcmask 1043459
    %v4360 = vsel %vm4359, %v4280, %v4279
    %vm4361 = vcmask 1044484
    %v4362 = vsel %vm4361, %v4281, %v4360
    %vm4363 = vcmask 1045509
    %v4364 = vsel %vm4363, %v4282, %v4362
    %vm4365 = vcmask 1046534
    %v4366 = vsel %vm4365, %v4283, %v4364
    %vm4367 = vcmask 1047559
    %v4368 = vsel %vm4367, %v4284, %v4366
    %vm4369 = vcmask 1041409
    %v4370 = vsel %vm4369, %v4286, %v4285
    %vm4371 = vcmask 1042434
    %v4372 = vsel %vm4371, %v4287, %v4370
    %v4373 = vsel %vm4359, %v4288, %v4372
    %v4374 = vsel %vm4361, %v4289, %v4373
    %v4375 = vsel %vm4363, %v4290, %v4374
    %v4376 = vsel %vm4365, %v4291, %v4375
    %v4377 = vsel %vm4367, %v4292, %v4376
    %v4378 = vsel %vm4369, %v4294, %v4293
    %v4379 = vsel %vm4371, %v4295, %v4378
    %v4380 = vsel %vm4359, %v4296, %v4379
    %v4381 = vsel %vm4361, %v4297, %v4380
    %v4382 = vsel %vm4363, %v4298, %v4381
    %v4383 = vsel %vm4359, %v4300, %v4299
    %v4384 = vsel %vm4361, %v4301, %v4383
    %v4385 = vsel %vm4363, %v4302, %v4384
    %v4386 = vsel %vm4365, %v4303, %v4385
    %v4387 = vsel %vm4367, %v4304, %v4386
    %v4388 = vsel %vm4369, %v4306, %v4305
    %v4389 = vsel %vm4371, %v4307, %v4388
    %v4390 = vsel %vm4359, %v4308, %v4389
    %v4391 = vsel %vm4361, %v4309, %v4390
    %v4392 = vsel %vm4363, %v4310, %v4391
    %v4393 = vsel %vm4365, %v4311, %v4392
    %v4394 = vsel %vm4367, %v4312, %v4393
    %v4395 = vsel %vm4369, %v4314, %v4313
    %v4396 = vsel %vm4371, %v4315, %v4395
    %v4397 = vsel %vm4359, %v4316, %v4396
    %v4398 = vsel %vm4361, %v4317, %v4397
    %v4399 = vsel %vm4363, %v4318, %v4398
    %v4406 = vsel %vm80, 0.0, %v4368
    %v4407 = vsel %vm80, 0.0, %v4387
    %v4408 = vsel %vm159, %v4382, 0.0
    %v4409 = vsel %vm159, %v4399, 0.0
    %v4414 = vrot.slane %v4406, 1
    %v4415 = vrot.slane %v4377, 1
    %v4416 = vsel %vm166, %v4414, %v4415
    %v4417 = vrot.slane %v4408, 1
    %v4418 = vsel %vm166, %v4415, %v4417
    %v4419 = vrot.slane %v4407, 1
    %v4420 = vrot.slane %v4394, 1
    %v4421 = vsel %vm166, %v4419, %v4420
    %v4422 = vrot.slane %v4409, 1
    %v4423 = vsel %vm166, %v4420, %v4422
    %4424 = vrot.lane.b32.xlu0 %v4416, 64
    %v4425 = vpop.permute.xlu0 %4424
    %4426 = vrot.lane.b32.xlu0 %v4418, 64
    %v4427 = vpop.permute.xlu0 %4426
    %4428 = vrot.lane.b32.xlu0 %v4417, 64
    %v4429 = vpop.permute.xlu0 %4428
    %4430 = vrot.lane.b32.xlu0 %v4421, 64
    %v4431 = vpop.permute.xlu0 %4430
    %4432 = vrot.lane.b32.xlu0 %v4423, 64
    %v4433 = vpop.permute.xlu0 %4432
    %4434 = vrot.lane.b32.xlu0 %v4422, 64
    %v4435 = vpop.permute.xlu0 %4434
    %v4442 = vrot.slane %v4406, 2
    %v4443 = vrot.slane %v4377, 2
    %v4444 = vsel %vm159, %v4442, %v4443
    %v4445 = vrot.slane %v4408, 2
    %v4446 = vsel %vm159, %v4443, %v4445
    %v4447 = vrot.slane %v4407, 2
    %v4448 = vrot.slane %v4394, 2
    %v4449 = vsel %vm159, %v4447, %v4448
    %v4450 = vrot.slane %v4409, 2
    %v4451 = vsel %vm159, %v4448, %v4450
    %v4458 = vrot.slane %v4406, 3
    %v4459 = vrot.slane %v4377, 3
    %v4460 = vsel %vm423, %v4458, %v4459
    %v4461 = vrot.slane %v4408, 3
    %v4462 = vsel %vm423, %v4459, %v4461
    %v4463 = vrot.slane %v4407, 3
    %v4464 = vrot.slane %v4394, 3
    %v4465 = vsel %vm423, %v4463, %v4464
    %v4466 = vrot.slane %v4409, 3
    %v4467 = vsel %vm423, %v4464, %v4466
    %4468 = vrot.lane.b32.xlu0 %v4460, 64
    %v4469 = vpop.permute.xlu0 %4468
    %4470 = vrot.lane.b32.xlu0 %v4462, 64
    %v4471 = vpop.permute.xlu0 %4470
    %4472 = vrot.lane.b32.xlu0 %v4461, 64
    %v4473 = vpop.permute.xlu0 %4472
    %4474 = vrot.lane.b32.xlu0 %v4465, 64
    %v4475 = vpop.permute.xlu0 %4474
    %4476 = vrot.lane.b32.xlu0 %v4467, 64
    %v4477 = vpop.permute.xlu0 %4476
    %4478 = vrot.lane.b32.xlu0 %v4466, 64
    %v4479 = vpop.permute.xlu0 %4478
    %v4486 = vrot.slane %v4406, 4
    %v4487 = vrot.slane %v4377, 4
    %v4488 = vsel %vm552, %v4486, %v4487
    %v4489 = vrot.slane %v4408, 4
    %v4490 = vsel %vm552, %v4487, %v4489
    %v4491 = vrot.slane %v4407, 4
    %v4492 = vrot.slane %v4394, 4
    %v4493 = vsel %vm552, %v4491, %v4492
    %v4494 = vrot.slane %v4409, 4
    %v4495 = vsel %vm552, %v4492, %v4494
    %v4496 = vsel %vm630, %v4406, %v4425
    %v4497 = vsel %vm630, %v4377, %v4427
    %v4498 = vsel %vm630, %v4408, %v4429
    %v4499 = vsel %vm630, %v4407, %v4431
    %v4500 = vsel %vm630, %v4394, %v4433
    %v4501 = vsel %vm630, %v4409, %v4435
    %v4502 = vsel %vm630, %v4444, %v4469
    %v4503 = vsel %vm630, %v4446, %v4471
    %v4504 = vsel %vm630, %v4445, %v4473
    %v4505 = vsel %vm630, %v4449, %v4475
    %v4506 = vsel %vm630, %v4451, %v4477
    %v4507 = vsel %vm630, %v4450, %v4479
    %v4520 = vcombine.low %v4496, %v4502
    %v4521 = vcombine.high %v4496, %v4502
    %v4522 = vcombine.high %v4488, %v4488
    %v4523 = vcombine.low %v4497, %v4503
    %v4524 = vcombine.high %v4497, %v4503
    %v4525 = vcombine.high %v4490, %v4490
    %v4526 = vcombine.low %v4498, %v4504
    %v4527 = vcombine.low %v4499, %v4505
    %v4528 = vcombine.high %v4499, %v4505
    %v4529 = vcombine.high %v4493, %v4493
    %v4530 = vcombine.low %v4500, %v4506
    %v4531 = vcombine.high %v4500, %v4506
    %v4532 = vcombine.high %v4495, %v4495
    %v4533 = vcombine.low %v4501, %v4507
    %v4534 = vcombine.low %v4520, %v4521
    %v4535 = vcombine.high %v4520, %v4521
    %v4536 = vcombine.low %v4488, %v4522
    %v4537 = vcombine.low %v4523, %v4524
    %v4538 = vcombine.high %v4523, %v4524
    %v4539 = vcombine.low %v4490, %v4525
    %v4540 = vcombine.low %v4526, %v4527
    %v4541 = vcombine.high %v4526, %v4527
    %v4542 = vcombine.low %v4489, %v4493
    %v4543 = vcombine.low %v4528, %v4530
    %v4544 = vcombine.high %v4528, %v4530
    %v4545 = vcombine.low %v4529, %v4495
    %v4546 = vcombine.low %v4531, %v4533
    %v4547 = vcombine.high %v4531, %v4533
    %v4548 = vcombine.low %v4532, %v4494
    %v4564 = vpack.c.bf16 %v4537, %v4534
    %v4565 = vpack.c.bf16 %v4538, %v4535
    %v4566 = vpack.c.bf16 %v4539, %v4536
    %v4567 = vpack.c.bf16 %v4543, %v4540
    %v4568 = vpack.c.bf16 %v4544, %v4541
    %v4569 = vpack.c.bf16 %v4545, %v4542
    %v4570 = vpack.c.bf16 %v4546, %v4546
    %v4571 = vpack.c.bf16 %v4547, %v4547
    %v4572 = vpack.c.bf16 %v4548, %v4548
    %v4573 = vld [vmem:[%s3] sm:$0xf]
    %v4574 = vld [vmem:[%s3 + $0x4] sm:$0xf]
    %v4575 = vld [vmem:[%s3 + $0x8] sm:$0xf]
    %v4576 = vld [vmem:[%s3 + $0xc] sm:$0xf]
    %v4577 = vld [vmem:[%s3 + $0x10] sm:$0xf]
    %v4578 = vld [vmem:[%s3 + $0x14] sm:$0xf]
    %v4579 = vld [vmem:[%s3 + $0x18] sm:$0xf]
    %v4580 = vld [vmem:[%s3 + $0x1c] sm:$0xf]
    %v4581 = vld [vmem:[%s3 + $0x20] sm:$0xf]
    %v4582 = vld [vmem:[%s3 + $0x24] sm:$0xf]
    %v4583 = vld [vmem:[%s3 + $0x28] sm:$0xf]
    %v4584 = vld [vmem:[%s3 + $0x2c] sm:$0xf]
    %v4585 = vld [vmem:[%s3 + $0x30] sm:$0xf]
    %v4586 = vld [vmem:[%s3 + $0x34] sm:$0xf]
    %v4587 = vld [vmem:[%s3 + $0x38] sm:$0xf]
    %v4588 = vld [vmem:[%s3 + $0x3c] sm:$0xf]
    %v4589 = vld [vmem:[%s3 + $0x40] sm:$0xf]
    %v4590 = vld [vmem:[%s3 + $0x44] sm:$0xf]
    %v4591 = vld [vmem:[%s3 + $0x48] sm:$0xf]
    %v4592 = vld [vmem:[%s3 + $0x4c] sm:$0xf]
    %v4593 = vld [vmem:[%s3 + $0x50] sm:$0xf]
    %v4594 = vld [vmem:[%s3 + $0x54] sm:$0xf]
    %v4595 = vld [vmem:[%s3 + $0x58] sm:$0xf]
    %v4596 = vld [vmem:[%s3 + $0x5c] sm:$0xf]
    %v4597 = vld [vmem:[%s3 + $0x60] sm:$0xf]
    %v4598 = vld [vmem:[%s3 + $0x64] sm:$0xf]
    %v4599 = vld [vmem:[%s3 + $0x68] sm:$0xf]
    %v4600 = vld [vmem:[%s3 + $0x6c] sm:$0xf]
    %v4601 = vld [vmem:[%s3 + $0x70] sm:$0xf]
    %v4602 = vld [vmem:[%s3 + $0x74] sm:$0xf]
    %v4603 = vld [vmem:[%s3 + $0x78] sm:$0xf]
    %v4604 = vld [vmem:[%s3 + $0x7c] sm:$0xf]
    %v4605 = vld [vmem:[%s3 + $0x80] sm:$0xf]
    %v4606 = vld [vmem:[%s3 + $0x84] sm:$0xf]
    %v4607 = vld [vmem:[%s3 + $0x88] sm:$0xf]
    %v4608 = vld [vmem:[%s3 + $0x8c] sm:$0xf]
    %v4609 = vld [vmem:[%s3 + $0x90] sm:$0xf]
    %v4610 = vld [vmem:[%s3 + $0x94] sm:$0xf]
    %v4611 = vld [vmem:[%s3 + $0x98] sm:$0xf]
    %v4612 = vld [vmem:[%s3 + $0x9c] sm:$0xf]
    %v4613 = vld [vmem:[%s4] sm:$0x1]
    %v4615 = vlaneseq
    %v4616 = vshrl.u32 %v4615, 7
    %v4617 = vsub.s32 0, %v4616
    %v4618 = vrot.slane %v4613, %v4617
    %v4660 = vunpack.c.l.b16 %v4573
    %v4661 = vunpack.c.l.b16 %v4574
    %v4662 = vunpack.c.l.b16 %v4575
    %v4663 = vunpack.c.l.b16 %v4576
    %v4664 = vunpack.c.l.b16 %v4577
    %v4665 = vunpack.c.l.b16 %v4578
    %v4666 = vunpack.c.l.b16 %v4579
    %v4667 = vunpack.c.l.b16 %v4580
    %v4668 = vunpack.c.l.b16 %v4581
    %v4669 = vunpack.c.l.b16 %v4582
    %v4670 = vunpack.c.l.b16 %v4583
    %v4671 = vunpack.c.l.b16 %v4584
    %v4672 = vunpack.c.l.b16 %v4585
    %v4673 = vunpack.c.l.b16 %v4586
    %v4674 = vunpack.c.l.b16 %v4587
    %v4675 = vunpack.c.l.b16 %v4588
    %v4676 = vunpack.c.l.b16 %v4589
    %v4677 = vunpack.c.l.b16 %v4590
    %v4678 = vunpack.c.l.b16 %v4591
    %v4679 = vunpack.c.l.b16 %v4592
    %v4680 = vunpack.c.l.b16 %v4593
    %v4681 = vunpack.c.l.b16 %v4594
    %v4682 = vunpack.c.l.b16 %v4595
    %v4683 = vunpack.c.l.b16 %v4596
    %v4684 = vunpack.c.l.b16 %v4597
    %v4685 = vunpack.c.l.b16 %v4598
    %v4686 = vunpack.c.l.b16 %v4599
    %v4687 = vunpack.c.l.b16 %v4600
    %v4688 = vunpack.c.l.b16 %v4601
    %v4689 = vunpack.c.l.b16 %v4602
    %v4690 = vunpack.c.l.b16 %v4603
    %v4691 = vunpack.c.l.b16 %v4604
    %v4692 = vunpack.c.l.b16 %v4605
    %v4693 = vunpack.c.l.b16 %v4606
    %v4694 = vunpack.c.l.b16 %v4607
    %v4695 = vunpack.c.l.b16 %v4608
    %v4696 = vunpack.c.l.b16 %v4609
    %v4697 = vunpack.c.l.b16 %v4610
    %v4698 = vunpack.c.l.b16 %v4611
    %v4699 = vunpack.c.l.b16 %v4612
    %v4700 = vpack.c.b16 %v4661, %v4660
    %v4701 = vpack.c.b16 %v4663, %v4662
    %v4702 = vpack.c.b16 %v4665, %v4664
    %v4703 = vpack.c.b16 %v4667, %v4666
    %v4704 = vpack.c.b16 %v4669, %v4668
    %v4705 = vpack.c.b16 %v4671, %v4670
    %v4706 = vpack.c.b16 %v4673, %v4672
    %v4707 = vpack.c.b16 %v4675, %v4674
    %v4708 = vpack.c.b16 %v4677, %v4676
    %v4709 = vpack.c.b16 %v4679, %v4678
    %v4710 = vpack.c.b16 %v4681, %v4680
    %v4711 = vpack.c.b16 %v4683, %v4682
    %v4712 = vpack.c.b16 %v4685, %v4684
    %v4713 = vpack.c.b16 %v4687, %v4686
    %v4714 = vpack.c.b16 %v4689, %v4688
    %v4715 = vpack.c.b16 %v4691, %v4690
    %v4716 = vpack.c.b16 %v4693, %v4692
    %v4717 = vpack.c.b16 %v4695, %v4694
    %v4718 = vpack.c.b16 %v4697, %v4696
    %v4719 = vpack.c.b16 %v4699, %v4698
    %v4741 = vsel %vm630, %v4566, 0
    %v4744 = vsel %vm630, %v4569, 0
    %v4747 = vsel %vm630, %v4572, 0
    %4749 = vmatprep.subr.bf16.mxu0 0
    %4750 = vmatpush1.bf16.msra.mxu0 %v4707
    %4751 = vmatprep.subr.bf16.mxu0 0
    %4752 = vmatpush1.bf16.msra.mxu0 %v4706
    %4753 = vmatprep.subr.bf16.mxu0 0
    %4754 = vmatpush1.bf16.msra.mxu0 %v4705
    %4755 = vmatprep.subr.bf16.mxu0 0
    %4756 = vmatpush1.bf16.msra.mxu0 %v4704
    %4757 = vmatprep.subr.bf16.mxu0 0
    %4758 = vmatpush1.bf16.msra.mxu0 %v4703
    %4759 = vmatprep.subr.bf16.mxu0 0
    %4760 = vmatpush1.bf16.msra.mxu0 %v4702
    %4761 = vmatprep.subr.bf16.mxu0 0
    %4762 = vmatpush1.bf16.msra.mxu0 %v4701
    %4763 = vmatprep.subr.bf16.mxu0 0
    %4764 = vmatpush1.bf16.msra.mxu0 %v4700
    %4765 = vmatprep.subr.bf16.mxu0 0
    %4766 = vmatpush2.bf16.msra.mxu0 %v4715
    %4767 = vmatprep.subr.bf16.mxu0 0
    %4768 = vmatpush2.bf16.msra.mxu0 %v4714
    %4769 = vmatprep.subr.bf16.mxu0 0
    %4770 = vmatpush2.bf16.msra.mxu0 %v4713
    %4771 = vmatprep.subr.bf16.mxu0 0
    %4772 = vmatpush2.bf16.msra.mxu0 %v4712
    %4773 = vmatprep.subr.bf16.mxu0 0
    %4774 = vmatpush2.bf16.msra.mxu0 %v4711
    %4775 = vmatprep.subr.bf16.mxu0 0
    %4776 = vmatpush2.bf16.msra.mxu0 %v4710
    %4777 = vmatprep.subr.bf16.mxu0 0
    %4778 = vmatpush2.bf16.msra.mxu0 %v4709
    %4779 = vmatprep.subr.bf16.mxu0 0
    %4780 = vmatpush2.bf16.msra.mxu0 %v4708
    %4781 = vmatprep.mubr.bf16.mxu0 %v4565
    %4782 = vmatmul.mubr.bf16.gmra.mxu0 %v4564
    %v4783 = vpop.f32.mrf.mxu0
    %v4784 = vadd.f32 %v4618, %v4783
    %v4785 = vpop.f32.mrf.mxu0
    %v4786 = vpop.f32.mrf.mxu0
    %v4787 = vadd.f32 %v4618, %v4786
    %v4788 = vpop.f32.mrf.mxu0
    %4789 = vmatprep.mubr.bf16.mxu0 %v4568
    %4790 = vmatmul.mubr.bf16.gmra.mxu0 %v4567
    %v4791 = vpop.f32.mrf.mxu0
    %v4792 = vadd.f32 %v4618, %v4791
    %v4793 = vpop.f32.mrf.mxu0
    %v4794 = vpop.f32.mrf.mxu0
    %v4795 = vadd.f32 %v4618, %v4794
    %v4796 = vpop.f32.mrf.mxu0
    %4797 = vmatprep.mubr.bf16.mxu0 %v4571
    %4798 = vmatmul.mubr.bf16.gmra.mxu0 %v4570
    %v4799 = vpop.f32.mrf.mxu0
    %v4800 = vadd.f32 %v4618, %v4799
    %v4801 = vpop.f32.mrf.mxu0
    %v4802 = vpop.f32.mrf.mxu0
    %v4803 = vpop.f32.mrf.mxu0
    %4804 = vdwg.mxu0
    %4805 = vmatprep.subr.bf16.mxu0 0
    %4806 = vmatpush1.bf16.msra.mxu0 0
    %4807 = vmatprep.subr.bf16.mxu0 0
    %4808 = vmatpush1.bf16.msra.mxu0 0
    %4809 = vmatprep.subr.bf16.mxu0 0
    %4810 = vmatpush1.bf16.msra.mxu0 0
    %4811 = vmatprep.subr.bf16.mxu0 0
    %4812 = vmatpush1.bf16.msra.mxu0 0
    %4813 = vmatprep.subr.bf16.mxu0 0
    %4814 = vmatpush1.bf16.msra.mxu0 %v4719
    %4815 = vmatprep.subr.bf16.mxu0 0
    %4816 = vmatpush1.bf16.msra.mxu0 %v4718
    %4817 = vmatprep.subr.bf16.mxu0 0
    %4818 = vmatpush1.bf16.msra.mxu0 %v4717
    %4819 = vmatprep.subr.bf16.mxu0 0
    %4820 = vmatpush1.bf16.msra.mxu0 %v4716
    %4821 = vmatprep.subr.bf16.mxu0 0
    %4822 = vmatpush2.bf16.msra.mxu0 0
    %4823 = vmatprep.subr.bf16.mxu0 0
    %4824 = vmatpush2.bf16.msra.mxu0 0
    %4825 = vmatprep.subr.bf16.mxu0 0
    %4826 = vmatpush2.bf16.msra.mxu0 0
    %4827 = vmatprep.subr.bf16.mxu0 0
    %4828 = vmatpush2.bf16.msra.mxu0 0
    %4829 = vmatprep.subr.bf16.mxu0 0
    %4830 = vmatpush2.bf16.msra.mxu0 0
    %4831 = vmatprep.subr.bf16.mxu0 0
    %4832 = vmatpush2.bf16.msra.mxu0 0
    %4833 = vmatprep.subr.bf16.mxu0 0
    %4834 = vmatpush2.bf16.msra.mxu0 0
    %4835 = vmatprep.subr.bf16.mxu0 0
    %4836 = vmatpush2.bf16.msra.mxu0 0
    %4837 = vmatprep.mubr.bf16.mxu0 0
    %4838 = vmatmul.mubr.bf16.gmra.mxu0 %v4741
    %v4839 = vpop.f32.mrf.mxu0
    %v4840 = vadd.f32 %v4784, %v4839
    %v4841 = vpop.f32.mrf.mxu0
    %v4842 = vpop.f32.mrf.mxu0
    %v4843 = vadd.f32 %v4787, %v4842
    %v4844 = vpop.f32.mrf.mxu0
    %4845 = vmatprep.mubr.bf16.mxu0 0
    %4846 = vmatmul.mubr.bf16.gmra.mxu0 %v4744
    %v4847 = vpop.f32.mrf.mxu0
    %v4848 = vadd.f32 %v4792, %v4847
    %v4849 = vpop.f32.mrf.mxu0
    %v4850 = vpop.f32.mrf.mxu0
    %v4851 = vadd.f32 %v4795, %v4850
    %v4852 = vpop.f32.mrf.mxu0
    %4853 = vmatprep.mubr.bf16.mxu0 0
    %4854 = vmatmul.mubr.bf16.gmra.mxu0 %v4747
    %v4855 = vpop.f32.mrf.mxu0
    %v4856 = vadd.f32 %v4800, %v4855
    %v4857 = vpop.f32.mrf.mxu0
    %v4858 = vpop.f32.mrf.mxu0
    %v4859 = vpop.f32.mrf.mxu0
    %4860 = vdwg.mxu0
    %v4866 = vcombine.high %v4840, %v4840
    %v4867 = vcombine.high %v4843, %v4843
    %v4868 = vcombine.high %v4848, %v4848
    %v4869 = vcombine.high %v4851, %v4851
    %v4870 = vcombine.high %v4856, %v4856
    %v4872 = vcombine.low %v4840, %v4866
    %v4873 = vcombine.low %v4843, %v4867
    %v4874 = vcombine.low %v4868, %v4851
    %v4875 = vcombine.low %v4869, %v4856
    %v4880 = vsel %vm552, %v4848, -inf
    %v4881 = vmax.f32 %v4872, %v4880
    %v4882 = vmax.f32 %v4881, %v4873
    %v4883 = vrot.slane %v4882, 4
    %v4884 = vmax.f32 %v4882, %v4883
    %v4885 = vrot.slane %v4884, 2
    %v4886 = vmax.f32 %v4884, %v4885
    %v4887 = vrot.slane %v4886, 1
    %v4888 = vmax.f32 %v4886, %v4887
    %v4889 = vsel %vm552, %v4870, -inf
    %v4890 = vmax.f32 %v4874, %v4889
    %v4891 = vmax.f32 %v4890, %v4875
    %v4892 = vrot.slane %v4891, 4
    %v4893 = vmax.f32 %v4891, %v4892
    %v4894 = vrot.slane %v4893, 2
    %v4895 = vmax.f32 %v4893, %v4894
    %v4896 = vrot.slane %v4895, 1
    %v4897 = vmax.f32 %v4895, %v4896
    %v4898 = vmax.f32 %v4888, 0.0
    %v4899 = vmax.f32 %v4897, 0.0
    %v4900 = vld [vmem:[%s5] sm:$0xff]
    %v4901 = vld [vmem:[%s5 + $0x8] sm:$0xff]
    %v4902 = vld [vmem:[%s5 + $0x10] sm:$0xff]
    %v4903 = vld [vmem:[%s5 + $0x18] sm:$0xff]
    %v4904 = vld [vmem:[%s5 + $0x20] sm:$0xff]
    %v4905 = vld [vmem:[%s5 + $0x28] sm:$0xff]
    %v4906 = vld [vmem:[%s5 + $0x30] sm:$0xff]
    %v4907 = vld [vmem:[%s5 + $0x38] sm:$0xff]
    %v4908 = vld [vmem:[%s5 + $0x40] sm:$0xff]
    %v4909 = vld [vmem:[%s5 + $0x48] sm:$0xff]
    %v4910 = vld [vmem:[%s5 + $0x50] sm:$0xff]
    %v4911 = vld [vmem:[%s5 + $0x58] sm:$0xff]
    %v4912 = vld [vmem:[%s5 + $0x60] sm:$0xff]
    %v4913 = vld [vmem:[%s5 + $0x68] sm:$0xff]
    %v4914 = vld [vmem:[%s5 + $0x70] sm:$0xff]
    %v4915 = vld [vmem:[%s5 + $0x78] sm:$0xff]
    %v4916 = vld [vmem:[%s6] sm:$0x1]
    %v4918 = vlaneseq
    %v4919 = vshrl.u32 %v4918, 7
    %v4920 = vsub.s32 0, %v4919
    %v4921 = vrot.slane %v4916, %v4920
    %v4925 = vsel %vm4369, %v4899, %v4898
    %4927 = vmatprep.subr.mxu0 0.0
    %4928 = vmatpush1.msra.mxu0 %v4915
    %4929 = vmatprep.subr.mxu0 0.0
    %4930 = vmatpush1.msra.mxu0 %v4914
    %4931 = vmatprep.subr.mxu0 0.0
    %4932 = vmatpush1.msra.mxu0 %v4913
    %4933 = vmatprep.subr.mxu0 0.0
    %4934 = vmatpush1.msra.mxu0 %v4912
    %4935 = vmatprep.subr.mxu0 0.0
    %4936 = vmatpush1.msra.mxu0 %v4911
    %4937 = vmatprep.subr.mxu0 0.0
    %4938 = vmatpush1.msra.mxu0 %v4910
    %4939 = vmatprep.subr.mxu0 0.0
    %4940 = vmatpush1.msra.mxu0 %v4909
    %4941 = vmatprep.subr.mxu0 0.0
    %4942 = vmatpush1.msra.mxu0 %v4908
    %4943 = vmatprep.subr.mxu0 0.0
    %4944 = vmatpush1.msra.mxu0 %v4907
    %4945 = vmatprep.subr.mxu0 0.0
    %4946 = vmatpush1.msra.mxu0 %v4906
    %4947 = vmatprep.subr.mxu0 0.0
    %4948 = vmatpush1.msra.mxu0 %v4905
    %4949 = vmatprep.subr.mxu0 0.0
    %4950 = vmatpush1.msra.mxu0 %v4904
    %4951 = vmatprep.subr.mxu0 0.0
    %4952 = vmatpush1.msra.mxu0 %v4903
    %4953 = vmatprep.subr.mxu0 0.0
    %4954 = vmatpush1.msra.mxu0 %v4902
    %4955 = vmatprep.subr.mxu0 0.0
    %4956 = vmatpush1.msra.mxu0 %v4901
    %4957 = vmatprep.subr.mxu0 0.0
    %4958 = vmatpush1.msra.mxu0 %v4900
    %4959 = vmatprep.subr.mxu0 0.0
    %4960 = vmatpush2.msra.mxu0 0.0
    %4961 = vmatprep.subr.mxu0 0.0
    %4962 = vmatpush2.msra.mxu0 0.0
    %4963 = vmatprep.subr.mxu0 0.0
    %4964 = vmatpush2.msra.mxu0 0.0
    %4965 = vmatprep.subr.mxu0 0.0
    %4966 = vmatpush2.msra.mxu0 0.0
    %4967 = vmatprep.subr.mxu0 0.0
    %4968 = vmatpush2.msra.mxu0 0.0
    %4969 = vmatprep.subr.mxu0 0.0
    %4970 = vmatpush2.msra.mxu0 0.0
    %4971 = vmatprep.subr.mxu0 0.0
    %4972 = vmatpush2.msra.mxu0 0.0
    %4973 = vmatprep.subr.mxu0 0.0
    %4974 = vmatpush2.msra.mxu0 0.0
    %4975 = vmatprep.subr.mxu0 0.0
    %4976 = vmatpush2.msra.mxu0 0.0
    %4977 = vmatprep.subr.mxu0 0.0
    %4978 = vmatpush2.msra.mxu0 0.0
    %4979 = vmatprep.subr.mxu0 0.0
    %4980 = vmatpush2.msra.mxu0 0.0
    %4981 = vmatprep.subr.mxu0 0.0
    %4982 = vmatpush2.msra.mxu0 0.0
    %4983 = vmatprep.subr.mxu0 0.0
    %4984 = vmatpush2.msra.mxu0 0.0
    %4985 = vmatprep.subr.mxu0 0.0
    %4986 = vmatpush2.msra.mxu0 0.0
    %4987 = vmatprep.subr.mxu0 0.0
    %4988 = vmatpush2.msra.mxu0 0.0
    %4989 = vmatprep.subr.mxu0 0.0
    %4990 = vmatpush2.msra.mxu0 0.0
    %4991 = vmatprep.mubr.f32.mxu0 0.0
    %4992 = vmatmul.mubr.f32.gmra.mxu0 %v4925
    %v4993 = vpop.f32.mrf.mxu0
    %v4994 = vadd.f32 %v4921, %v4993
    %v4995 = vpop.f32.mrf.mxu0
    %4996 = vdwg.mxu0
    %vm4997 = vcmask 25600
    %v4998 = vsel %vm4997, %v4994, -inf
    %4999 = vmax.xlane.f32.xlu0 %v4998
    %v5000 = vpop.xlane.xlu0 %4999
    %v5001 = vsub.f32 %v4994, %v5000
    %v5002 = vmul.f32 %v5001, 1.442695
    %v5003 = vpow.pop %v5002
    %v5004 = vsel %vm4997, %v5003, 0.0
    %5005 = vadd.xlane.f32.xlu0 %v5004
    %v5006 = vpop.xlane.xlu0 %5005
    %v5007 = vrcp.pop %v5006
    %v5008 = vmul.f32 %v5003, %v5007
    %v5011 = vunpack.c.l.s4 1966171168
    %v5012 = vunpack.c.0.s8 %v5011
    %v5013 = vlaneseq
    %v5014 = vshrl.u32 %v5013, 7
    %v5015 = vsub.s32 %v5012, %v5014
    %v5016 = vrot.slane %v5008, %v5015
    %v5017 = vcombine.high %v5016, %v5016
    %v5019 = vunpack.c.l.s4 1966171168
    %v5020 = vunpack.c.0.s8 %v5019
    %v5021 = vlaneseq
    %v5022 = vshrl.u32 %v5021, 7
    %v5023 = vsub.s32 %v5020, %v5022
    %v5024 = vrot.slane %v5016, %v5023
    %v5026 = vunpack.c.l.s4 1966171168
    %v5027 = vunpack.c.0.s8 %v5026
    %v5028 = vlaneseq
    %v5029 = vshrl.u32 %v5028, 7
    %v5030 = vsub.s32 %v5027, %v5029
    %v5031 = vrot.slane %v5017, %v5030
    %vm5034 = vcmask 24576
    %5035 = vst.msk [vmem:[#allocation2] sm:$0x1] %vm5034, %v5024
    %5036 = vst.msk [vmem:[#allocation2 + $0x1] sm:$0x1] %vm5034, %v5031
    // Predicated region
    $region30: #{model_conv_forward.1} parent=1 // pred_check
      _
    $region31: #{model_conv_forward.1} parent=1 // pred_check_branch
      %5038 = sbr.rel (0) target = $region33
    $region32: #{model_conv_forward.1} parent=1 // pred_region
      %s5040 = ssub.s32 32, 32
      %5041 = vsyncadd [#allocation3], %s5040
      %s5042 = sshll.u32 [#allocation2], 4
      %s5043 = int_to_ptr.vmem [resolvable:$true] %s5042
      %5048 = dma.vmem_to_hbm [thread:$0]  %s5043, 32, %s7, [#allocation3], 16, 16, 1
    $region33: #{model_conv_forward.1} parent=1 // pred_fallthru
      _
    // Predicated region
    $region34: #{model_conv_forward.1} parent=1 // pred_check
      _
    $region35: #{model_conv_forward.1} parent=1 // pred_check_branch
      %5050 = sbr.rel (0) target = $region37
    $region36: #{model_conv_forward.1} parent=1 // pred_region
      %5051 = dma.done [#allocation3], 32
    $region37: #{model_conv_forward.1} parent=1 // pred_fallthru
      _
    %5052 = vsyncpa [#allocation3], 1

</llo_original>
